<compile_context>
chip_gen: v6e
topology: v6e:2x2x1
jax: 0.10.0
libtpu: 0.0.40
codegen_flags: <defaults>
</compile_context>

<pallas_src>
import functools

import jax
import jax.numpy as jnp
from jax.experimental import pallas as pl
from jax.experimental.pallas import tpu as pltpu

IN_CHANNEL = 4      # module arg `in_channel`
NUM_CLASSES = 3     # module arg `num_classes`
NUM_SOURCE = 2      # module arg `num_source`
SHARED_DIM = 512    # sharedNet output channels
SON_DIM = 256       # ADDneck(512, 256) output channels
C_PAD = 128         # classifier classes padded to a lane-dense 128

_VMEM = pltpu.MemorySpace.VMEM
_SMEM = pltpu.MemorySpace.SMEM


# ------------------------------ kernel helpers -------------------------------

def _shared_proj(x, w_sh, b_sh, in_channel):
  """sharedNet stand-in: Cin -> 512 pointwise projection + ReLU.

  Cin is tiny (4): unrolled VPU broadcast-FMAs instead of a K=4 MXU pass.
  """
  h = x[:, 0:1] * w_sh[0:1, :]
  for c in range(1, in_channel):
    h = h + x[:, c:c + 1] * w_sh[c:c + 1, :]
  return jnp.maximum(h + b_sh, 0.0)


def _pool_rows(g, batch, length):
  """AdaptiveAvgPool1d(1) + Flatten.  Rows are (b, l)-major; the reshape keeps
  the lane dim intact and only regroups whole sublane tiles; mean(axis=1) is a
  cross-sublane reduce on the XLU slot (no MXU pass, no integer divide)."""
  return jnp.mean(g.reshape(batch, length, g.shape[-1]), axis=1)


def _softmax_rows(logits):
  m = jnp.max(logits, axis=1, keepdims=True)
  e = jnp.exp(logits - m)
  return e / jnp.sum(e, axis=1, keepdims=True)


def _select_list(items, s):
  """Pick items[s] with an arithmetic blend (pure VPU, no dynamic lane slice)."""
  out = items[0]
  for k in range(1, len(items)):
    m = (s == k).astype(out.dtype)
    out = out + m * (items[k] - out)
  return out


def _select_cols(x, s, num_source, width):
  """Select columns [s*width:(s+1)*width] out of an N-stacked array."""
  return _select_list([x[:, k * width:(k + 1) * width]
                       for k in range(num_source)], s)


# ------------------------------ kernels --------------------------------------

def _train_kernel(sidx_ref, label_ref, x_tgt_ref, x_src_ref, w_sh_ref, b_sh_ref,
                  w_son_ref, b_son_ref, w_cls_ref, b_cls_ref,
                  probs_ref, loss_ref, *, batch, length, in_channel,
                  num_source, kernel_mul, kernel_num):
  """Fused MFSAN.forward(training=True): both streams, all heads, all losses."""
  s = sidx_ref[0]

  # ---- sharedNet stand-in on both streams ----
  h_tgt = _shared_proj(x_tgt_ref[...], w_sh_ref[...], b_sh_ref[...], in_channel)
  h_src = _shared_proj(x_src_ref[...], w_sh_ref[...], b_sh_ref[...], in_channel)
  h_all = jnp.concatenate([h_tgt, h_src], axis=0)            # (2*B*L, 512) f32

  # ---- ADDneck stand-in: every source branch in ONE N-stacked matmul ----
  g_all = jnp.dot(h_all.astype(jnp.bfloat16), w_son_ref[...],
                  preferred_element_type=jnp.float32) + b_son_ref[...]
  g_all = jnp.maximum(g_all, 0.0)                            # (2*B*L, NS*256)

  # ---- avgpool + flatten ----
  feat_all = _pool_rows(g_all, 2 * batch, length)            # (2B, NS*256)
  feat_tgt_all = feat_all[:batch]
  feat_src_all = feat_all[batch:]

  # ---- classifiers: block-diagonal (branch k feat -> branch k logit lanes) ----
  logits_all = jnp.dot(feat_all.astype(jnp.bfloat16), w_cls_ref[...],
                       preferred_element_type=jnp.float32) + b_cls_ref[...]
  logits_tgt_all = logits_all[:batch]                        # (B, NS*128)
  logits_src_all = logits_all[batch:]

  # target softmax per branch (pad logits = -1e9 -> pad probs = 0)
  probs_tgt = [_softmax_rows(logits_tgt_all[:, k * C_PAD:(k + 1) * C_PAD])
               for k in range(num_source)]
  probs_ref[...] = _select_list(probs_tgt, s)

  # source-branch (source_idx) selections
  feat_src = _select_cols(feat_src_all, s, num_source, SON_DIM)
  feat_tgt_sel = _select_cols(feat_tgt_all, s, num_source, SON_DIM)
  logits_src = _select_cols(logits_src_all, s, num_source, C_PAD)

  # ---- MFSAN_mmd / mfsan_guassian_kernel, Gram-matrix form ----
  total = jnp.concatenate([feat_src, feat_tgt_sel], axis=0)  # (2B, 256)
  n = 2 * batch
  sq = jnp.sum(total * total, axis=1, keepdims=True)         # (n, 1)
  gram = jax.lax.dot_general(total, total, (((1,), (1,)), ((), ())),
                             preferred_element_type=jnp.float32)
  l2 = jnp.maximum(sq + sq.T - 2.0 * gram, 0.0)
  bandwidth = jnp.sum(l2) / float(n * n - n)
  bandwidth = jnp.maximum(bandwidth / (kernel_mul ** (kernel_num // 2)), 1e-12)
  kern = jnp.zeros_like(l2)
  for i in range(kernel_num):
    kern = kern + jnp.exp(-l2 / (bandwidth * (kernel_mul ** i)))
  b = batch
  loss_ref[0, 0] = jnp.mean(kern[:b, :b] + kern[b:, b:]
                            - kern[:b, b:] - kern[b:, :b])

  # ---- F.cross_entropy(logits_src, label_src), mean reduction ----
  lab = label_ref[...]                                        # (B, 1) int32
  cls_ids = jax.lax.broadcasted_iota(jnp.int32, (batch, C_PAD), 1)
  onehot = (cls_ids == lab).astype(jnp.float32)               # pads never hit
  m = jnp.max(logits_src, axis=1, keepdims=True)
  lse = jnp.log(jnp.sum(jnp.exp(logits_src - m), axis=1, keepdims=True)) + m
  nll = lse - jnp.sum(logits_src * onehot, axis=1, keepdims=True)
  loss_ref[0, 1] = jnp.mean(nll)

  # ---- pairwise L1 over target softmax outputs, divided by num_source ----
  l1 = jnp.float32(0.0)
  for i in range(num_source - 1):
    for j in range(i + 1, num_source):
      l1 = l1 + jnp.sum(jnp.abs(probs_tgt[i] - probs_tgt[j]))
  loss_ref[0, 2] = l1 / float(num_source)


def _eval_kernel(x_ref, w_sh_ref, b_sh_ref, w_son_ref, b_son_ref,
                 w_cls_ref, b_cls_ref, pred_ref, *, batch, length, in_channel,
                 num_source):
  """Fused MFSAN.forward(training=False): sum of per-source softmax outputs."""
  h = _shared_proj(x_ref[...], w_sh_ref[...], b_sh_ref[...], in_channel)
  g = jnp.dot(h.astype(jnp.bfloat16), w_son_ref[...],
              preferred_element_type=jnp.float32) + b_son_ref[...]
  g = jnp.maximum(g, 0.0)
  feat = _pool_rows(g, batch, length)
  logits = jnp.dot(feat.astype(jnp.bfloat16), w_cls_ref[...],
                   preferred_element_type=jnp.float32) + b_cls_ref[...]
  pred = jnp.zeros((batch, C_PAD), jnp.float32)
  for k in range(num_source):
    pred = pred + _softmax_rows(logits[:, k * C_PAD:(k + 1) * C_PAD])
  pred_ref[...] = pred


# ------------------------------ wrappers --------------------------------------

def _to_rows(x_ncl):
  """PyTorch NCL -> channels-last rows (B*L, C) so features map to lanes."""
  b, c, l = x_ncl.shape
  return jnp.transpose(x_ncl, (0, 2, 1)).reshape(b * l, c).astype(jnp.float32)


def mfsan_forward_train(params, data_tgt, data_src, label_src, source_idx):
  """MFSAN.forward with self.training == True.  ONE pallas_call total."""
  batch, in_channel, length = data_src.shape
  x_tgt = _to_rows(data_tgt)
  x_src = _to_rows(data_src)
  sidx = jnp.asarray([source_idx], jnp.int32)
  labels = jnp.asarray(label_src, jnp.int32).reshape(batch, 1)

  kern = functools.partial(_train_kernel, batch=batch, length=length,
                           in_channel=in_channel, num_source=NUM_SOURCE,
                           kernel_mul=2.0, kernel_num=5)
  probs_sel, losses = pl.pallas_call(
      kern,
      out_shape=(jax.ShapeDtypeStruct((batch, C_PAD), jnp.float32),
                 jax.ShapeDtypeStruct((1, 3), jnp.float32)),
      in_specs=[
          pl.BlockSpec(memory_space=_SMEM),   # source_idx (1,) int32
          pl.BlockSpec(memory_space=_VMEM),   # labels (B,1) int32
          pl.BlockSpec(memory_space=_VMEM),   # x_tgt rows
          pl.BlockSpec(memory_space=_VMEM),   # x_src rows
          pl.BlockSpec(memory_space=_VMEM),   # w_shared
          pl.BlockSpec(memory_space=_VMEM),   # b_shared
          pl.BlockSpec(memory_space=_VMEM),   # w_son (N-stacked, bf16)
          pl.BlockSpec(memory_space=_VMEM),   # b_son
          pl.BlockSpec(memory_space=_VMEM),   # w_cls (block-diagonal, bf16)
          pl.BlockSpec(memory_space=_VMEM),   # b_cls (-1e9 pads)
      ],
      out_specs=(pl.BlockSpec(memory_space=_VMEM),
                 pl.BlockSpec(memory_space=_SMEM)),
  )(sidx, labels, x_tgt, x_src,
    params["w_shared"], params["b_shared"],
    params["w_son"], params["b_son"], params["w_cls"], params["b_cls"])

  loss_mmd = losses[0, 0]
  loss_cls = losses[0, 1]
  loss_l1 = losses[0, 2]
  return (probs_sel[:, :NUM_CLASSES], loss_cls, loss_mmd, loss_l1)


def mfsan_forward_eval(params, data_tgt):
  """MFSAN.forward with self.training == False.  ONE pallas_call."""
  batch, in_channel, length = data_tgt.shape
  x_tgt = _to_rows(data_tgt)
  kern = functools.partial(_eval_kernel, batch=batch, length=length,
                           in_channel=in_channel, num_source=NUM_SOURCE)
  pred = pl.pallas_call(
      kern,
      out_shape=jax.ShapeDtypeStruct((batch, C_PAD), jnp.float32),
      in_specs=[pl.BlockSpec(memory_space=_VMEM)] * 7,
      out_specs=pl.BlockSpec(memory_space=_VMEM),
  )(x_tgt, params["w_shared"], params["b_shared"],
    params["w_son"], params["b_son"], params["w_cls"], params["b_cls"])
  return pred[:, :NUM_CLASSES]


# ----------------------------- parameters -------------------------------------

def init_params(key):
  """Parameter layout is precomputed ONCE: N-stacked ADDneck weights and a
  block-diagonal, lane-padded classifier (this replaces per-step host slicing
  and the per-source grid axis)."""
  ks = jax.random.split(key, 6)
  w_shared = jax.random.normal(ks[0], (IN_CHANNEL, SHARED_DIM),
                               jnp.float32) * 0.1
  b_shared = jax.random.normal(ks[1], (1, SHARED_DIM), jnp.float32) * 0.01

  # ADDneck weights, N-stacked across sources; bf16 on the MXU (f32 accumulate).
  w_son = (jax.random.normal(ks[2], (SHARED_DIM, NUM_SOURCE * SON_DIM),
                             jnp.float32) * 0.05).astype(jnp.bfloat16)
  b_son = jax.random.normal(ks[3], (1, NUM_SOURCE * SON_DIM),
                            jnp.float32) * 0.01

  # nn.Linear(256, num_classes) per source, block-diagonal & padded to 128 lanes.
  w_cls_valid = jax.random.normal(ks[4], (NUM_SOURCE, SON_DIM, NUM_CLASSES),
                                  jnp.float32) * 0.05
  w_cls = jnp.zeros((NUM_SOURCE * SON_DIM, NUM_SOURCE * C_PAD), jnp.float32)
  b_cls_valid = jax.random.normal(ks[5], (NUM_SOURCE, 1, NUM_CLASSES),
                                  jnp.float32) * 0.01
  b_cls = jnp.full((1, NUM_SOURCE * C_PAD), -1e9, jnp.float32)
  for k in range(NUM_SOURCE):
    w_cls = w_cls.at[k * SON_DIM:(k + 1) * SON_DIM,
                     k * C_PAD:k * C_PAD + NUM_CLASSES].set(w_cls_valid[k])
    b_cls = b_cls.at[0, k * C_PAD:k * C_PAD + NUM_CLASSES].set(b_cls_valid[k, 0])
  w_cls = w_cls.astype(jnp.bfloat16)

  return {"w_shared": w_shared, "b_shared": b_shared,
          "w_son": w_son, "b_son": b_son, "w_cls": w_cls, "b_cls": b_cls}


# -------------------------------- main ----------------------------------------

if __name__ == "__main__":
  B, L = 4, 32
  key = jax.random.PRNGKey(0)
  k_p, k_tgt, k_src, k_lab = jax.random.split(key, 4)
  params = init_params(k_p)

  data_tgt = jax.random.normal(k_tgt, (B, IN_CHANNEL, L), jnp.float32)
  data_src = jax.random.normal(k_src, (B, IN_CHANNEL, L), jnp.float32)
  label_src = jax.random.randint(k_lab, (B,), 0, NUM_CLASSES)

  probs, loss_cls, loss_mmd, loss_l1 = mfsan_forward_train(
      params, data_tgt, data_src, label_src, source_idx=0)
  pred = mfsan_forward_eval(params, data_tgt)

  jax.block_until_ready((probs, loss_cls, loss_mmd, loss_l1, pred))
  print("KERNEL_OK")
</pallas_src>

<mosaic_0001>
module attributes {stable_mosaic.version = 11 : i64} {
  func.func @_train_kernel(%arg0: memref<1xi32, #tpu.memory_space<smem>>, %arg1: memref<4x1xi32, #tpu.memory_space<vmem>>, %arg2: memref<128x4xf32, #tpu.memory_space<vmem>>, %arg3: memref<128x4xf32, #tpu.memory_space<vmem>>, %arg4: memref<4x512xf32, #tpu.memory_space<vmem>>, %arg5: memref<1x512xf32, #tpu.memory_space<vmem>>, %arg6: memref<512x512xbf16, #tpu.memory_space<vmem>>, %arg7: memref<1x512xf32, #tpu.memory_space<vmem>>, %arg8: memref<512x256xbf16, #tpu.memory_space<vmem>>, %arg9: memref<1x256xf32, #tpu.memory_space<vmem>>, %arg10: memref<4x128xf32, #tpu.memory_space<vmem>>, %arg11: memref<1x3xf32, #tpu.memory_space<smem>>) attributes {dimension_semantics = [], scalar_prefetch = 0 : i64, scratch_operands = 0 : i64, tpu.core_type = #tpu.core_type<tc>} {
    %c0 = arith.constant 0 : index
    %0 = memref.load %arg0[%c0] : memref<1xi32, #tpu.memory_space<smem>>
    %c0_0 = arith.constant 0 : index
    %c0_1 = arith.constant 0 : index
    %1 = vector.load %arg2[%c0_0, %c0_1] : memref<128x4xf32, #tpu.memory_space<vmem>>, vector<128x4xf32>
    %c0_2 = arith.constant 0 : index
    %c0_3 = arith.constant 0 : index
    %2 = vector.load %arg4[%c0_2, %c0_3] : memref<4x512xf32, #tpu.memory_space<vmem>>, vector<4x512xf32>
    %c0_4 = arith.constant 0 : index
    %c0_5 = arith.constant 0 : index
    %3 = vector.load %arg5[%c0_4, %c0_5] : memref<1x512xf32, #tpu.memory_space<vmem>>, vector<1x512xf32>
    %4 = vector.extract_strided_slice %1 {offsets = [0, 0], sizes = [128, 1], strides = [1, 1]} : vector<128x4xf32> to vector<128x1xf32>
    %5 = vector.extract_strided_slice %2 {offsets = [0, 0], sizes = [1, 512], strides = [1, 1]} : vector<4x512xf32> to vector<1x512xf32>
    %6 = vector.broadcast %4 : vector<128x1xf32> to vector<128x512xf32>
    %7 = vector.broadcast %5 : vector<1x512xf32> to vector<128x512xf32>
    %8 = arith.mulf %6, %7 : vector<128x512xf32>
    %9 = vector.extract_strided_slice %1 {offsets = [0, 1], sizes = [128, 1], strides = [1, 1]} : vector<128x4xf32> to vector<128x1xf32>
    %10 = vector.extract_strided_slice %2 {offsets = [1, 0], sizes = [1, 512], strides = [1, 1]} : vector<4x512xf32> to vector<1x512xf32>
    %11 = vector.broadcast %9 : vector<128x1xf32> to vector<128x512xf32>
    %12 = vector.broadcast %10 : vector<1x512xf32> to vector<128x512xf32>
    %13 = arith.mulf %11, %12 : vector<128x512xf32>
    %14 = arith.addf %8, %13 : vector<128x512xf32>
    %15 = vector.extract_strided_slice %1 {offsets = [0, 2], sizes = [128, 1], strides = [1, 1]} : vector<128x4xf32> to vector<128x1xf32>
    %16 = vector.extract_strided_slice %2 {offsets = [2, 0], sizes = [1, 512], strides = [1, 1]} : vector<4x512xf32> to vector<1x512xf32>
    %17 = vector.broadcast %15 : vector<128x1xf32> to vector<128x512xf32>
    %18 = vector.broadcast %16 : vector<1x512xf32> to vector<128x512xf32>
    %19 = arith.mulf %17, %18 : vector<128x512xf32>
    %20 = arith.addf %14, %19 : vector<128x512xf32>
    %21 = vector.extract_strided_slice %1 {offsets = [0, 3], sizes = [128, 1], strides = [1, 1]} : vector<128x4xf32> to vector<128x1xf32>
    %22 = vector.extract_strided_slice %2 {offsets = [3, 0], sizes = [1, 512], strides = [1, 1]} : vector<4x512xf32> to vector<1x512xf32>
    %23 = vector.broadcast %21 : vector<128x1xf32> to vector<128x512xf32>
    %24 = vector.broadcast %22 : vector<1x512xf32> to vector<128x512xf32>
    %25 = arith.mulf %23, %24 : vector<128x512xf32>
    %26 = arith.addf %20, %25 : vector<128x512xf32>
    %27 = vector.broadcast %3 : vector<1x512xf32> to vector<128x512xf32>
    %28 = arith.addf %26, %27 : vector<128x512xf32>
    %cst = arith.constant 0.000000e+00 : f32
    %29 = vector.broadcast %cst : f32 to vector<128x512xf32>
    %30 = arith.maximumf %28, %29 : vector<128x512xf32>
    %c0_6 = arith.constant 0 : index
    %c0_7 = arith.constant 0 : index
    %31 = vector.load %arg3[%c0_6, %c0_7] : memref<128x4xf32, #tpu.memory_space<vmem>>, vector<128x4xf32>
    %c0_8 = arith.constant 0 : index
    %c0_9 = arith.constant 0 : index
    %32 = vector.load %arg4[%c0_8, %c0_9] : memref<4x512xf32, #tpu.memory_space<vmem>>, vector<4x512xf32>
    %c0_10 = arith.constant 0 : index
    %c0_11 = arith.constant 0 : index
    %33 = vector.load %arg5[%c0_10, %c0_11] : memref<1x512xf32, #tpu.memory_space<vmem>>, vector<1x512xf32>
    %34 = vector.extract_strided_slice %31 {offsets = [0, 0], sizes = [128, 1], strides = [1, 1]} : vector<128x4xf32> to vector<128x1xf32>
    %35 = vector.extract_strided_slice %32 {offsets = [0, 0], sizes = [1, 512], strides = [1, 1]} : vector<4x512xf32> to vector<1x512xf32>
    %36 = vector.broadcast %34 : vector<128x1xf32> to vector<128x512xf32>
    %37 = vector.broadcast %35 : vector<1x512xf32> to vector<128x512xf32>
    %38 = arith.mulf %36, %37 : vector<128x512xf32>
    %39 = vector.extract_strided_slice %31 {offsets = [0, 1], sizes = [128, 1], strides = [1, 1]} : vector<128x4xf32> to vector<128x1xf32>
    %40 = vector.extract_strided_slice %32 {offsets = [1, 0], sizes = [1, 512], strides = [1, 1]} : vector<4x512xf32> to vector<1x512xf32>
    %41 = vector.broadcast %39 : vector<128x1xf32> to vector<128x512xf32>
    %42 = vector.broadcast %40 : vector<1x512xf32> to vector<128x512xf32>
    %43 = arith.mulf %41, %42 : vector<128x512xf32>
    %44 = arith.addf %38, %43 : vector<128x512xf32>
    %45 = vector.extract_strided_slice %31 {offsets = [0, 2], sizes = [128, 1], strides = [1, 1]} : vector<128x4xf32> to vector<128x1xf32>
    %46 = vector.extract_strided_slice %32 {offsets = [2, 0], sizes = [1, 512], strides = [1, 1]} : vector<4x512xf32> to vector<1x512xf32>
    %47 = vector.broadcast %45 : vector<128x1xf32> to vector<128x512xf32>
    %48 = vector.broadcast %46 : vector<1x512xf32> to vector<128x512xf32>
    %49 = arith.mulf %47, %48 : vector<128x512xf32>
    %50 = arith.addf %44, %49 : vector<128x512xf32>
    %51 = vector.extract_strided_slice %31 {offsets = [0, 3], sizes = [128, 1], strides = [1, 1]} : vector<128x4xf32> to vector<128x1xf32>
    %52 = vector.extract_strided_slice %32 {offsets = [3, 0], sizes = [1, 512], strides = [1, 1]} : vector<4x512xf32> to vector<1x512xf32>
    %53 = vector.broadcast %51 : vector<128x1xf32> to vector<128x512xf32>
    %54 = vector.broadcast %52 : vector<1x512xf32> to vector<128x512xf32>
    %55 = arith.mulf %53, %54 : vector<128x512xf32>
    %56 = arith.addf %50, %55 : vector<128x512xf32>
    %57 = vector.broadcast %33 : vector<1x512xf32> to vector<128x512xf32>
    %58 = arith.addf %56, %57 : vector<128x512xf32>
    %cst_12 = arith.constant 0.000000e+00 : f32
    %59 = vector.broadcast %cst_12 : f32 to vector<128x512xf32>
    %60 = arith.maximumf %58, %59 : vector<128x512xf32>
    %61 = tpu.concatenate %30, %60 in 0 : vector<128x512xf32>, vector<128x512xf32> -> vector<256x512xf32>
    %62 = arith.truncf %61 : vector<256x512xf32> to vector<256x512xbf16>
    %c0_13 = arith.constant 0 : index
    %c0_14 = arith.constant 0 : index
    %63 = vector.load %arg6[%c0_13, %c0_14] : memref<512x512xbf16, #tpu.memory_space<vmem>>, vector<512x512xbf16>
    %cst_15 = arith.constant dense<0.000000e+00> : vector<256x512xf32>
    %64 = tpu.matmul %62, %63, %cst_15 {dimension_numbers = #tpu.dot_dimension_numbers<[1], [0], [0], [1], [0, 0, 1, 1], [], []>} : vector<256x512xbf16>, vector<512x512xbf16>, vector<256x512xf32> -> vector<256x512xf32>
    %c0_16 = arith.constant 0 : index
    %c0_17 = arith.constant 0 : index
    %65 = vector.load %arg7[%c0_16, %c0_17] : memref<1x512xf32, #tpu.memory_space<vmem>>, vector<1x512xf32>
    %66 = vector.broadcast %65 : vector<1x512xf32> to vector<256x512xf32>
    %67 = arith.addf %64, %66 : vector<256x512xf32>
    %cst_18 = arith.constant 0.000000e+00 : f32
    %68 = vector.broadcast %cst_18 : f32 to vector<256x512xf32>
    %69 = arith.maximumf %67, %68 : vector<256x512xf32>
    %70 = vector.shape_cast %69 : vector<256x512xf32> to vector<8x32x512xf32>
    %cst_19 = arith.constant dense<0.000000e+00> : vector<8x512xf32>
    %71 = vector.multi_reduction <add>, %70, %cst_19 [1] : vector<8x32x512xf32> to vector<8x512xf32>
    %cst_20 = arith.constant 3.200000e+01 : f32
    %72 = vector.broadcast %cst_20 : f32 to vector<8x512xf32>
    %73 = arith.divf %71, %72 : vector<8x512xf32>
    %74 = vector.extract_strided_slice %73 {offsets = [0, 0], sizes = [4, 512], strides = [1, 1]} : vector<8x512xf32> to vector<4x512xf32>
    %75 = vector.extract_strided_slice %73 {offsets = [4, 0], sizes = [4, 512], strides = [1, 1]} : vector<8x512xf32> to vector<4x512xf32>
    %76 = arith.truncf %73 : vector<8x512xf32> to vector<8x512xbf16>
    %c0_21 = arith.constant 0 : index
    %c0_22 = arith.constant 0 : index
    %77 = vector.load %arg8[%c0_21, %c0_22] : memref<512x256xbf16, #tpu.memory_space<vmem>>, vector<512x256xbf16>
    %cst_23 = arith.constant dense<0.000000e+00> : vector<8x256xf32>
    %78 = tpu.matmul %76, %77, %cst_23 {dimension_numbers = #tpu.dot_dimension_numbers<[1], [0], [0], [1], [0, 0, 1, 1], [], []>} : vector<8x512xbf16>, vector<512x256xbf16>, vector<8x256xf32> -> vector<8x256xf32>
    %c0_24 = arith.constant 0 : index
    %c0_25 = arith.constant 0 : index
    %79 = vector.load %arg9[%c0_24, %c0_25] : memref<1x256xf32, #tpu.memory_space<vmem>>, vector<1x256xf32>
    %80 = vector.broadcast %79 : vector<1x256xf32> to vector<8x256xf32>
    %81 = arith.addf %78, %80 : vector<8x256xf32>
    %82 = vector.extract_strided_slice %81 {offsets = [0, 0], sizes = [4, 256], strides = [1, 1]} : vector<8x256xf32> to vector<4x256xf32>
    %83 = vector.extract_strided_slice %81 {offsets = [4, 0], sizes = [4, 256], strides = [1, 1]} : vector<8x256xf32> to vector<4x256xf32>
    %84 = vector.extract_strided_slice %82 {offsets = [0, 0], sizes = [4, 128], strides = [1, 1]} : vector<4x256xf32> to vector<4x128xf32>
    %cst_26 = arith.constant dense<0xFF800000> : vector<4xf32>
    %85 = vector.multi_reduction <maximumf>, %84, %cst_26 [1] : vector<4x128xf32> to vector<4xf32>
    %86 = vector.shape_cast %85 : vector<4xf32> to vector<4x1xf32>
    %87 = vector.broadcast %86 : vector<4x1xf32> to vector<4x128xf32>
    %88 = arith.subf %84, %87 : vector<4x128xf32>
    %89 = math.exp %88 : vector<4x128xf32>
    %cst_27 = arith.constant dense<0.000000e+00> : vector<4xf32>
    %90 = vector.multi_reduction <add>, %89, %cst_27 [1] : vector<4x128xf32> to vector<4xf32>
    %91 = vector.shape_cast %90 : vector<4xf32> to vector<4x1xf32>
    %92 = vector.broadcast %91 : vector<4x1xf32> to vector<4x128xf32>
    %93 = arith.divf %89, %92 : vector<4x128xf32>
    %94 = vector.extract_strided_slice %82 {offsets = [0, 128], sizes = [4, 128], strides = [1, 1]} : vector<4x256xf32> to vector<4x128xf32>
    %cst_28 = arith.constant dense<0xFF800000> : vector<4xf32>
    %95 = vector.multi_reduction <maximumf>, %94, %cst_28 [1] : vector<4x128xf32> to vector<4xf32>
    %96 = vector.shape_cast %95 : vector<4xf32> to vector<4x1xf32>
    %97 = vector.broadcast %96 : vector<4x1xf32> to vector<4x128xf32>
    %98 = arith.subf %94, %97 : vector<4x128xf32>
    %99 = math.exp %98 : vector<4x128xf32>
    %cst_29 = arith.constant dense<0.000000e+00> : vector<4xf32>
    %100 = vector.multi_reduction <add>, %99, %cst_29 [1] : vector<4x128xf32> to vector<4xf32>
    %101 = vector.shape_cast %100 : vector<4xf32> to vector<4x1xf32>
    %102 = vector.broadcast %101 : vector<4x1xf32> to vector<4x128xf32>
    %103 = arith.divf %99, %102 : vector<4x128xf32>
    %c1_i32 = arith.constant 1 : i32
    %104 = arith.cmpi eq, %0, %c1_i32 : i32
    %105 = arith.extui %104 : i1 to i32
    %106 = arith.sitofp %105 : i32 to f32
    %107 = arith.subf %103, %93 : vector<4x128xf32>
    %108 = vector.broadcast %106 : f32 to vector<4x128xf32>
    %109 = arith.mulf %108, %107 : vector<4x128xf32>
    %110 = arith.addf %93, %109 : vector<4x128xf32>
    %c0_30 = arith.constant 0 : index
    %c0_31 = arith.constant 0 : index
    %111 = vector.load %arg10[%c0_30, %c0_31] : memref<4x128xf32, #tpu.memory_space<vmem>>, vector<4x128xf32>
    tpu.vector_store %arg10[%c0_30, %c0_31], %110 {strides = array<i32>} : memref<4x128xf32, #tpu.memory_space<vmem>>, vector<4x128xf32>,
    %112 = vector.extract_strided_slice %75 {offsets = [0, 0], sizes = [4, 256], strides = [1, 1]} : vector<4x512xf32> to vector<4x256xf32>
    %113 = vector.extract_strided_slice %75 {offsets = [0, 256], sizes = [4, 256], strides = [1, 1]} : vector<4x512xf32> to vector<4x256xf32>
    %c1_i32_32 = arith.constant 1 : i32
    %114 = arith.cmpi eq, %0, %c1_i32_32 : i32
    %115 = arith.extui %114 : i1 to i32
    %116 = arith.sitofp %115 : i32 to f32
    %117 = arith.subf %113, %112 : vector<4x256xf32>
    %118 = vector.broadcast %116 : f32 to vector<4x256xf32>
    %119 = arith.mulf %118, %117 : vector<4x256xf32>
    %120 = arith.addf %112, %119 : vector<4x256xf32>
    %121 = vector.extract_strided_slice %74 {offsets = [0, 0], sizes = [4, 256], strides = [1, 1]} : vector<4x512xf32> to vector<4x256xf32>
    %122 = vector.extract_strided_slice %74 {offsets = [0, 256], sizes = [4, 256], strides = [1, 1]} : vector<4x512xf32> to vector<4x256xf32>
    %c1_i32_33 = arith.constant 1 : i32
    %123 = arith.cmpi eq, %0, %c1_i32_33 : i32
    %124 = arith.extui %123 : i1 to i32
    %125 = arith.sitofp %124 : i32 to f32
    %126 = arith.subf %122, %121 : vector<4x256xf32>
    %127 = vector.broadcast %125 : f32 to vector<4x256xf32>
    %128 = arith.mulf %127, %126 : vector<4x256xf32>
    %129 = arith.addf %121, %128 : vector<4x256xf32>
    %130 = vector.extract_strided_slice %83 {offsets = [0, 0], sizes = [4, 128], strides = [1, 1]} : vector<4x256xf32> to vector<4x128xf32>
    %131 = vector.extract_strided_slice %83 {offsets = [0, 128], sizes = [4, 128], strides = [1, 1]} : vector<4x256xf32> to vector<4x128xf32>
    %c1_i32_34 = arith.constant 1 : i32
    %132 = arith.cmpi eq, %0, %c1_i32_34 : i32
    %133 = arith.extui %132 : i1 to i32
    %134 = arith.sitofp %133 : i32 to f32
    %135 = arith.subf %131, %130 : vector<4x128xf32>
    %136 = vector.broadcast %134 : f32 to vector<4x128xf32>
    %137 = arith.mulf %136, %135 : vector<4x128xf32>
    %138 = arith.addf %130, %137 : vector<4x128xf32>
    %139 = tpu.concatenate %120, %129 in 0 : vector<4x256xf32>, vector<4x256xf32> -> vector<8x256xf32>
    %140 = arith.mulf %139, %139 : vector<8x256xf32>
    %cst_35 = arith.constant dense<0.000000e+00> : vector<8xf32>
    %141 = vector.multi_reduction <add>, %140, %cst_35 [1] : vector<8x256xf32> to vector<8xf32>
    %142 = vector.shape_cast %141 : vector<8xf32> to vector<8x1xf32>
    %cst_36 = arith.constant dense<0.000000e+00> : vector<8x8xf32>
    %143 = tpu.matmul %139, %139, %cst_36 {dimension_numbers = #tpu.dot_dimension_numbers<[1], [1], [0], [0], [0, 0, 1, 0], [], []>} : vector<8x256xf32>, vector<8x256xf32>, vector<8x8xf32> -> vector<8x8xf32>
    %144 = tpu.transpose %142, [1, 0] : vector<8x1xf32> -> vector<1x8xf32>
    %145 = vector.broadcast %142 : vector<8x1xf32> to vector<8x8xf32>
    %146 = vector.broadcast %144 : vector<1x8xf32> to vector<8x8xf32>
    %147 = arith.addf %145, %146 : vector<8x8xf32>
    %cst_37 = arith.constant 2.000000e+00 : f32
    %148 = vector.broadcast %cst_37 : f32 to vector<8x8xf32>
    %149 = arith.mulf %148, %143 : vector<8x8xf32>
    %150 = arith.subf %147, %149 : vector<8x8xf32>
    %cst_38 = arith.constant 0.000000e+00 : f32
    %151 = vector.broadcast %cst_38 : f32 to vector<8x8xf32>
    %152 = arith.maximumf %150, %151 : vector<8x8xf32>
    %153 = vector.shape_cast %152 : vector<8x8xf32> to vector<1x8x8xf32>
    %cst_39 = arith.constant dense<0.000000e+00> : vector<1xf32>
    %154 = vector.multi_reduction <add>, %153, %cst_39 [1, 2] : vector<1x8x8xf32> to vector<1xf32>
    %155 = vector.shape_cast %154 : vector<1xf32> to vector<1x1x1xf32>
    %156 = vector.extract %155[0, 0, 0] : f32 from vector<1x1x1xf32>
    %cst_40 = arith.constant 5.600000e+01 : f32
    %157 = arith.divf %156, %cst_40 : f32
    %cst_41 = arith.constant 4.000000e+00 : f32
    %158 = arith.divf %157, %cst_41 : f32
    %cst_42 = arith.constant 9.99999996E-13 : f32
    %159 = arith.maximumf %158, %cst_42 : f32
    %cst_43 = arith.constant 0.000000e+00 : f32
    %160 = vector.broadcast %cst_43 : f32 to vector<8x8xf32>
    %cst_44 = arith.constant 0.000000e+00 : f32
    %161 = vector.broadcast %cst_44 : f32 to vector<8x8xf32>
    %162 = arith.subf %161, %152 : vector<8x8xf32>
    %cst_45 = arith.constant 1.000000e+00 : f32
    %163 = arith.mulf %159, %cst_45 : f32
    %164 = vector.broadcast %163 : f32 to vector<8x8xf32>
    %165 = arith.divf %162, %164 : vector<8x8xf32>
    %166 = math.exp %165 : vector<8x8xf32>
    %167 = arith.addf %160, %166 : vector<8x8xf32>
    %cst_46 = arith.constant 0.000000e+00 : f32
    %168 = vector.broadcast %cst_46 : f32 to vector<8x8xf32>
    %169 = arith.subf %168, %152 : vector<8x8xf32>
    %cst_47 = arith.constant 2.000000e+00 : f32
    %170 = arith.mulf %159, %cst_47 : f32
    %171 = vector.broadcast %170 : f32 to vector<8x8xf32>
    %172 = arith.divf %169, %171 : vector<8x8xf32>
    %173 = math.exp %172 : vector<8x8xf32>
    %174 = arith.addf %167, %173 : vector<8x8xf32>
    %cst_48 = arith.constant 0.000000e+00 : f32
    %175 = vector.broadcast %cst_48 : f32 to vector<8x8xf32>
    %176 = arith.subf %175, %152 : vector<8x8xf32>
    %cst_49 = arith.constant 4.000000e+00 : f32
    %177 = arith.mulf %159, %cst_49 : f32
    %178 = vector.broadcast %177 : f32 to vector<8x8xf32>
    %179 = arith.divf %176, %178 : vector<8x8xf32>
    %180 = math.exp %179 : vector<8x8xf32>
    %181 = arith.addf %174, %180 : vector<8x8xf32>
    %cst_50 = arith.constant 0.000000e+00 : f32
    %182 = vector.broadcast %cst_50 : f32 to vector<8x8xf32>
    %183 = arith.subf %182, %152 : vector<8x8xf32>
    %cst_51 = arith.constant 8.000000e+00 : f32
    %184 = arith.mulf %159, %cst_51 : f32
    %185 = vector.broadcast %184 : f32 to vector<8x8xf32>
    %186 = arith.divf %183, %185 : vector<8x8xf32>
    %187 = math.exp %186 : vector<8x8xf32>
    %188 = arith.addf %181, %187 : vector<8x8xf32>
    %cst_52 = arith.constant 0.000000e+00 : f32
    %189 = vector.broadcast %cst_52 : f32 to vector<8x8xf32>
    %190 = arith.subf %189, %152 : vector<8x8xf32>
    %cst_53 = arith.constant 1.600000e+01 : f32
    %191 = arith.mulf %159, %cst_53 : f32
    %192 = vector.broadcast %191 : f32 to vector<8x8xf32>
    %193 = arith.divf %190, %192 : vector<8x8xf32>
    %194 = math.exp %193 : vector<8x8xf32>
    %195 = arith.addf %188, %194 : vector<8x8xf32>
    %196 = vector.extract_strided_slice %195 {offsets = [0, 0], sizes = [4, 4], strides = [1, 1]} : vector<8x8xf32> to vector<4x4xf32>
    %197 = vector.extract_strided_slice %195 {offsets = [4, 4], sizes = [4, 4], strides = [1, 1]} : vector<8x8xf32> to vector<4x4xf32>
    %198 = arith.addf %196, %197 : vector<4x4xf32>
    %199 = vector.extract_strided_slice %195 {offsets = [0, 4], sizes = [4, 4], strides = [1, 1]} : vector<8x8xf32> to vector<4x4xf32>
    %200 = arith.subf %198, %199 : vector<4x4xf32>
    %201 = vector.extract_strided_slice %195 {offsets = [4, 0], sizes = [4, 4], strides = [1, 1]} : vector<8x8xf32> to vector<4x4xf32>
    %202 = arith.subf %200, %201 : vector<4x4xf32>
    %203 = vector.shape_cast %202 : vector<4x4xf32> to vector<1x4x4xf32>
    %cst_54 = arith.constant dense<0.000000e+00> : vector<1xf32>
    %204 = vector.multi_reduction <add>, %203, %cst_54 [1, 2] : vector<1x4x4xf32> to vector<1xf32>
    %205 = vector.shape_cast %204 : vector<1xf32> to vector<1x1x1xf32>
    %206 = vector.extract %205[0, 0, 0] : f32 from vector<1x1x1xf32>
    %cst_55 = arith.constant 1.600000e+01 : f32
    %207 = arith.divf %206, %cst_55 : f32
    %c0_56 = arith.constant 0 : index
    %c0_57 = arith.constant 0 : index
    %208 = memref.load %arg11[%c0_56, %c0_57] : memref<1x3xf32, #tpu.memory_space<smem>>
    memref.store %207, %arg11[%c0_56, %c0_57] : memref<1x3xf32, #tpu.memory_space<smem>>
    %c0_58 = arith.constant 0 : index
    %c0_59 = arith.constant 0 : index
    %209 = vector.load %arg1[%c0_58, %c0_59] : memref<4x1xi32, #tpu.memory_space<vmem>>, vector<4x1xi32>
    %210 = tpu.iota {dimensions = array<i32: 1>} : vector<4x128xi32>
    %211 = vector.broadcast %209 : vector<4x1xi32> to vector<4x128xi32>
    %212 = arith.cmpi eq, %210, %211 : vector<4x128xi32>
    %213 = arith.extui %212 : vector<4x128xi1> to vector<4x128xi32>
    %214 = arith.sitofp %213 : vector<4x128xi32> to vector<4x128xf32>
    %cst_60 = arith.constant dense<0xFF800000> : vector<4xf32>
    %215 = vector.multi_reduction <maximumf>, %138, %cst_60 [1] : vector<4x128xf32> to vector<4xf32>
    %216 = vector.shape_cast %215 : vector<4xf32> to vector<4x1xf32>
    %217 = vector.broadcast %216 : vector<4x1xf32> to vector<4x128xf32>
    %218 = arith.subf %138, %217 : vector<4x128xf32>
    %219 = math.exp %218 : vector<4x128xf32>
    %cst_61 = arith.constant dense<0.000000e+00> : vector<4xf32>
    %220 = vector.multi_reduction <add>, %219, %cst_61 [1] : vector<4x128xf32> to vector<4xf32>
    %221 = vector.shape_cast %220 : vector<4xf32> to vector<4x1xf32>
    %222 = math.log %221 : vector<4x1xf32>
    %223 = arith.addf %222, %216 : vector<4x1xf32>
    %224 = arith.mulf %138, %214 : vector<4x128xf32>
    %cst_62 = arith.constant dense<0.000000e+00> : vector<4xf32>
    %225 = vector.multi_reduction <add>, %224, %cst_62 [1] : vector<4x128xf32> to vector<4xf32>
    %226 = vector.shape_cast %225 : vector<4xf32> to vector<4x1xf32>
    %227 = arith.subf %223, %226 : vector<4x1xf32>
    %228 = vector.shape_cast %227 : vector<4x1xf32> to vector<1x4x1xf32>
    %cst_63 = arith.constant dense<0.000000e+00> : vector<1xf32>
    %229 = vector.multi_reduction <add>, %228, %cst_63 [1, 2] : vector<1x4x1xf32> to vector<1xf32>
    %230 = vector.shape_cast %229 : vector<1xf32> to vector<1x1x1xf32>
    %231 = vector.extract %230[0, 0, 0] : f32 from vector<1x1x1xf32>
    %cst_64 = arith.constant 4.000000e+00 : f32
    %232 = arith.divf %231, %cst_64 : f32
    %c0_65 = arith.constant 0 : index
    %c1 = arith.constant 1 : index
    %233 = memref.load %arg11[%c0_65, %c1] : memref<1x3xf32, #tpu.memory_space<smem>>
    memref.store %232, %arg11[%c0_65, %c1] : memref<1x3xf32, #tpu.memory_space<smem>>
    %234 = arith.subf %93, %103 : vector<4x128xf32>
    %235 = math.absf %234 : vector<4x128xf32>
    %236 = vector.shape_cast %235 : vector<4x128xf32> to vector<1x4x128xf32>
    %cst_66 = arith.constant dense<0.000000e+00> : vector<1xf32>
    %237 = vector.multi_reduction <add>, %236, %cst_66 [1, 2] : vector<1x4x128xf32> to vector<1xf32>
    %238 = vector.shape_cast %237 : vector<1xf32> to vector<1x1x1xf32>
    %239 = vector.extract %238[0, 0, 0] : f32 from vector<1x1x1xf32>
    %cst_67 = arith.constant 0.000000e+00 : f32
    %240 = arith.addf %cst_67, %239 : f32
    %cst_68 = arith.constant 2.000000e+00 : f32
    %241 = arith.divf %240, %cst_68 : f32
    %c0_69 = arith.constant 0 : index
    %c2 = arith.constant 2 : index
    %242 = memref.load %arg11[%c0_69, %c2] : memref<1x3xf32, #tpu.memory_space<smem>>
    memref.store %241, %arg11[%c0_69, %c2] : memref<1x3xf32, #tpu.memory_space<smem>>
    return
  }
}

</mosaic_0001>

<llo_original>
// kernel: tpu_custom_call.1
$region0: #{tpu_custom_call.1}
  #allocation0 [shape = 'u32[]', space=smem, size = 0x4, offset = 0x4, fixed_abs, tag = 'smem constant byte address 0x4 - core index']
  #allocation1 [shape = 'u32[144,128]{1,0:T(1,128)}', space=vmem, size = 0x12000, scoped, tag = 'internal scratch']
  #allocation2 [shape = 's32[1]{0:T(128)S(6)}', space=smem, size = 0x200, scoped, tag = 'scoped memory for tpu_custom_call.1']
  %s0 = inlined_call_operand.<no memory space> [shape: s32[1], index: 0, kind: input, shape index: {}]
  %s1 = inlined_call_operand.vmem [shape: s32[4,1], index: 1, kind: input, shape index: {}]
  %s2 = inlined_call_operand.vmem [shape: f32[128,4], index: 2, kind: input, shape index: {}]
  %s3 = inlined_call_operand.vmem [shape: f32[128,4], index: 3, kind: input, shape index: {}]
  %s4 = inlined_call_operand.vmem [shape: f32[4,512], index: 4, kind: input, shape index: {}]
  %s5 = inlined_call_operand.vmem [shape: f32[1,512], index: 5, kind: input, shape index: {}]
  %s6 = inlined_call_operand.hbm [shape: bf16[512,512], index: 6, kind: input, shape index: {}]
  %s7 = inlined_call_operand.vmem [shape: f32[1,512], index: 7, kind: input, shape index: {}]
  %s8 = inlined_call_operand.hbm [shape: bf16[512,256], index: 8, kind: input, shape index: {}]
  %s9 = inlined_call_operand.vmem [shape: f32[1,256], index: 9, kind: input, shape index: {}]
  %s10 = inlined_call_operand.hbm [shape: f32[4,128], index: 10, kind: output, shape index: {0}]
  %s11 = inlined_call_operand.hbm [shape: f32[1,3], index: 11, kind: output, shape index: {1}]
  %12 = xla_tuple %s10, %s11
  %s13 = sld [smem:[#allocation0]]
  $region66: #{tpu_custom_call.1} parent=0
    _
  %s15 = ssub.s32 1, %s13
  %s16 = scalar_select 0, %s15, %s13
  %17 = sst [smem:[#allocation2]] %s0
  $region1: #{tpu_custom_call.1} parent=0
    #allocation3 [shape = 'u8[524288]{0}', space=vmem, size = 0x80000, scoped, tag = 'input window, operand 6, single buffered']
    #allocation4 [shape = 's32[1]{0}', space=sflag, size = 0x4, scoped, tag = 'scoped memory for tpu_custom_call.1']
    #allocation5 [shape = 's32[1]{0}', space=sflag, size = 0x4, scoped, tag = 'scoped memory for tpu_custom_call.1']
    #allocation6 [shape = 's32[1]{0}', space=sflag, size = 0x4, scoped, tag = 'scoped memory for tpu_custom_call.1']
    #allocation7 [shape = 'u8[262144]{0}', space=vmem, size = 0x40000, scoped, tag = 'input window, operand 8, single buffered']
    #allocation8 [shape = 's32[1]{0}', space=sflag, size = 0x4, scoped, tag = 'scoped memory for tpu_custom_call.1']
    #allocation9 [shape = 'u8[2048]{0}', space=vmem, size = 0x800, scoped, tag = 'output window, operand 0, single buffered']
    #allocation10 [shape = 'u8[512]{0}', space=smem, size = 0x200, scoped, tag = 'output window, operand 1, single buffered']
    %18 = vsyncpa [#allocation4], 0
    %19 = vsyncpa [#allocation8], 0
    %20 = vsyncpa [#allocation5], 0
    %21 = vsyncpa [#allocation6], 0
    // Predicated region
    $region2: #{tpu_custom_call.1} parent=1 // pred_check
      _
    $region3: #{tpu_custom_call.1} parent=1 // pred_check_branch
      %23 = sbr.rel (0) target = $region5
    $region4: #{tpu_custom_call.1} parent=1 // pred_region
      _
    $region5: #{tpu_custom_call.1} parent=1 // pred_fallthru
      _
    // Predicated region
    $region6: #{tpu_custom_call.1} parent=1 // pred_check
      _
    $region7: #{tpu_custom_call.1} parent=1 // pred_check_branch
      %25 = sbr.rel (0) target = $region9
    $region8: #{tpu_custom_call.1} parent=1 // pred_region
      _
    $region9: #{tpu_custom_call.1} parent=1 // pred_fallthru
      _
    // Predicated region
    $region10: #{tpu_custom_call.1} parent=1 // pred_check
      _
    $region11: #{tpu_custom_call.1} parent=1 // pred_check_branch
      %27 = sbr.rel (0) target = $region13
    $region12: #{tpu_custom_call.1} parent=1 // pred_region
      _
    $region13: #{tpu_custom_call.1} parent=1 // pred_fallthru
      _
    // Predicated region
    $region14: #{tpu_custom_call.1} parent=1 // pred_check
      _
    $region15: #{tpu_custom_call.1} parent=1 // pred_check_branch
      %29 = sbr.rel (0) target = $region17
    $region16: #{tpu_custom_call.1} parent=1 // pred_region
      _
    $region17: #{tpu_custom_call.1} parent=1 // pred_fallthru
      _
    // Predicated region
    $region18: #{tpu_custom_call.1} parent=1 // pred_check
      _
    $region19: #{tpu_custom_call.1} parent=1 // pred_check_branch
      %31 = sbr.rel (0) target = $region21
    $region20: #{tpu_custom_call.1} parent=1 // pred_region
      _
    $region21: #{tpu_custom_call.1} parent=1 // pred_fallthru
      _
    // Predicated region
    $region22: #{tpu_custom_call.1} parent=1 // pred_check
      _
    $region23: #{tpu_custom_call.1} parent=1 // pred_check_branch
      %33 = sbr.rel (0) target = $region25
    $region24: #{tpu_custom_call.1} parent=1 // pred_region
      _
    $region25: #{tpu_custom_call.1} parent=1 // pred_fallthru
      _
    // Predicated region
    $region26: #{tpu_custom_call.1} parent=1 // pred_check
      _
    $region27: #{tpu_custom_call.1} parent=1 // pred_check_branch
      %35 = sbr.rel (0) target = $region29
    $region28: #{tpu_custom_call.1} parent=1 // pred_region
      %s37 = ssub.s32 16384, 16384
      %38 = vsyncadd [#allocation4], %s37
      %s39 = sshll.u32 [#allocation3], 4
      %s40 = int_to_ptr.vmem [resolvable:$true] %s39
      %45 = dma.hbm_to_vmem [thread:$0]  %s6, 16384, %s40, [#allocation4], 256, 256, 16
    $region29: #{tpu_custom_call.1} parent=1 // pred_fallthru
      _
    // Predicated region
    $region30: #{tpu_custom_call.1} parent=1 // pred_check
      _
    $region31: #{tpu_custom_call.1} parent=1 // pred_check_branch
      %47 = sbr.rel (0) target = $region33
    $region32: #{tpu_custom_call.1} parent=1 // pred_region
      _
    $region33: #{tpu_custom_call.1} parent=1 // pred_fallthru
      _
    // Predicated region
    $region34: #{tpu_custom_call.1} parent=1 // pred_check
      _
    $region35: #{tpu_custom_call.1} parent=1 // pred_check_branch
      %49 = sbr.rel (0) target = $region37
    $region36: #{tpu_custom_call.1} parent=1 // pred_region
      %s51 = ssub.s32 8192, 8192
      %52 = vsyncadd [#allocation8], %s51
      %s53 = sshll.u32 [#allocation7], 4
      %s54 = int_to_ptr.vmem [resolvable:$true] %s53
      %59 = dma.hbm_to_vmem [thread:$0]  %s8, 8192, %s54, [#allocation8], 128, 128, 8
    $region37: #{tpu_custom_call.1} parent=1 // pred_fallthru
      _
    // Predicated region
    $region38: #{tpu_custom_call.1} parent=1 // pred_check
      _
    $region39: #{tpu_custom_call.1} parent=1 // pred_check_branch
      %61 = sbr.rel (0) target = $region41
    $region40: #{tpu_custom_call.1} parent=1 // pred_region
      _
    $region41: #{tpu_custom_call.1} parent=1 // pred_fallthru
      _
    // Predicated region
    $region42: #{tpu_custom_call.1} parent=1 // pred_check
      _
    $region43: #{tpu_custom_call.1} parent=1 // pred_check_branch
      %63 = sbr.rel (0) target = $region45
    $region44: #{tpu_custom_call.1} parent=1 // pred_region
      %64 = dma.done [#allocation4], 16384
    $region45: #{tpu_custom_call.1} parent=1 // pred_fallthru
      _
    // Predicated region
    $region46: #{tpu_custom_call.1} parent=1 // pred_check
      _
    $region47: #{tpu_custom_call.1} parent=1 // pred_check_branch
      %66 = sbr.rel (0) target = $region49
    $region48: #{tpu_custom_call.1} parent=1 // pred_region
      %67 = dma.done [#allocation8], 8192
    $region49: #{tpu_custom_call.1} parent=1 // pred_fallthru
      _
    %s68 = sld [smem:[#allocation2]]
    %v69 = vld [vmem:[%s2] sm:$0xff]
    %v70 = vld [vmem:[%s2 + $0x8] sm:$0xff]
    %v71 = vld [vmem:[%s2 + $0x10] sm:$0xff]
    %v72 = vld [vmem:[%s2 + $0x18] sm:$0xff]
    %v73 = vld [vmem:[%s2 + $0x20] sm:$0xff]
    %v74 = vld [vmem:[%s2 + $0x28] sm:$0xff]
    %v75 = vld [vmem:[%s2 + $0x30] sm:$0xff]
    %v76 = vld [vmem:[%s2 + $0x38] sm:$0xff]
    %v77 = vld [vmem:[%s2 + $0x40] sm:$0xff]
    %v78 = vld [vmem:[%s2 + $0x48] sm:$0xff]
    %v79 = vld [vmem:[%s2 + $0x50] sm:$0xff]
    %v80 = vld [vmem:[%s2 + $0x58] sm:$0xff]
    %v81 = vld [vmem:[%s2 + $0x60] sm:$0xff]
    %v82 = vld [vmem:[%s2 + $0x68] sm:$0xff]
    %v83 = vld [vmem:[%s2 + $0x70] sm:$0xff]
    %v84 = vld [vmem:[%s2 + $0x78] sm:$0xff]
    %v85 = vld [vmem:[%s4] sm:$0xff]
    %v86 = vld [vmem:[%s4 + $0x8] sm:$0xff]
    %v87 = vld [vmem:[%s5] sm:$0xf]
    %89 = vset.pattern.permute.xlu0 0
    %90 = vperm.xlu0 %89, %v69
    %v91 = vpop.permute.xlu0 %90
    %94 = vset.pattern.permute.xlu0 0
    %95 = vperm.xlu0 %94, %v70
    %v96 = vpop.permute.xlu0 %95
    %99 = vset.pattern.permute.xlu0 0
    %100 = vperm.xlu0 %99, %v71
    %v101 = vpop.permute.xlu0 %100
    %104 = vset.pattern.permute.xlu0 0
    %105 = vperm.xlu0 %104, %v72
    %v106 = vpop.permute.xlu0 %105
    %109 = vset.pattern.permute.xlu0 0
    %110 = vperm.xlu0 %109, %v73
    %v111 = vpop.permute.xlu0 %110
    %114 = vset.pattern.permute.xlu0 0
    %115 = vperm.xlu0 %114, %v74
    %v116 = vpop.permute.xlu0 %115
    %119 = vset.pattern.permute.xlu0 0
    %120 = vperm.xlu0 %119, %v75
    %v121 = vpop.permute.xlu0 %120
    %124 = vset.pattern.permute.xlu0 0
    %125 = vperm.xlu0 %124, %v76
    %v126 = vpop.permute.xlu0 %125
    %129 = vset.pattern.permute.xlu0 0
    %130 = vperm.xlu0 %129, %v77
    %v131 = vpop.permute.xlu0 %130
    %134 = vset.pattern.permute.xlu0 0
    %135 = vperm.xlu0 %134, %v78
    %v136 = vpop.permute.xlu0 %135
    %139 = vset.pattern.permute.xlu0 0
    %140 = vperm.xlu0 %139, %v79
    %v141 = vpop.permute.xlu0 %140
    %144 = vset.pattern.permute.xlu0 0
    %145 = vperm.xlu0 %144, %v80
    %v146 = vpop.permute.xlu0 %145
    %149 = vset.pattern.permute.xlu0 0
    %150 = vperm.xlu0 %149, %v81
    %v151 = vpop.permute.xlu0 %150
    %154 = vset.pattern.permute.xlu0 0
    %155 = vperm.xlu0 %154, %v82
    %v156 = vpop.permute.xlu0 %155
    %159 = vset.pattern.permute.xlu0 0
    %160 = vperm.xlu0 %159, %v83
    %v161 = vpop.permute.xlu0 %160
    %164 = vset.pattern.permute.xlu0 0
    %165 = vperm.xlu0 %164, %v84
    %v166 = vpop.permute.xlu0 %165
    %v170 = vlaneseq
    %v171 = vshrl.u32 %v170, 7
    %v172 = vsub.s32 0, %v171
    %v173 = vrot.slane %v85, %v172
    %v174 = vlaneseq
    %v175 = vshrl.u32 %v174, 7
    %v176 = vsub.s32 4, %v175
    %v177 = vrot.slane %v85, %v176
    %v178 = vlaneseq
    %v179 = vshrl.u32 %v178, 7
    %v180 = vsub.s32 0, %v179
    %v181 = vrot.slane %v86, %v180
    %v182 = vlaneseq
    %v183 = vshrl.u32 %v182, 7
    %v184 = vsub.s32 4, %v183
    %v185 = vrot.slane %v86, %v184
    %v190 = vlaneseq
    %v191 = vshrl.u32 %v190, 7
    %v192 = vsub.s32 0, %v191
    %v193 = vrot.slane %v173, %v192
    %v194 = vlaneseq
    %v195 = vshrl.u32 %v194, 7
    %v196 = vsub.s32 0, %v195
    %v197 = vrot.slane %v177, %v196
    %v198 = vlaneseq
    %v199 = vshrl.u32 %v198, 7
    %v200 = vsub.s32 0, %v199
    %v201 = vrot.slane %v181, %v200
    %v202 = vlaneseq
    %v203 = vshrl.u32 %v202, 7
    %v204 = vsub.s32 0, %v203
    %v205 = vrot.slane %v185, %v204
    %v206 = vmul.f32 %v91, %v193
    %v207 = vmul.f32 %v91, %v197
    %v208 = vmul.f32 %v91, %v201
    %v209 = vmul.f32 %v91, %v205
    %v210 = vmul.f32 %v96, %v193
    %v211 = vmul.f32 %v96, %v197
    %v212 = vmul.f32 %v96, %v201
    %v213 = vmul.f32 %v96, %v205
    %v214 = vmul.f32 %v101, %v193
    %v215 = vmul.f32 %v101, %v197
    %v216 = vmul.f32 %v101, %v201
    %v217 = vmul.f32 %v101, %v205
    %v218 = vmul.f32 %v106, %v193
    %v219 = vmul.f32 %v106, %v197
    %v220 = vmul.f32 %v106, %v201
    %v221 = vmul.f32 %v106, %v205
    %v222 = vmul.f32 %v111, %v193
    %v223 = vmul.f32 %v111, %v197
    %v224 = vmul.f32 %v111, %v201
    %v225 = vmul.f32 %v111, %v205
    %v226 = vmul.f32 %v116, %v193
    %v227 = vmul.f32 %v116, %v197
    %v228 = vmul.f32 %v116, %v201
    %v229 = vmul.f32 %v116, %v205
    %v230 = vmul.f32 %v121, %v193
    %v231 = vmul.f32 %v121, %v197
    %v232 = vmul.f32 %v121, %v201
    %v233 = vmul.f32 %v121, %v205
    %v234 = vmul.f32 %v126, %v193
    %v235 = vmul.f32 %v126, %v197
    %v236 = vmul.f32 %v126, %v201
    %v237 = vmul.f32 %v126, %v205
    %v238 = vmul.f32 %v131, %v193
    %v239 = vmul.f32 %v131, %v197
    %v240 = vmul.f32 %v131, %v201
    %v241 = vmul.f32 %v131, %v205
    %v242 = vmul.f32 %v136, %v193
    %v243 = vmul.f32 %v136, %v197
    %v244 = vmul.f32 %v136, %v201
    %v245 = vmul.f32 %v136, %v205
    %v246 = vmul.f32 %v141, %v193
    %v247 = vmul.f32 %v141, %v197
    %v248 = vmul.f32 %v141, %v201
    %v249 = vmul.f32 %v141, %v205
    %v250 = vmul.f32 %v146, %v193
    %v251 = vmul.f32 %v146, %v197
    %v252 = vmul.f32 %v146, %v201
    %v253 = vmul.f32 %v146, %v205
    %v254 = vmul.f32 %v151, %v193
    %v255 = vmul.f32 %v151, %v197
    %v256 = vmul.f32 %v151, %v201
    %v257 = vmul.f32 %v151, %v205
    %v258 = vmul.f32 %v156, %v193
    %v259 = vmul.f32 %v156, %v197
    %v260 = vmul.f32 %v156, %v201
    %v261 = vmul.f32 %v156, %v205
    %v262 = vmul.f32 %v161, %v193
    %v263 = vmul.f32 %v161, %v197
    %v264 = vmul.f32 %v161, %v201
    %v265 = vmul.f32 %v161, %v205
    %v266 = vmul.f32 %v166, %v193
    %v267 = vmul.f32 %v166, %v197
    %v268 = vmul.f32 %v166, %v201
    %v269 = vmul.f32 %v166, %v205
    %270 = vset.pattern.permute.xlu0 1
    %271 = vperm.xlu0 %270, %v69
    %v272 = vpop.permute.xlu0 %271
    %274 = vset.pattern.permute.xlu0 1
    %275 = vperm.xlu0 %274, %v70
    %v276 = vpop.permute.xlu0 %275
    %278 = vset.pattern.permute.xlu0 1
    %279 = vperm.xlu0 %278, %v71
    %v280 = vpop.permute.xlu0 %279
    %282 = vset.pattern.permute.xlu0 1
    %283 = vperm.xlu0 %282, %v72
    %v284 = vpop.permute.xlu0 %283
    %286 = vset.pattern.permute.xlu0 1
    %287 = vperm.xlu0 %286, %v73
    %v288 = vpop.permute.xlu0 %287
    %290 = vset.pattern.permute.xlu0 1
    %291 = vperm.xlu0 %290, %v74
    %v292 = vpop.permute.xlu0 %291
    %294 = vset.pattern.permute.xlu0 1
    %295 = vperm.xlu0 %294, %v75
    %v296 = vpop.permute.xlu0 %295
    %298 = vset.pattern.permute.xlu0 1
    %299 = vperm.xlu0 %298, %v76
    %v300 = vpop.permute.xlu0 %299
    %302 = vset.pattern.permute.xlu0 1
    %303 = vperm.xlu0 %302, %v77
    %v304 = vpop.permute.xlu0 %303
    %306 = vset.pattern.permute.xlu0 1
    %307 = vperm.xlu0 %306, %v78
    %v308 = vpop.permute.xlu0 %307
    %310 = vset.pattern.permute.xlu0 1
    %311 = vperm.xlu0 %310, %v79
    %v312 = vpop.permute.xlu0 %311
    %314 = vset.pattern.permute.xlu0 1
    %315 = vperm.xlu0 %314, %v80
    %v316 = vpop.permute.xlu0 %315
    %318 = vset.pattern.permute.xlu0 1
    %319 = vperm.xlu0 %318, %v81
    %v320 = vpop.permute.xlu0 %319
    %322 = vset.pattern.permute.xlu0 1
    %323 = vperm.xlu0 %322, %v82
    %v324 = vpop.permute.xlu0 %323
    %326 = vset.pattern.permute.xlu0 1
    %327 = vperm.xlu0 %326, %v83
    %v328 = vpop.permute.xlu0 %327
    %330 = vset.pattern.permute.xlu0 1
    %331 = vperm.xlu0 %330, %v84
    %v332 = vpop.permute.xlu0 %331
    %v334 = vlaneseq
    %v335 = vshrl.u32 %v334, 7
    %v336 = vsub.s32 1, %v335
    %v337 = vrot.slane %v85, %v336
    %v338 = vlaneseq
    %v339 = vshrl.u32 %v338, 7
    %v340 = vsub.s32 5, %v339
    %v341 = vrot.slane %v85, %v340
    %v342 = vlaneseq
    %v343 = vshrl.u32 %v342, 7
    %v344 = vsub.s32 1, %v343
    %v345 = vrot.slane %v86, %v344
    %v346 = vlaneseq
    %v347 = vshrl.u32 %v346, 7
    %v348 = vsub.s32 5, %v347
    %v349 = vrot.slane %v86, %v348
    %v354 = vlaneseq
    %v355 = vshrl.u32 %v354, 7
    %v356 = vsub.s32 1, %v355
    %v357 = vrot.slane %v337, %v356
    %v358 = vlaneseq
    %v359 = vshrl.u32 %v358, 7
    %v360 = vsub.s32 1, %v359
    %v361 = vrot.slane %v341, %v360
    %v362 = vlaneseq
    %v363 = vshrl.u32 %v362, 7
    %v364 = vsub.s32 1, %v363
    %v365 = vrot.slane %v345, %v364
    %v366 = vlaneseq
    %v367 = vshrl.u32 %v366, 7
    %v368 = vsub.s32 1, %v367
    %v369 = vrot.slane %v349, %v368
    %v370 = vmul.f32 %v272, %v357
    %v371 = vmul.f32 %v272, %v361
    %v372 = vmul.f32 %v272, %v365
    %v373 = vmul.f32 %v272, %v369
    %v374 = vmul.f32 %v276, %v357
    %v375 = vmul.f32 %v276, %v361
    %v376 = vmul.f32 %v276, %v365
    %v377 = vmul.f32 %v276, %v369
    %v378 = vmul.f32 %v280, %v357
    %v379 = vmul.f32 %v280, %v361
    %v380 = vmul.f32 %v280, %v365
    %v381 = vmul.f32 %v280, %v369
    %v382 = vmul.f32 %v284, %v357
    %v383 = vmul.f32 %v284, %v361
    %v384 = vmul.f32 %v284, %v365
    %v385 = vmul.f32 %v284, %v369
    %v386 = vmul.f32 %v288, %v357
    %v387 = vmul.f32 %v288, %v361
    %v388 = vmul.f32 %v288, %v365
    %v389 = vmul.f32 %v288, %v369
    %v390 = vmul.f32 %v292, %v357
    %v391 = vmul.f32 %v292, %v361
    %v392 = vmul.f32 %v292, %v365
    %v393 = vmul.f32 %v292, %v369
    %v394 = vmul.f32 %v296, %v357
    %v395 = vmul.f32 %v296, %v361
    %v396 = vmul.f32 %v296, %v365
    %v397 = vmul.f32 %v296, %v369
    %v398 = vmul.f32 %v300, %v357
    %v399 = vmul.f32 %v300, %v361
    %v400 = vmul.f32 %v300, %v365
    %v401 = vmul.f32 %v300, %v369
    %v402 = vmul.f32 %v304, %v357
    %v403 = vmul.f32 %v304, %v361
    %v404 = vmul.f32 %v304, %v365
    %v405 = vmul.f32 %v304, %v369
    %v406 = vmul.f32 %v308, %v357
    %v407 = vmul.f32 %v308, %v361
    %v408 = vmul.f32 %v308, %v365
    %v409 = vmul.f32 %v308, %v369
    %v410 = vmul.f32 %v312, %v357
    %v411 = vmul.f32 %v312, %v361
    %v412 = vmul.f32 %v312, %v365
    %v413 = vmul.f32 %v312, %v369
    %v414 = vmul.f32 %v316, %v357
    %v415 = vmul.f32 %v316, %v361
    %v416 = vmul.f32 %v316, %v365
    %v417 = vmul.f32 %v316, %v369
    %v418 = vmul.f32 %v320, %v357
    %v419 = vmul.f32 %v320, %v361
    %v420 = vmul.f32 %v320, %v365
    %v421 = vmul.f32 %v320, %v369
    %v422 = vmul.f32 %v324, %v357
    %v423 = vmul.f32 %v324, %v361
    %v424 = vmul.f32 %v324, %v365
    %v425 = vmul.f32 %v324, %v369
    %v426 = vmul.f32 %v328, %v357
    %v427 = vmul.f32 %v328, %v361
    %v428 = vmul.f32 %v328, %v365
    %v429 = vmul.f32 %v328, %v369
    %v430 = vmul.f32 %v332, %v357
    %v431 = vmul.f32 %v332, %v361
    %v432 = vmul.f32 %v332, %v365
    %v433 = vmul.f32 %v332, %v369
    %v434 = vadd.f32 %v206, %v370
    %v435 = vadd.f32 %v207, %v371
    %v436 = vadd.f32 %v208, %v372
    %v437 = vadd.f32 %v209, %v373
    %v438 = vadd.f32 %v210, %v374
    %v439 = vadd.f32 %v211, %v375
    %v440 = vadd.f32 %v212, %v376
    %v441 = vadd.f32 %v213, %v377
    %v442 = vadd.f32 %v214, %v378
    %v443 = vadd.f32 %v215, %v379
    %v444 = vadd.f32 %v216, %v380
    %v445 = vadd.f32 %v217, %v381
    %v446 = vadd.f32 %v218, %v382
    %v447 = vadd.f32 %v219, %v383
    %v448 = vadd.f32 %v220, %v384
    %v449 = vadd.f32 %v221, %v385
    %v450 = vadd.f32 %v222, %v386
    %v451 = vadd.f32 %v223, %v387
    %v452 = vadd.f32 %v224, %v388
    %v453 = vadd.f32 %v225, %v389
    %v454 = vadd.f32 %v226, %v390
    %v455 = vadd.f32 %v227, %v391
    %v456 = vadd.f32 %v228, %v392
    %v457 = vadd.f32 %v229, %v393
    %v458 = vadd.f32 %v230, %v394
    %v459 = vadd.f32 %v231, %v395
    %v460 = vadd.f32 %v232, %v396
    %v461 = vadd.f32 %v233, %v397
    %v462 = vadd.f32 %v234, %v398
    %v463 = vadd.f32 %v235, %v399
    %v464 = vadd.f32 %v236, %v400
    %v465 = vadd.f32 %v237, %v401
    %v466 = vadd.f32 %v238, %v402
    %v467 = vadd.f32 %v239, %v403
    %v468 = vadd.f32 %v240, %v404
    %v469 = vadd.f32 %v241, %v405
    %v470 = vadd.f32 %v242, %v406
    %v471 = vadd.f32 %v243, %v407
    %v472 = vadd.f32 %v244, %v408
    %v473 = vadd.f32 %v245, %v409
    %v474 = vadd.f32 %v246, %v410
    %v475 = vadd.f32 %v247, %v411
    %v476 = vadd.f32 %v248, %v412
    %v477 = vadd.f32 %v249, %v413
    %v478 = vadd.f32 %v250, %v414
    %v479 = vadd.f32 %v251, %v415
    %v480 = vadd.f32 %v252, %v416
    %v481 = vadd.f32 %v253, %v417
    %v482 = vadd.f32 %v254, %v418
    %v483 = vadd.f32 %v255, %v419
    %v484 = vadd.f32 %v256, %v420
    %v485 = vadd.f32 %v257, %v421
    %v486 = vadd.f32 %v258, %v422
    %v487 = vadd.f32 %v259, %v423
    %v488 = vadd.f32 %v260, %v424
    %v489 = vadd.f32 %v261, %v425
    %v490 = vadd.f32 %v262, %v426
    %v491 = vadd.f32 %v263, %v427
    %v492 = vadd.f32 %v264, %v428
    %v493 = vadd.f32 %v265, %v429
    %v494 = vadd.f32 %v266, %v430
    %v495 = vadd.f32 %v267, %v431
    %v496 = vadd.f32 %v268, %v432
    %v497 = vadd.f32 %v269, %v433
    %498 = vset.pattern.permute.xlu0 2
    %499 = vperm.xlu0 %498, %v69
    %v500 = vpop.permute.xlu0 %499
    %502 = vset.pattern.permute.xlu0 2
    %503 = vperm.xlu0 %502, %v70
    %v504 = vpop.permute.xlu0 %503
    %506 = vset.pattern.permute.xlu0 2
    %507 = vperm.xlu0 %506, %v71
    %v508 = vpop.permute.xlu0 %507
    %510 = vset.pattern.permute.xlu0 2
    %511 = vperm.xlu0 %510, %v72
    %v512 = vpop.permute.xlu0 %511
    %514 = vset.pattern.permute.xlu0 2
    %515 = vperm.xlu0 %514, %v73
    %v516 = vpop.permute.xlu0 %515
    %518 = vset.pattern.permute.xlu0 2
    %519 = vperm.xlu0 %518, %v74
    %v520 = vpop.permute.xlu0 %519
    %522 = vset.pattern.permute.xlu0 2
    %523 = vperm.xlu0 %522, %v75
    %v524 = vpop.permute.xlu0 %523
    %526 = vset.pattern.permute.xlu0 2
    %527 = vperm.xlu0 %526, %v76
    %v528 = vpop.permute.xlu0 %527
    %530 = vset.pattern.permute.xlu0 2
    %531 = vperm.xlu0 %530, %v77
    %v532 = vpop.permute.xlu0 %531
    %534 = vset.pattern.permute.xlu0 2
    %535 = vperm.xlu0 %534, %v78
    %v536 = vpop.permute.xlu0 %535
    %538 = vset.pattern.permute.xlu0 2
    %539 = vperm.xlu0 %538, %v79
    %v540 = vpop.permute.xlu0 %539
    %542 = vset.pattern.permute.xlu0 2
    %543 = vperm.xlu0 %542, %v80
    %v544 = vpop.permute.xlu0 %543
    %546 = vset.pattern.permute.xlu0 2
    %547 = vperm.xlu0 %546, %v81
    %v548 = vpop.permute.xlu0 %547
    %550 = vset.pattern.permute.xlu0 2
    %551 = vperm.xlu0 %550, %v82
    %v552 = vpop.permute.xlu0 %551
    %554 = vset.pattern.permute.xlu0 2
    %555 = vperm.xlu0 %554, %v83
    %v556 = vpop.permute.xlu0 %555
    %558 = vset.pattern.permute.xlu0 2
    %559 = vperm.xlu0 %558, %v84
    %v560 = vpop.permute.xlu0 %559
    %v562 = vlaneseq
    %v563 = vshrl.u32 %v562, 7
    %v564 = vsub.s32 2, %v563
    %v565 = vrot.slane %v85, %v564
    %v566 = vlaneseq
    %v567 = vshrl.u32 %v566, 7
    %v568 = vsub.s32 6, %v567
    %v569 = vrot.slane %v85, %v568
    %v570 = vlaneseq
    %v571 = vshrl.u32 %v570, 7
    %v572 = vsub.s32 2, %v571
    %v573 = vrot.slane %v86, %v572
    %v574 = vlaneseq
    %v575 = vshrl.u32 %v574, 7
    %v576 = vsub.s32 6, %v575
    %v577 = vrot.slane %v86, %v576
    %v582 = vlaneseq
    %v583 = vshrl.u32 %v582, 7
    %v584 = vsub.s32 2, %v583
    %v585 = vrot.slane %v565, %v584
    %v586 = vlaneseq
    %v587 = vshrl.u32 %v586, 7
    %v588 = vsub.s32 2, %v587
    %v589 = vrot.slane %v569, %v588
    %v590 = vlaneseq
    %v591 = vshrl.u32 %v590, 7
    %v592 = vsub.s32 2, %v591
    %v593 = vrot.slane %v573, %v592
    %v594 = vlaneseq
    %v595 = vshrl.u32 %v594, 7
    %v596 = vsub.s32 2, %v595
    %v597 = vrot.slane %v577, %v596
    %v598 = vmul.f32 %v500, %v585
    %v599 = vmul.f32 %v500, %v589
    %v600 = vmul.f32 %v500, %v593
    %v601 = vmul.f32 %v500, %v597
    %v602 = vmul.f32 %v504, %v585
    %v603 = vmul.f32 %v504, %v589
    %v604 = vmul.f32 %v504, %v593
    %v605 = vmul.f32 %v504, %v597
    %v606 = vmul.f32 %v508, %v585
    %v607 = vmul.f32 %v508, %v589
    %v608 = vmul.f32 %v508, %v593
    %v609 = vmul.f32 %v508, %v597
    %v610 = vmul.f32 %v512, %v585
    %v611 = vmul.f32 %v512, %v589
    %v612 = vmul.f32 %v512, %v593
    %v613 = vmul.f32 %v512, %v597
    %v614 = vmul.f32 %v516, %v585
    %v615 = vmul.f32 %v516, %v589
    %v616 = vmul.f32 %v516, %v593
    %v617 = vmul.f32 %v516, %v597
    %v618 = vmul.f32 %v520, %v585
    %v619 = vmul.f32 %v520, %v589
    %v620 = vmul.f32 %v520, %v593
    %v621 = vmul.f32 %v520, %v597
    %v622 = vmul.f32 %v524, %v585
    %v623 = vmul.f32 %v524, %v589
    %v624 = vmul.f32 %v524, %v593
    %v625 = vmul.f32 %v524, %v597
    %v626 = vmul.f32 %v528, %v585
    %v627 = vmul.f32 %v528, %v589
    %v628 = vmul.f32 %v528, %v593
    %v629 = vmul.f32 %v528, %v597
    %v630 = vmul.f32 %v532, %v585
    %v631 = vmul.f32 %v532, %v589
    %v632 = vmul.f32 %v532, %v593
    %v633 = vmul.f32 %v532, %v597
    %v634 = vmul.f32 %v536, %v585
    %v635 = vmul.f32 %v536, %v589
    %v636 = vmul.f32 %v536, %v593
    %v637 = vmul.f32 %v536, %v597
    %v638 = vmul.f32 %v540, %v585
    %v639 = vmul.f32 %v540, %v589
    %v640 = vmul.f32 %v540, %v593
    %v641 = vmul.f32 %v540, %v597
    %v642 = vmul.f32 %v544, %v585
    %v643 = vmul.f32 %v544, %v589
    %v644 = vmul.f32 %v544, %v593
    %v645 = vmul.f32 %v544, %v597
    %v646 = vmul.f32 %v548, %v585
    %v647 = vmul.f32 %v548, %v589
    %v648 = vmul.f32 %v548, %v593
    %v649 = vmul.f32 %v548, %v597
    %v650 = vmul.f32 %v552, %v585
    %v651 = vmul.f32 %v552, %v589
    %v652 = vmul.f32 %v552, %v593
    %v653 = vmul.f32 %v552, %v597
    %v654 = vmul.f32 %v556, %v585
    %v655 = vmul.f32 %v556, %v589
    %v656 = vmul.f32 %v556, %v593
    %v657 = vmul.f32 %v556, %v597
    %v658 = vmul.f32 %v560, %v585
    %v659 = vmul.f32 %v560, %v589
    %v660 = vmul.f32 %v560, %v593
    %v661 = vmul.f32 %v560, %v597
    %v662 = vadd.f32 %v434, %v598
    %v663 = vadd.f32 %v435, %v599
    %v664 = vadd.f32 %v436, %v600
    %v665 = vadd.f32 %v437, %v601
    %v666 = vadd.f32 %v438, %v602
    %v667 = vadd.f32 %v439, %v603
    %v668 = vadd.f32 %v440, %v604
    %v669 = vadd.f32 %v441, %v605
    %v670 = vadd.f32 %v442, %v606
    %v671 = vadd.f32 %v443, %v607
    %v672 = vadd.f32 %v444, %v608
    %v673 = vadd.f32 %v445, %v609
    %v674 = vadd.f32 %v446, %v610
    %v675 = vadd.f32 %v447, %v611
    %v676 = vadd.f32 %v448, %v612
    %v677 = vadd.f32 %v449, %v613
    %v678 = vadd.f32 %v450, %v614
    %v679 = vadd.f32 %v451, %v615
    %v680 = vadd.f32 %v452, %v616
    %v681 = vadd.f32 %v453, %v617
    %v682 = vadd.f32 %v454, %v618
    %v683 = vadd.f32 %v455, %v619
    %v684 = vadd.f32 %v456, %v620
    %v685 = vadd.f32 %v457, %v621
    %v686 = vadd.f32 %v458, %v622
    %v687 = vadd.f32 %v459, %v623
    %v688 = vadd.f32 %v460, %v624
    %v689 = vadd.f32 %v461, %v625
    %v690 = vadd.f32 %v462, %v626
    %v691 = vadd.f32 %v463, %v627
    %v692 = vadd.f32 %v464, %v628
    %v693 = vadd.f32 %v465, %v629
    %v694 = vadd.f32 %v466, %v630
    %v695 = vadd.f32 %v467, %v631
    %v696 = vadd.f32 %v468, %v632
    %v697 = vadd.f32 %v469, %v633
    %v698 = vadd.f32 %v470, %v634
    %v699 = vadd.f32 %v471, %v635
    %v700 = vadd.f32 %v472, %v636
    %v701 = vadd.f32 %v473, %v637
    %v702 = vadd.f32 %v474, %v638
    %v703 = vadd.f32 %v475, %v639
    %v704 = vadd.f32 %v476, %v640
    %v705 = vadd.f32 %v477, %v641
    %v706 = vadd.f32 %v478, %v642
    %v707 = vadd.f32 %v479, %v643
    %v708 = vadd.f32 %v480, %v644
    %v709 = vadd.f32 %v481, %v645
    %v710 = vadd.f32 %v482, %v646
    %v711 = vadd.f32 %v483, %v647
    %v712 = vadd.f32 %v484, %v648
    %v713 = vadd.f32 %v485, %v649
    %v714 = vadd.f32 %v486, %v650
    %v715 = vadd.f32 %v487, %v651
    %v716 = vadd.f32 %v488, %v652
    %v717 = vadd.f32 %v489, %v653
    %v718 = vadd.f32 %v490, %v654
    %v719 = vadd.f32 %v491, %v655
    %v720 = vadd.f32 %v492, %v656
    %v721 = vadd.f32 %v493, %v657
    %v722 = vadd.f32 %v494, %v658
    %v723 = vadd.f32 %v495, %v659
    %v724 = vadd.f32 %v496, %v660
    %v725 = vadd.f32 %v497, %v661
    %726 = vset.pattern.permute.xlu0 3
    %727 = vperm.xlu0 %726, %v69
    %v728 = vpop.permute.xlu0 %727
    %730 = vset.pattern.permute.xlu0 3
    %731 = vperm.xlu0 %730, %v70
    %v732 = vpop.permute.xlu0 %731
    %734 = vset.pattern.permute.xlu0 3
    %735 = vperm.xlu0 %734, %v71
    %v736 = vpop.permute.xlu0 %735
    %738 = vset.pattern.permute.xlu0 3
    %739 = vperm.xlu0 %738, %v72
    %v740 = vpop.permute.xlu0 %739
    %742 = vset.pattern.permute.xlu0 3
    %743 = vperm.xlu0 %742, %v73
    %v744 = vpop.permute.xlu0 %743
    %746 = vset.pattern.permute.xlu0 3
    %747 = vperm.xlu0 %746, %v74
    %v748 = vpop.permute.xlu0 %747
    %750 = vset.pattern.permute.xlu0 3
    %751 = vperm.xlu0 %750, %v75
    %v752 = vpop.permute.xlu0 %751
    %754 = vset.pattern.permute.xlu0 3
    %755 = vperm.xlu0 %754, %v76
    %v756 = vpop.permute.xlu0 %755
    %758 = vset.pattern.permute.xlu0 3
    %759 = vperm.xlu0 %758, %v77
    %v760 = vpop.permute.xlu0 %759
    %762 = vset.pattern.permute.xlu0 3
    %763 = vperm.xlu0 %762, %v78
    %v764 = vpop.permute.xlu0 %763
    %766 = vset.pattern.permute.xlu0 3
    %767 = vperm.xlu0 %766, %v79
    %v768 = vpop.permute.xlu0 %767
    %770 = vset.pattern.permute.xlu0 3
    %771 = vperm.xlu0 %770, %v80
    %v772 = vpop.permute.xlu0 %771
    %774 = vset.pattern.permute.xlu0 3
    %775 = vperm.xlu0 %774, %v81
    %v776 = vpop.permute.xlu0 %775
    %778 = vset.pattern.permute.xlu0 3
    %779 = vperm.xlu0 %778, %v82
    %v780 = vpop.permute.xlu0 %779
    %782 = vset.pattern.permute.xlu0 3
    %783 = vperm.xlu0 %782, %v83
    %v784 = vpop.permute.xlu0 %783
    %786 = vset.pattern.permute.xlu0 3
    %787 = vperm.xlu0 %786, %v84
    %v788 = vpop.permute.xlu0 %787
    %v790 = vlaneseq
    %v791 = vshrl.u32 %v790, 7
    %v792 = vsub.s32 3, %v791
    %v793 = vrot.slane %v85, %v792
    %v794 = vlaneseq
    %v795 = vshrl.u32 %v794, 7
    %v796 = vsub.s32 7, %v795
    %v797 = vrot.slane %v85, %v796
    %v798 = vlaneseq
    %v799 = vshrl.u32 %v798, 7
    %v800 = vsub.s32 3, %v799
    %v801 = vrot.slane %v86, %v800
    %v802 = vlaneseq
    %v803 = vshrl.u32 %v802, 7
    %v804 = vsub.s32 7, %v803
    %v805 = vrot.slane %v86, %v804
    %v810 = vlaneseq
    %v811 = vshrl.u32 %v810, 7
    %v812 = vsub.s32 3, %v811
    %v813 = vrot.slane %v793, %v812
    %v814 = vlaneseq
    %v815 = vshrl.u32 %v814, 7
    %v816 = vsub.s32 3, %v815
    %v817 = vrot.slane %v797, %v816
    %v818 = vlaneseq
    %v819 = vshrl.u32 %v818, 7
    %v820 = vsub.s32 3, %v819
    %v821 = vrot.slane %v801, %v820
    %v822 = vlaneseq
    %v823 = vshrl.u32 %v822, 7
    %v824 = vsub.s32 3, %v823
    %v825 = vrot.slane %v805, %v824
    %v826 = vmul.f32 %v728, %v813
    %v827 = vmul.f32 %v728, %v817
    %v828 = vmul.f32 %v728, %v821
    %v829 = vmul.f32 %v728, %v825
    %v830 = vmul.f32 %v732, %v813
    %v831 = vmul.f32 %v732, %v817
    %v832 = vmul.f32 %v732, %v821
    %v833 = vmul.f32 %v732, %v825
    %v834 = vmul.f32 %v736, %v813
    %v835 = vmul.f32 %v736, %v817
    %v836 = vmul.f32 %v736, %v821
    %v837 = vmul.f32 %v736, %v825
    %v838 = vmul.f32 %v740, %v813
    %v839 = vmul.f32 %v740, %v817
    %v840 = vmul.f32 %v740, %v821
    %v841 = vmul.f32 %v740, %v825
    %v842 = vmul.f32 %v744, %v813
    %v843 = vmul.f32 %v744, %v817
    %v844 = vmul.f32 %v744, %v821
    %v845 = vmul.f32 %v744, %v825
    %v846 = vmul.f32 %v748, %v813
    %v847 = vmul.f32 %v748, %v817
    %v848 = vmul.f32 %v748, %v821
    %v849 = vmul.f32 %v748, %v825
    %v850 = vmul.f32 %v752, %v813
    %v851 = vmul.f32 %v752, %v817
    %v852 = vmul.f32 %v752, %v821
    %v853 = vmul.f32 %v752, %v825
    %v854 = vmul.f32 %v756, %v813
    %v855 = vmul.f32 %v756, %v817
    %v856 = vmul.f32 %v756, %v821
    %v857 = vmul.f32 %v756, %v825
    %v858 = vmul.f32 %v760, %v813
    %v859 = vmul.f32 %v760, %v817
    %v860 = vmul.f32 %v760, %v821
    %v861 = vmul.f32 %v760, %v825
    %v862 = vmul.f32 %v764, %v813
    %v863 = vmul.f32 %v764, %v817
    %v864 = vmul.f32 %v764, %v821
    %v865 = vmul.f32 %v764, %v825
    %v866 = vmul.f32 %v768, %v813
    %v867 = vmul.f32 %v768, %v817
    %v868 = vmul.f32 %v768, %v821
    %v869 = vmul.f32 %v768, %v825
    %v870 = vmul.f32 %v772, %v813
    %v871 = vmul.f32 %v772, %v817
    %v872 = vmul.f32 %v772, %v821
    %v873 = vmul.f32 %v772, %v825
    %v874 = vmul.f32 %v776, %v813
    %v875 = vmul.f32 %v776, %v817
    %v876 = vmul.f32 %v776, %v821
    %v877 = vmul.f32 %v776, %v825
    %v878 = vmul.f32 %v780, %v813
    %v879 = vmul.f32 %v780, %v817
    %v880 = vmul.f32 %v780, %v821
    %v881 = vmul.f32 %v780, %v825
    %v882 = vmul.f32 %v784, %v813
    %v883 = vmul.f32 %v784, %v817
    %v884 = vmul.f32 %v784, %v821
    %v885 = vmul.f32 %v784, %v825
    %v886 = vmul.f32 %v788, %v813
    %v887 = vmul.f32 %v788, %v817
    %v888 = vmul.f32 %v788, %v821
    %v889 = vmul.f32 %v788, %v825
    %v890 = vadd.f32 %v662, %v826
    %v891 = vadd.f32 %v663, %v827
    %v892 = vadd.f32 %v664, %v828
    %v893 = vadd.f32 %v665, %v829
    %v894 = vadd.f32 %v666, %v830
    %v895 = vadd.f32 %v667, %v831
    %v896 = vadd.f32 %v668, %v832
    %v897 = vadd.f32 %v669, %v833
    %v898 = vadd.f32 %v670, %v834
    %v899 = vadd.f32 %v671, %v835
    %v900 = vadd.f32 %v672, %v836
    %v901 = vadd.f32 %v673, %v837
    %v902 = vadd.f32 %v674, %v838
    %v903 = vadd.f32 %v675, %v839
    %v904 = vadd.f32 %v676, %v840
    %v905 = vadd.f32 %v677, %v841
    %v906 = vadd.f32 %v678, %v842
    %v907 = vadd.f32 %v679, %v843
    %v908 = vadd.f32 %v680, %v844
    %v909 = vadd.f32 %v681, %v845
    %v910 = vadd.f32 %v682, %v846
    %v911 = vadd.f32 %v683, %v847
    %v912 = vadd.f32 %v684, %v848
    %v913 = vadd.f32 %v685, %v849
    %v914 = vadd.f32 %v686, %v850
    %v915 = vadd.f32 %v687, %v851
    %v916 = vadd.f32 %v688, %v852
    %v917 = vadd.f32 %v689, %v853
    %v918 = vadd.f32 %v690, %v854
    %v919 = vadd.f32 %v691, %v855
    %v920 = vadd.f32 %v692, %v856
    %v921 = vadd.f32 %v693, %v857
    %v922 = vadd.f32 %v694, %v858
    %v923 = vadd.f32 %v695, %v859
    %v924 = vadd.f32 %v696, %v860
    %v925 = vadd.f32 %v697, %v861
    %v926 = vadd.f32 %v698, %v862
    %v927 = vadd.f32 %v699, %v863
    %v928 = vadd.f32 %v700, %v864
    %v929 = vadd.f32 %v701, %v865
    %v930 = vadd.f32 %v702, %v866
    %v931 = vadd.f32 %v703, %v867
    %v932 = vadd.f32 %v704, %v868
    %v933 = vadd.f32 %v705, %v869
    %v934 = vadd.f32 %v706, %v870
    %v935 = vadd.f32 %v707, %v871
    %v936 = vadd.f32 %v708, %v872
    %v937 = vadd.f32 %v709, %v873
    %v938 = vadd.f32 %v710, %v874
    %v939 = vadd.f32 %v711, %v875
    %v940 = vadd.f32 %v712, %v876
    %v941 = vadd.f32 %v713, %v877
    %v942 = vadd.f32 %v714, %v878
    %v943 = vadd.f32 %v715, %v879
    %v944 = vadd.f32 %v716, %v880
    %v945 = vadd.f32 %v717, %v881
    %v946 = vadd.f32 %v718, %v882
    %v947 = vadd.f32 %v719, %v883
    %v948 = vadd.f32 %v720, %v884
    %v949 = vadd.f32 %v721, %v885
    %v950 = vadd.f32 %v722, %v886
    %v951 = vadd.f32 %v723, %v887
    %v952 = vadd.f32 %v724, %v888
    %v953 = vadd.f32 %v725, %v889
    %v955 = vlaneseq
    %v956 = vshrl.u32 %v955, 7
    %v957 = vsub.s32 0, %v956
    %v958 = vrot.slane %v87, %v957
    %v959 = vlaneseq
    %v960 = vshrl.u32 %v959, 7
    %v961 = vsub.s32 1, %v960
    %v962 = vrot.slane %v87, %v961
    %v963 = vlaneseq
    %v964 = vshrl.u32 %v963, 7
    %v965 = vsub.s32 2, %v964
    %v966 = vrot.slane %v87, %v965
    %v967 = vlaneseq
    %v968 = vshrl.u32 %v967, 7
    %v969 = vsub.s32 3, %v968
    %v970 = vrot.slane %v87, %v969
    %v975 = vadd.f32 %v890, %v958
    %v976 = vadd.f32 %v891, %v962
    %v977 = vadd.f32 %v892, %v966
    %v978 = vadd.f32 %v893, %v970
    %v979 = vadd.f32 %v894, %v958
    %v980 = vadd.f32 %v895, %v962
    %v981 = vadd.f32 %v896, %v966
    %v982 = vadd.f32 %v897, %v970
    %v983 = vadd.f32 %v898, %v958
    %v984 = vadd.f32 %v899, %v962
    %v985 = vadd.f32 %v900, %v966
    %v986 = vadd.f32 %v901, %v970
    %v987 = vadd.f32 %v902, %v958
    %v988 = vadd.f32 %v903, %v962
    %v989 = vadd.f32 %v904, %v966
    %v990 = vadd.f32 %v905, %v970
    %v991 = vadd.f32 %v906, %v958
    %v992 = vadd.f32 %v907, %v962
    %v993 = vadd.f32 %v908, %v966
    %v994 = vadd.f32 %v909, %v970
    %v995 = vadd.f32 %v910, %v958
    %v996 = vadd.f32 %v911, %v962
    %v997 = vadd.f32 %v912, %v966
    %v998 = vadd.f32 %v913, %v970
    %v999 = vadd.f32 %v914, %v958
    %v1000 = vadd.f32 %v915, %v962
    %v1001 = vadd.f32 %v916, %v966
    %v1002 = vadd.f32 %v917, %v970
    %v1003 = vadd.f32 %v918, %v958
    %v1004 = vadd.f32 %v919, %v962
    %v1005 = vadd.f32 %v920, %v966
    %v1006 = vadd.f32 %v921, %v970
    %v1007 = vadd.f32 %v922, %v958
    %v1008 = vadd.f32 %v923, %v962
    %v1009 = vadd.f32 %v924, %v966
    %v1010 = vadd.f32 %v925, %v970
    %v1011 = vadd.f32 %v926, %v958
    %v1012 = vadd.f32 %v927, %v962
    %v1013 = vadd.f32 %v928, %v966
    %v1014 = vadd.f32 %v929, %v970
    %v1015 = vadd.f32 %v930, %v958
    %v1016 = vadd.f32 %v931, %v962
    %v1017 = vadd.f32 %v932, %v966
    %v1018 = vadd.f32 %v933, %v970
    %v1019 = vadd.f32 %v934, %v958
    %v1020 = vadd.f32 %v935, %v962
    %v1021 = vadd.f32 %v936, %v966
    %v1022 = vadd.f32 %v937, %v970
    %v1023 = vadd.f32 %v938, %v958
    %v1024 = vadd.f32 %v939, %v962
    %v1025 = vadd.f32 %v940, %v966
    %v1026 = vadd.f32 %v941, %v970
    %v1027 = vadd.f32 %v942, %v958
    %v1028 = vadd.f32 %v943, %v962
    %v1029 = vadd.f32 %v944, %v966
    %v1030 = vadd.f32 %v945, %v970
    %v1031 = vadd.f32 %v946, %v958
    %v1032 = vadd.f32 %v947, %v962
    %v1033 = vadd.f32 %v948, %v966
    %v1034 = vadd.f32 %v949, %v970
    %v1035 = vadd.f32 %v950, %v958
    %v1036 = vadd.f32 %v951, %v962
    %v1037 = vadd.f32 %v952, %v966
    %v1038 = vadd.f32 %v953, %v970
    %v1039 = vmax.f32 %v975, 0.0
    %v1040 = vmax.f32 %v976, 0.0
    %v1041 = vmax.f32 %v977, 0.0
    %v1042 = vmax.f32 %v978, 0.0
    %v1043 = vmax.f32 %v979, 0.0
    %v1044 = vmax.f32 %v980, 0.0
    %v1045 = vmax.f32 %v981, 0.0
    %v1046 = vmax.f32 %v982, 0.0
    %v1047 = vmax.f32 %v983, 0.0
    %v1048 = vmax.f32 %v984, 0.0
    %v1049 = vmax.f32 %v985, 0.0
    %v1050 = vmax.f32 %v986, 0.0
    %v1051 = vmax.f32 %v987, 0.0
    %v1052 = vmax.f32 %v988, 0.0
    %v1053 = vmax.f32 %v989, 0.0
    %v1054 = vmax.f32 %v990, 0.0
    %v1055 = vmax.f32 %v991, 0.0
    %v1056 = vmax.f32 %v992, 0.0
    %v1057 = vmax.f32 %v993, 0.0
    %v1058 = vmax.f32 %v994, 0.0
    %v1059 = vmax.f32 %v995, 0.0
    %v1060 = vmax.f32 %v996, 0.0
    %v1061 = vmax.f32 %v997, 0.0
    %v1062 = vmax.f32 %v998, 0.0
    %v1063 = vmax.f32 %v999, 0.0
    %v1064 = vmax.f32 %v1000, 0.0
    %v1065 = vmax.f32 %v1001, 0.0
    %v1066 = vmax.f32 %v1002, 0.0
    %v1067 = vmax.f32 %v1003, 0.0
    %v1068 = vmax.f32 %v1004, 0.0
    %v1069 = vmax.f32 %v1005, 0.0
    %v1070 = vmax.f32 %v1006, 0.0
    %v1071 = vmax.f32 %v1007, 0.0
    %v1072 = vmax.f32 %v1008, 0.0
    %v1073 = vmax.f32 %v1009, 0.0
    %v1074 = vmax.f32 %v1010, 0.0
    %v1075 = vmax.f32 %v1011, 0.0
    %v1076 = vmax.f32 %v1012, 0.0
    %v1077 = vmax.f32 %v1013, 0.0
    %v1078 = vmax.f32 %v1014, 0.0
    %v1079 = vmax.f32 %v1015, 0.0
    %v1080 = vmax.f32 %v1016, 0.0
    %v1081 = vmax.f32 %v1017, 0.0
    %v1082 = vmax.f32 %v1018, 0.0
    %v1083 = vmax.f32 %v1019, 0.0
    %v1084 = vmax.f32 %v1020, 0.0
    %v1085 = vmax.f32 %v1021, 0.0
    %v1086 = vmax.f32 %v1022, 0.0
    %v1087 = vmax.f32 %v1023, 0.0
    %v1088 = vmax.f32 %v1024, 0.0
    %v1089 = vmax.f32 %v1025, 0.0
    %v1090 = vmax.f32 %v1026, 0.0
    %v1091 = vmax.f32 %v1027, 0.0
    %v1092 = vmax.f32 %v1028, 0.0
    %v1093 = vmax.f32 %v1029, 0.0
    %v1094 = vmax.f32 %v1030, 0.0
    %v1095 = vmax.f32 %v1031, 0.0
    %v1096 = vmax.f32 %v1032, 0.0
    %v1097 = vmax.f32 %v1033, 0.0
    %v1098 = vmax.f32 %v1034, 0.0
    %v1099 = vmax.f32 %v1035, 0.0
    %v1100 = vmax.f32 %v1036, 0.0
    %v1101 = vmax.f32 %v1037, 0.0
    %v1102 = vmax.f32 %v1038, 0.0
    %v1103 = vld [vmem:[%s3] sm:$0xff]
    %v1104 = vld [vmem:[%s3 + $0x8] sm:$0xff]
    %v1105 = vld [vmem:[%s3 + $0x10] sm:$0xff]
    %v1106 = vld [vmem:[%s3 + $0x18] sm:$0xff]
    %v1107 = vld [vmem:[%s3 + $0x20] sm:$0xff]
    %v1108 = vld [vmem:[%s3 + $0x28] sm:$0xff]
    %v1109 = vld [vmem:[%s3 + $0x30] sm:$0xff]
    %v1110 = vld [vmem:[%s3 + $0x38] sm:$0xff]
    %v1111 = vld [vmem:[%s3 + $0x40] sm:$0xff]
    %v1112 = vld [vmem:[%s3 + $0x48] sm:$0xff]
    %v1113 = vld [vmem:[%s3 + $0x50] sm:$0xff]
    %v1114 = vld [vmem:[%s3 + $0x58] sm:$0xff]
    %v1115 = vld [vmem:[%s3 + $0x60] sm:$0xff]
    %v1116 = vld [vmem:[%s3 + $0x68] sm:$0xff]
    %v1117 = vld [vmem:[%s3 + $0x70] sm:$0xff]
    %v1118 = vld [vmem:[%s3 + $0x78] sm:$0xff]
    %1120 = vset.pattern.permute.xlu0 0
    %1121 = vperm.xlu0 %1120, %v1103
    %v1122 = vpop.permute.xlu0 %1121
    %1125 = vset.pattern.permute.xlu0 0
    %1126 = vperm.xlu0 %1125, %v1104
    %v1127 = vpop.permute.xlu0 %1126
    %1130 = vset.pattern.permute.xlu0 0
    %1131 = vperm.xlu0 %1130, %v1105
    %v1132 = vpop.permute.xlu0 %1131
    %1135 = vset.pattern.permute.xlu0 0
    %1136 = vperm.xlu0 %1135, %v1106
    %v1137 = vpop.permute.xlu0 %1136
    %1140 = vset.pattern.permute.xlu0 0
    %1141 = vperm.xlu0 %1140, %v1107
    %v1142 = vpop.permute.xlu0 %1141
    %1145 = vset.pattern.permute.xlu0 0
    %1146 = vperm.xlu0 %1145, %v1108
    %v1147 = vpop.permute.xlu0 %1146
    %1150 = vset.pattern.permute.xlu0 0
    %1151 = vperm.xlu0 %1150, %v1109
    %v1152 = vpop.permute.xlu0 %1151
    %1155 = vset.pattern.permute.xlu0 0
    %1156 = vperm.xlu0 %1155, %v1110
    %v1157 = vpop.permute.xlu0 %1156
    %1160 = vset.pattern.permute.xlu0 0
    %1161 = vperm.xlu0 %1160, %v1111
    %v1162 = vpop.permute.xlu0 %1161
    %1165 = vset.pattern.permute.xlu0 0
    %1166 = vperm.xlu0 %1165, %v1112
    %v1167 = vpop.permute.xlu0 %1166
    %1170 = vset.pattern.permute.xlu0 0
    %1171 = vperm.xlu0 %1170, %v1113
    %v1172 = vpop.permute.xlu0 %1171
    %1175 = vset.pattern.permute.xlu0 0
    %1176 = vperm.xlu0 %1175, %v1114
    %v1177 = vpop.permute.xlu0 %1176
    %1180 = vset.pattern.permute.xlu0 0
    %1181 = vperm.xlu0 %1180, %v1115
    %v1182 = vpop.permute.xlu0 %1181
    %1185 = vset.pattern.permute.xlu0 0
    %1186 = vperm.xlu0 %1185, %v1116
    %v1187 = vpop.permute.xlu0 %1186
    %1190 = vset.pattern.permute.xlu0 0
    %1191 = vperm.xlu0 %1190, %v1117
    %v1192 = vpop.permute.xlu0 %1191
    %1195 = vset.pattern.permute.xlu0 0
    %1196 = vperm.xlu0 %1195, %v1118
    %v1197 = vpop.permute.xlu0 %1196
    %v1199 = vmul.f32 %v1122, %v193
    %v1200 = vmul.f32 %v1122, %v197
    %v1201 = vmul.f32 %v1122, %v201
    %v1202 = vmul.f32 %v1122, %v205
    %v1203 = vmul.f32 %v1127, %v193
    %v1204 = vmul.f32 %v1127, %v197
    %v1205 = vmul.f32 %v1127, %v201
    %v1206 = vmul.f32 %v1127, %v205
    %v1207 = vmul.f32 %v1132, %v193
    %v1208 = vmul.f32 %v1132, %v197
    %v1209 = vmul.f32 %v1132, %v201
    %v1210 = vmul.f32 %v1132, %v205
    %v1211 = vmul.f32 %v1137, %v193
    %v1212 = vmul.f32 %v1137, %v197
    %v1213 = vmul.f32 %v1137, %v201
    %v1214 = vmul.f32 %v1137, %v205
    %v1215 = vmul.f32 %v1142, %v193
    %v1216 = vmul.f32 %v1142, %v197
    %v1217 = vmul.f32 %v1142, %v201
    %v1218 = vmul.f32 %v1142, %v205
    %v1219 = vmul.f32 %v1147, %v193
    %v1220 = vmul.f32 %v1147, %v197
    %v1221 = vmul.f32 %v1147, %v201
    %v1222 = vmul.f32 %v1147, %v205
    %v1223 = vmul.f32 %v1152, %v193
    %v1224 = vmul.f32 %v1152, %v197
    %v1225 = vmul.f32 %v1152, %v201
    %v1226 = vmul.f32 %v1152, %v205
    %v1227 = vmul.f32 %v1157, %v193
    %v1228 = vmul.f32 %v1157, %v197
    %v1229 = vmul.f32 %v1157, %v201
    %v1230 = vmul.f32 %v1157, %v205
    %v1231 = vmul.f32 %v1162, %v193
    %v1232 = vmul.f32 %v1162, %v197
    %v1233 = vmul.f32 %v1162, %v201
    %v1234 = vmul.f32 %v1162, %v205
    %v1235 = vmul.f32 %v1167, %v193
    %v1236 = vmul.f32 %v1167, %v197
    %v1237 = vmul.f32 %v1167, %v201
    %v1238 = vmul.f32 %v1167, %v205
    %v1239 = vmul.f32 %v1172, %v193
    %v1240 = vmul.f32 %v1172, %v197
    %v1241 = vmul.f32 %v1172, %v201
    %v1242 = vmul.f32 %v1172, %v205
    %v1243 = vmul.f32 %v1177, %v193
    %v1244 = vmul.f32 %v1177, %v197
    %v1245 = vmul.f32 %v1177, %v201
    %v1246 = vmul.f32 %v1177, %v205
    %v1247 = vmul.f32 %v1182, %v193
    %v1248 = vmul.f32 %v1182, %v197
    %v1249 = vmul.f32 %v1182, %v201
    %v1250 = vmul.f32 %v1182, %v205
    %v1251 = vmul.f32 %v1187, %v193
    %v1252 = vmul.f32 %v1187, %v197
    %v1253 = vmul.f32 %v1187, %v201
    %v1254 = vmul.f32 %v1187, %v205
    %v1255 = vmul.f32 %v1192, %v193
    %v1256 = vmul.f32 %v1192, %v197
    %v1257 = vmul.f32 %v1192, %v201
    %v1258 = vmul.f32 %v1192, %v205
    %v1259 = vmul.f32 %v1197, %v193
    %v1260 = vmul.f32 %v1197, %v197
    %v1261 = vmul.f32 %v1197, %v201
    %v1262 = vmul.f32 %v1197, %v205
    %1263 = vset.pattern.permute.xlu0 1
    %1264 = vperm.xlu0 %1263, %v1103
    %v1265 = vpop.permute.xlu0 %1264
    %1267 = vset.pattern.permute.xlu0 1
    %1268 = vperm.xlu0 %1267, %v1104
    %v1269 = vpop.permute.xlu0 %1268
    %1271 = vset.pattern.permute.xlu0 1
    %1272 = vperm.xlu0 %1271, %v1105
    %v1273 = vpop.permute.xlu0 %1272
    %1275 = vset.pattern.permute.xlu0 1
    %1276 = vperm.xlu0 %1275, %v1106
    %v1277 = vpop.permute.xlu0 %1276
    %1279 = vset.pattern.permute.xlu0 1
    %1280 = vperm.xlu0 %1279, %v1107
    %v1281 = vpop.permute.xlu0 %1280
    %1283 = vset.pattern.permute.xlu0 1
    %1284 = vperm.xlu0 %1283, %v1108
    %v1285 = vpop.permute.xlu0 %1284
    %1287 = vset.pattern.permute.xlu0 1
    %1288 = vperm.xlu0 %1287, %v1109
    %v1289 = vpop.permute.xlu0 %1288
    %1291 = vset.pattern.permute.xlu0 1
    %1292 = vperm.xlu0 %1291, %v1110
    %v1293 = vpop.permute.xlu0 %1292
    %1295 = vset.pattern.permute.xlu0 1
    %1296 = vperm.xlu0 %1295, %v1111
    %v1297 = vpop.permute.xlu0 %1296
    %1299 = vset.pattern.permute.xlu0 1
    %1300 = vperm.xlu0 %1299, %v1112
    %v1301 = vpop.permute.xlu0 %1300
    %1303 = vset.pattern.permute.xlu0 1
    %1304 = vperm.xlu0 %1303, %v1113
    %v1305 = vpop.permute.xlu0 %1304
    %1307 = vset.pattern.permute.xlu0 1
    %1308 = vperm.xlu0 %1307, %v1114
    %v1309 = vpop.permute.xlu0 %1308
    %1311 = vset.pattern.permute.xlu0 1
    %1312 = vperm.xlu0 %1311, %v1115
    %v1313 = vpop.permute.xlu0 %1312
    %1315 = vset.pattern.permute.xlu0 1
    %1316 = vperm.xlu0 %1315, %v1116
    %v1317 = vpop.permute.xlu0 %1316
    %1319 = vset.pattern.permute.xlu0 1
    %1320 = vperm.xlu0 %1319, %v1117
    %v1321 = vpop.permute.xlu0 %1320
    %1323 = vset.pattern.permute.xlu0 1
    %1324 = vperm.xlu0 %1323, %v1118
    %v1325 = vpop.permute.xlu0 %1324
    %v1327 = vmul.f32 %v1265, %v357
    %v1328 = vmul.f32 %v1265, %v361
    %v1329 = vmul.f32 %v1265, %v365
    %v1330 = vmul.f32 %v1265, %v369
    %v1331 = vmul.f32 %v1269, %v357
    %v1332 = vmul.f32 %v1269, %v361
    %v1333 = vmul.f32 %v1269, %v365
    %v1334 = vmul.f32 %v1269, %v369
    %v1335 = vmul.f32 %v1273, %v357
    %v1336 = vmul.f32 %v1273, %v361
    %v1337 = vmul.f32 %v1273, %v365
    %v1338 = vmul.f32 %v1273, %v369
    %v1339 = vmul.f32 %v1277, %v357
    %v1340 = vmul.f32 %v1277, %v361
    %v1341 = vmul.f32 %v1277, %v365
    %v1342 = vmul.f32 %v1277, %v369
    %v1343 = vmul.f32 %v1281, %v357
    %v1344 = vmul.f32 %v1281, %v361
    %v1345 = vmul.f32 %v1281, %v365
    %v1346 = vmul.f32 %v1281, %v369
    %v1347 = vmul.f32 %v1285, %v357
    %v1348 = vmul.f32 %v1285, %v361
    %v1349 = vmul.f32 %v1285, %v365
    %v1350 = vmul.f32 %v1285, %v369
    %v1351 = vmul.f32 %v1289, %v357
    %v1352 = vmul.f32 %v1289, %v361
    %v1353 = vmul.f32 %v1289, %v365
    %v1354 = vmul.f32 %v1289, %v369
    %v1355 = vmul.f32 %v1293, %v357
    %v1356 = vmul.f32 %v1293, %v361
    %v1357 = vmul.f32 %v1293, %v365
    %v1358 = vmul.f32 %v1293, %v369
    %v1359 = vmul.f32 %v1297, %v357
    %v1360 = vmul.f32 %v1297, %v361
    %v1361 = vmul.f32 %v1297, %v365
    %v1362 = vmul.f32 %v1297, %v369
    %v1363 = vmul.f32 %v1301, %v357
    %v1364 = vmul.f32 %v1301, %v361
    %v1365 = vmul.f32 %v1301, %v365
    %v1366 = vmul.f32 %v1301, %v369
    %v1367 = vmul.f32 %v1305, %v357
    %v1368 = vmul.f32 %v1305, %v361
    %v1369 = vmul.f32 %v1305, %v365
    %v1370 = vmul.f32 %v1305, %v369
    %v1371 = vmul.f32 %v1309, %v357
    %v1372 = vmul.f32 %v1309, %v361
    %v1373 = vmul.f32 %v1309, %v365
    %v1374 = vmul.f32 %v1309, %v369
    %v1375 = vmul.f32 %v1313, %v357
    %v1376 = vmul.f32 %v1313, %v361
    %v1377 = vmul.f32 %v1313, %v365
    %v1378 = vmul.f32 %v1313, %v369
    %v1379 = vmul.f32 %v1317, %v357
    %v1380 = vmul.f32 %v1317, %v361
    %v1381 = vmul.f32 %v1317, %v365
    %v1382 = vmul.f32 %v1317, %v369
    %v1383 = vmul.f32 %v1321, %v357
    %v1384 = vmul.f32 %v1321, %v361
    %v1385 = vmul.f32 %v1321, %v365
    %v1386 = vmul.f32 %v1321, %v369
    %v1387 = vmul.f32 %v1325, %v357
    %v1388 = vmul.f32 %v1325, %v361
    %v1389 = vmul.f32 %v1325, %v365
    %v1390 = vmul.f32 %v1325, %v369
    %v1391 = vadd.f32 %v1199, %v1327
    %v1392 = vadd.f32 %v1200, %v1328
    %v1393 = vadd.f32 %v1201, %v1329
    %v1394 = vadd.f32 %v1202, %v1330
    %v1395 = vadd.f32 %v1203, %v1331
    %v1396 = vadd.f32 %v1204, %v1332
    %v1397 = vadd.f32 %v1205, %v1333
    %v1398 = vadd.f32 %v1206, %v1334
    %v1399 = vadd.f32 %v1207, %v1335
    %v1400 = vadd.f32 %v1208, %v1336
    %v1401 = vadd.f32 %v1209, %v1337
    %v1402 = vadd.f32 %v1210, %v1338
    %v1403 = vadd.f32 %v1211, %v1339
    %v1404 = vadd.f32 %v1212, %v1340
    %v1405 = vadd.f32 %v1213, %v1341
    %v1406 = vadd.f32 %v1214, %v1342
    %v1407 = vadd.f32 %v1215, %v1343
    %v1408 = vadd.f32 %v1216, %v1344
    %v1409 = vadd.f32 %v1217, %v1345
    %v1410 = vadd.f32 %v1218, %v1346
    %v1411 = vadd.f32 %v1219, %v1347
    %v1412 = vadd.f32 %v1220, %v1348
    %v1413 = vadd.f32 %v1221, %v1349
    %v1414 = vadd.f32 %v1222, %v1350
    %v1415 = vadd.f32 %v1223, %v1351
    %v1416 = vadd.f32 %v1224, %v1352
    %v1417 = vadd.f32 %v1225, %v1353
    %v1418 = vadd.f32 %v1226, %v1354
    %v1419 = vadd.f32 %v1227, %v1355
    %v1420 = vadd.f32 %v1228, %v1356
    %v1421 = vadd.f32 %v1229, %v1357
    %v1422 = vadd.f32 %v1230, %v1358
    %v1423 = vadd.f32 %v1231, %v1359
    %v1424 = vadd.f32 %v1232, %v1360
    %v1425 = vadd.f32 %v1233, %v1361
    %v1426 = vadd.f32 %v1234, %v1362
    %v1427 = vadd.f32 %v1235, %v1363
    %v1428 = vadd.f32 %v1236, %v1364
    %v1429 = vadd.f32 %v1237, %v1365
    %v1430 = vadd.f32 %v1238, %v1366
    %v1431 = vadd.f32 %v1239, %v1367
    %v1432 = vadd.f32 %v1240, %v1368
    %v1433 = vadd.f32 %v1241, %v1369
    %v1434 = vadd.f32 %v1242, %v1370
    %v1435 = vadd.f32 %v1243, %v1371
    %v1436 = vadd.f32 %v1244, %v1372
    %v1437 = vadd.f32 %v1245, %v1373
    %v1438 = vadd.f32 %v1246, %v1374
    %v1439 = vadd.f32 %v1247, %v1375
    %v1440 = vadd.f32 %v1248, %v1376
    %v1441 = vadd.f32 %v1249, %v1377
    %v1442 = vadd.f32 %v1250, %v1378
    %v1443 = vadd.f32 %v1251, %v1379
    %v1444 = vadd.f32 %v1252, %v1380
    %v1445 = vadd.f32 %v1253, %v1381
    %v1446 = vadd.f32 %v1254, %v1382
    %v1447 = vadd.f32 %v1255, %v1383
    %v1448 = vadd.f32 %v1256, %v1384
    %v1449 = vadd.f32 %v1257, %v1385
    %v1450 = vadd.f32 %v1258, %v1386
    %v1451 = vadd.f32 %v1259, %v1387
    %v1452 = vadd.f32 %v1260, %v1388
    %v1453 = vadd.f32 %v1261, %v1389
    %v1454 = vadd.f32 %v1262, %v1390
    %1455 = vset.pattern.permute.xlu0 2
    %1456 = vperm.xlu0 %1455, %v1103
    %v1457 = vpop.permute.xlu0 %1456
    %1459 = vset.pattern.permute.xlu0 2
    %1460 = vperm.xlu0 %1459, %v1104
    %v1461 = vpop.permute.xlu0 %1460
    %1463 = vset.pattern.permute.xlu0 2
    %1464 = vperm.xlu0 %1463, %v1105
    %v1465 = vpop.permute.xlu0 %1464
    %1467 = vset.pattern.permute.xlu0 2
    %1468 = vperm.xlu0 %1467, %v1106
    %v1469 = vpop.permute.xlu0 %1468
    %1471 = vset.pattern.permute.xlu0 2
    %1472 = vperm.xlu0 %1471, %v1107
    %v1473 = vpop.permute.xlu0 %1472
    %1475 = vset.pattern.permute.xlu0 2
    %1476 = vperm.xlu0 %1475, %v1108
    %v1477 = vpop.permute.xlu0 %1476
    %1479 = vset.pattern.permute.xlu0 2
    %1480 = vperm.xlu0 %1479, %v1109
    %v1481 = vpop.permute.xlu0 %1480
    %1483 = vset.pattern.permute.xlu0 2
    %1484 = vperm.xlu0 %1483, %v1110
    %v1485 = vpop.permute.xlu0 %1484
    %1487 = vset.pattern.permute.xlu0 2
    %1488 = vperm.xlu0 %1487, %v1111
    %v1489 = vpop.permute.xlu0 %1488
    %1491 = vset.pattern.permute.xlu0 2
    %1492 = vperm.xlu0 %1491, %v1112
    %v1493 = vpop.permute.xlu0 %1492
    %1495 = vset.pattern.permute.xlu0 2
    %1496 = vperm.xlu0 %1495, %v1113
    %v1497 = vpop.permute.xlu0 %1496
    %1499 = vset.pattern.permute.xlu0 2
    %1500 = vperm.xlu0 %1499, %v1114
    %v1501 = vpop.permute.xlu0 %1500
    %1503 = vset.pattern.permute.xlu0 2
    %1504 = vperm.xlu0 %1503, %v1115
    %v1505 = vpop.permute.xlu0 %1504
    %1507 = vset.pattern.permute.xlu0 2
    %1508 = vperm.xlu0 %1507, %v1116
    %v1509 = vpop.permute.xlu0 %1508
    %1511 = vset.pattern.permute.xlu0 2
    %1512 = vperm.xlu0 %1511, %v1117
    %v1513 = vpop.permute.xlu0 %1512
    %1515 = vset.pattern.permute.xlu0 2
    %1516 = vperm.xlu0 %1515, %v1118
    %v1517 = vpop.permute.xlu0 %1516
    %v1519 = vmul.f32 %v1457, %v585
    %v1520 = vmul.f32 %v1457, %v589
    %v1521 = vmul.f32 %v1457, %v593
    %v1522 = vmul.f32 %v1457, %v597
    %v1523 = vmul.f32 %v1461, %v585
    %v1524 = vmul.f32 %v1461, %v589
    %v1525 = vmul.f32 %v1461, %v593
    %v1526 = vmul.f32 %v1461, %v597
    %v1527 = vmul.f32 %v1465, %v585
    %v1528 = vmul.f32 %v1465, %v589
    %v1529 = vmul.f32 %v1465, %v593
    %v1530 = vmul.f32 %v1465, %v597
    %v1531 = vmul.f32 %v1469, %v585
    %v1532 = vmul.f32 %v1469, %v589
    %v1533 = vmul.f32 %v1469, %v593
    %v1534 = vmul.f32 %v1469, %v597
    %v1535 = vmul.f32 %v1473, %v585
    %v1536 = vmul.f32 %v1473, %v589
    %v1537 = vmul.f32 %v1473, %v593
    %v1538 = vmul.f32 %v1473, %v597
    %v1539 = vmul.f32 %v1477, %v585
    %v1540 = vmul.f32 %v1477, %v589
    %v1541 = vmul.f32 %v1477, %v593
    %v1542 = vmul.f32 %v1477, %v597
    %v1543 = vmul.f32 %v1481, %v585
    %v1544 = vmul.f32 %v1481, %v589
    %v1545 = vmul.f32 %v1481, %v593
    %v1546 = vmul.f32 %v1481, %v597
    %v1547 = vmul.f32 %v1485, %v585
    %v1548 = vmul.f32 %v1485, %v589
    %v1549 = vmul.f32 %v1485, %v593
    %v1550 = vmul.f32 %v1485, %v597
    %v1551 = vmul.f32 %v1489, %v585
    %v1552 = vmul.f32 %v1489, %v589
    %v1553 = vmul.f32 %v1489, %v593
    %v1554 = vmul.f32 %v1489, %v597
    %v1555 = vmul.f32 %v1493, %v585
    %v1556 = vmul.f32 %v1493, %v589
    %v1557 = vmul.f32 %v1493, %v593
    %v1558 = vmul.f32 %v1493, %v597
    %v1559 = vmul.f32 %v1497, %v585
    %v1560 = vmul.f32 %v1497, %v589
    %v1561 = vmul.f32 %v1497, %v593
    %v1562 = vmul.f32 %v1497, %v597
    %v1563 = vmul.f32 %v1501, %v585
    %v1564 = vmul.f32 %v1501, %v589
    %v1565 = vmul.f32 %v1501, %v593
    %v1566 = vmul.f32 %v1501, %v597
    %v1567 = vmul.f32 %v1505, %v585
    %v1568 = vmul.f32 %v1505, %v589
    %v1569 = vmul.f32 %v1505, %v593
    %v1570 = vmul.f32 %v1505, %v597
    %v1571 = vmul.f32 %v1509, %v585
    %v1572 = vmul.f32 %v1509, %v589
    %v1573 = vmul.f32 %v1509, %v593
    %v1574 = vmul.f32 %v1509, %v597
    %v1575 = vmul.f32 %v1513, %v585
    %v1576 = vmul.f32 %v1513, %v589
    %v1577 = vmul.f32 %v1513, %v593
    %v1578 = vmul.f32 %v1513, %v597
    %v1579 = vmul.f32 %v1517, %v585
    %v1580 = vmul.f32 %v1517, %v589
    %v1581 = vmul.f32 %v1517, %v593
    %v1582 = vmul.f32 %v1517, %v597
    %v1583 = vadd.f32 %v1391, %v1519
    %v1584 = vadd.f32 %v1392, %v1520
    %v1585 = vadd.f32 %v1393, %v1521
    %v1586 = vadd.f32 %v1394, %v1522
    %v1587 = vadd.f32 %v1395, %v1523
    %v1588 = vadd.f32 %v1396, %v1524
    %v1589 = vadd.f32 %v1397, %v1525
    %v1590 = vadd.f32 %v1398, %v1526
    %v1591 = vadd.f32 %v1399, %v1527
    %v1592 = vadd.f32 %v1400, %v1528
    %v1593 = vadd.f32 %v1401, %v1529
    %v1594 = vadd.f32 %v1402, %v1530
    %v1595 = vadd.f32 %v1403, %v1531
    %v1596 = vadd.f32 %v1404, %v1532
    %v1597 = vadd.f32 %v1405, %v1533
    %v1598 = vadd.f32 %v1406, %v1534
    %v1599 = vadd.f32 %v1407, %v1535
    %v1600 = vadd.f32 %v1408, %v1536
    %v1601 = vadd.f32 %v1409, %v1537
    %v1602 = vadd.f32 %v1410, %v1538
    %v1603 = vadd.f32 %v1411, %v1539
    %v1604 = vadd.f32 %v1412, %v1540
    %v1605 = vadd.f32 %v1413, %v1541
    %v1606 = vadd.f32 %v1414, %v1542
    %v1607 = vadd.f32 %v1415, %v1543
    %v1608 = vadd.f32 %v1416, %v1544
    %v1609 = vadd.f32 %v1417, %v1545
    %v1610 = vadd.f32 %v1418, %v1546
    %v1611 = vadd.f32 %v1419, %v1547
    %v1612 = vadd.f32 %v1420, %v1548
    %v1613 = vadd.f32 %v1421, %v1549
    %v1614 = vadd.f32 %v1422, %v1550
    %v1615 = vadd.f32 %v1423, %v1551
    %v1616 = vadd.f32 %v1424, %v1552
    %v1617 = vadd.f32 %v1425, %v1553
    %v1618 = vadd.f32 %v1426, %v1554
    %v1619 = vadd.f32 %v1427, %v1555
    %v1620 = vadd.f32 %v1428, %v1556
    %v1621 = vadd.f32 %v1429, %v1557
    %v1622 = vadd.f32 %v1430, %v1558
    %v1623 = vadd.f32 %v1431, %v1559
    %v1624 = vadd.f32 %v1432, %v1560
    %v1625 = vadd.f32 %v1433, %v1561
    %v1626 = vadd.f32 %v1434, %v1562
    %v1627 = vadd.f32 %v1435, %v1563
    %v1628 = vadd.f32 %v1436, %v1564
    %v1629 = vadd.f32 %v1437, %v1565
    %v1630 = vadd.f32 %v1438, %v1566
    %v1631 = vadd.f32 %v1439, %v1567
    %v1632 = vadd.f32 %v1440, %v1568
    %v1633 = vadd.f32 %v1441, %v1569
    %v1634 = vadd.f32 %v1442, %v1570
    %v1635 = vadd.f32 %v1443, %v1571
    %v1636 = vadd.f32 %v1444, %v1572
    %v1637 = vadd.f32 %v1445, %v1573
    %v1638 = vadd.f32 %v1446, %v1574
    %v1639 = vadd.f32 %v1447, %v1575
    %v1640 = vadd.f32 %v1448, %v1576
    %v1641 = vadd.f32 %v1449, %v1577
    %v1642 = vadd.f32 %v1450, %v1578
    %v1643 = vadd.f32 %v1451, %v1579
    %v1644 = vadd.f32 %v1452, %v1580
    %v1645 = vadd.f32 %v1453, %v1581
    %v1646 = vadd.f32 %v1454, %v1582
    %1647 = vset.pattern.permute.xlu0 3
    %1648 = vperm.xlu0 %1647, %v1103
    %v1649 = vpop.permute.xlu0 %1648
    %1651 = vset.pattern.permute.xlu0 3
    %1652 = vperm.xlu0 %1651, %v1104
    %v1653 = vpop.permute.xlu0 %1652
    %1655 = vset.pattern.permute.xlu0 3
    %1656 = vperm.xlu0 %1655, %v1105
    %v1657 = vpop.permute.xlu0 %1656
    %1659 = vset.pattern.permute.xlu0 3
    %1660 = vperm.xlu0 %1659, %v1106
    %v1661 = vpop.permute.xlu0 %1660
    %1663 = vset.pattern.permute.xlu0 3
    %1664 = vperm.xlu0 %1663, %v1107
    %v1665 = vpop.permute.xlu0 %1664
    %1667 = vset.pattern.permute.xlu0 3
    %1668 = vperm.xlu0 %1667, %v1108
    %v1669 = vpop.permute.xlu0 %1668
    %1671 = vset.pattern.permute.xlu0 3
    %1672 = vperm.xlu0 %1671, %v1109
    %v1673 = vpop.permute.xlu0 %1672
    %1675 = vset.pattern.permute.xlu0 3
    %1676 = vperm.xlu0 %1675, %v1110
    %v1677 = vpop.permute.xlu0 %1676
    %1679 = vset.pattern.permute.xlu0 3
    %1680 = vperm.xlu0 %1679, %v1111
    %v1681 = vpop.permute.xlu0 %1680
    %1683 = vset.pattern.permute.xlu0 3
    %1684 = vperm.xlu0 %1683, %v1112
    %v1685 = vpop.permute.xlu0 %1684
    %1687 = vset.pattern.permute.xlu0 3
    %1688 = vperm.xlu0 %1687, %v1113
    %v1689 = vpop.permute.xlu0 %1688
    %1691 = vset.pattern.permute.xlu0 3
    %1692 = vperm.xlu0 %1691, %v1114
    %v1693 = vpop.permute.xlu0 %1692
    %1695 = vset.pattern.permute.xlu0 3
    %1696 = vperm.xlu0 %1695, %v1115
    %v1697 = vpop.permute.xlu0 %1696
    %1699 = vset.pattern.permute.xlu0 3
    %1700 = vperm.xlu0 %1699, %v1116
    %v1701 = vpop.permute.xlu0 %1700
    %1703 = vset.pattern.permute.xlu0 3
    %1704 = vperm.xlu0 %1703, %v1117
    %v1705 = vpop.permute.xlu0 %1704
    %1707 = vset.pattern.permute.xlu0 3
    %1708 = vperm.xlu0 %1707, %v1118
    %v1709 = vpop.permute.xlu0 %1708
    %v1711 = vmul.f32 %v1649, %v813
    %v1712 = vmul.f32 %v1649, %v817
    %v1713 = vmul.f32 %v1649, %v821
    %v1714 = vmul.f32 %v1649, %v825
    %v1715 = vmul.f32 %v1653, %v813
    %v1716 = vmul.f32 %v1653, %v817
    %v1717 = vmul.f32 %v1653, %v821
    %v1718 = vmul.f32 %v1653, %v825
    %v1719 = vmul.f32 %v1657, %v813
    %v1720 = vmul.f32 %v1657, %v817
    %v1721 = vmul.f32 %v1657, %v821
    %v1722 = vmul.f32 %v1657, %v825
    %v1723 = vmul.f32 %v1661, %v813
    %v1724 = vmul.f32 %v1661, %v817
    %v1725 = vmul.f32 %v1661, %v821
    %v1726 = vmul.f32 %v1661, %v825
    %v1727 = vmul.f32 %v1665, %v813
    %v1728 = vmul.f32 %v1665, %v817
    %v1729 = vmul.f32 %v1665, %v821
    %v1730 = vmul.f32 %v1665, %v825
    %v1731 = vmul.f32 %v1669, %v813
    %v1732 = vmul.f32 %v1669, %v817
    %v1733 = vmul.f32 %v1669, %v821
    %v1734 = vmul.f32 %v1669, %v825
    %v1735 = vmul.f32 %v1673, %v813
    %v1736 = vmul.f32 %v1673, %v817
    %v1737 = vmul.f32 %v1673, %v821
    %v1738 = vmul.f32 %v1673, %v825
    %v1739 = vmul.f32 %v1677, %v813
    %v1740 = vmul.f32 %v1677, %v817
    %v1741 = vmul.f32 %v1677, %v821
    %v1742 = vmul.f32 %v1677, %v825
    %v1743 = vmul.f32 %v1681, %v813
    %v1744 = vmul.f32 %v1681, %v817
    %v1745 = vmul.f32 %v1681, %v821
    %v1746 = vmul.f32 %v1681, %v825
    %v1747 = vmul.f32 %v1685, %v813
    %v1748 = vmul.f32 %v1685, %v817
    %v1749 = vmul.f32 %v1685, %v821
    %v1750 = vmul.f32 %v1685, %v825
    %v1751 = vmul.f32 %v1689, %v813
    %v1752 = vmul.f32 %v1689, %v817
    %v1753 = vmul.f32 %v1689, %v821
    %v1754 = vmul.f32 %v1689, %v825
    %v1755 = vmul.f32 %v1693, %v813
    %v1756 = vmul.f32 %v1693, %v817
    %v1757 = vmul.f32 %v1693, %v821
    %v1758 = vmul.f32 %v1693, %v825
    %v1759 = vmul.f32 %v1697, %v813
    %v1760 = vmul.f32 %v1697, %v817
    %v1761 = vmul.f32 %v1697, %v821
    %v1762 = vmul.f32 %v1697, %v825
    %v1763 = vmul.f32 %v1701, %v813
    %v1764 = vmul.f32 %v1701, %v817
    %v1765 = vmul.f32 %v1701, %v821
    %v1766 = vmul.f32 %v1701, %v825
    %v1767 = vmul.f32 %v1705, %v813
    %v1768 = vmul.f32 %v1705, %v817
    %v1769 = vmul.f32 %v1705, %v821
    %v1770 = vmul.f32 %v1705, %v825
    %v1771 = vmul.f32 %v1709, %v813
    %v1772 = vmul.f32 %v1709, %v817
    %v1773 = vmul.f32 %v1709, %v821
    %v1774 = vmul.f32 %v1709, %v825
    %v1775 = vadd.f32 %v1583, %v1711
    %v1776 = vadd.f32 %v1584, %v1712
    %v1777 = vadd.f32 %v1585, %v1713
    %v1778 = vadd.f32 %v1586, %v1714
    %v1779 = vadd.f32 %v1587, %v1715
    %v1780 = vadd.f32 %v1588, %v1716
    %v1781 = vadd.f32 %v1589, %v1717
    %v1782 = vadd.f32 %v1590, %v1718
    %v1783 = vadd.f32 %v1591, %v1719
    %v1784 = vadd.f32 %v1592, %v1720
    %v1785 = vadd.f32 %v1593, %v1721
    %v1786 = vadd.f32 %v1594, %v1722
    %v1787 = vadd.f32 %v1595, %v1723
    %v1788 = vadd.f32 %v1596, %v1724
    %v1789 = vadd.f32 %v1597, %v1725
    %v1790 = vadd.f32 %v1598, %v1726
    %v1791 = vadd.f32 %v1599, %v1727
    %v1792 = vadd.f32 %v1600, %v1728
    %v1793 = vadd.f32 %v1601, %v1729
    %v1794 = vadd.f32 %v1602, %v1730
    %v1795 = vadd.f32 %v1603, %v1731
    %v1796 = vadd.f32 %v1604, %v1732
    %v1797 = vadd.f32 %v1605, %v1733
    %v1798 = vadd.f32 %v1606, %v1734
    %v1799 = vadd.f32 %v1607, %v1735
    %v1800 = vadd.f32 %v1608, %v1736
    %v1801 = vadd.f32 %v1609, %v1737
    %v1802 = vadd.f32 %v1610, %v1738
    %v1803 = vadd.f32 %v1611, %v1739
    %v1804 = vadd.f32 %v1612, %v1740
    %v1805 = vadd.f32 %v1613, %v1741
    %v1806 = vadd.f32 %v1614, %v1742
    %v1807 = vadd.f32 %v1615, %v1743
    %v1808 = vadd.f32 %v1616, %v1744
    %v1809 = vadd.f32 %v1617, %v1745
    %v1810 = vadd.f32 %v1618, %v1746
    %v1811 = vadd.f32 %v1619, %v1747
    %v1812 = vadd.f32 %v1620, %v1748
    %v1813 = vadd.f32 %v1621, %v1749
    %v1814 = vadd.f32 %v1622, %v1750
    %v1815 = vadd.f32 %v1623, %v1751
    %v1816 = vadd.f32 %v1624, %v1752
    %v1817 = vadd.f32 %v1625, %v1753
    %v1818 = vadd.f32 %v1626, %v1754
    %v1819 = vadd.f32 %v1627, %v1755
    %v1820 = vadd.f32 %v1628, %v1756
    %v1821 = vadd.f32 %v1629, %v1757
    %v1822 = vadd.f32 %v1630, %v1758
    %v1823 = vadd.f32 %v1631, %v1759
    %v1824 = vadd.f32 %v1632, %v1760
    %v1825 = vadd.f32 %v1633, %v1761
    %v1826 = vadd.f32 %v1634, %v1762
    %v1827 = vadd.f32 %v1635, %v1763
    %v1828 = vadd.f32 %v1636, %v1764
    %v1829 = vadd.f32 %v1637, %v1765
    %v1830 = vadd.f32 %v1638, %v1766
    %v1831 = vadd.f32 %v1639, %v1767
    %v1832 = vadd.f32 %v1640, %v1768
    %v1833 = vadd.f32 %v1641, %v1769
    %v1834 = vadd.f32 %v1642, %v1770
    %v1835 = vadd.f32 %v1643, %v1771
    %v1836 = vadd.f32 %v1644, %v1772
    %v1837 = vadd.f32 %v1645, %v1773
    %v1838 = vadd.f32 %v1646, %v1774
    %v1839 = vadd.f32 %v1775, %v958
    %v1840 = vadd.f32 %v1776, %v962
    %v1841 = vadd.f32 %v1777, %v966
    %v1842 = vadd.f32 %v1778, %v970
    %v1843 = vadd.f32 %v1779, %v958
    %v1844 = vadd.f32 %v1780, %v962
    %v1845 = vadd.f32 %v1781, %v966
    %v1846 = vadd.f32 %v1782, %v970
    %v1847 = vadd.f32 %v1783, %v958
    %v1848 = vadd.f32 %v1784, %v962
    %v1849 = vadd.f32 %v1785, %v966
    %v1850 = vadd.f32 %v1786, %v970
    %v1851 = vadd.f32 %v1787, %v958
    %v1852 = vadd.f32 %v1788, %v962
    %v1853 = vadd.f32 %v1789, %v966
    %v1854 = vadd.f32 %v1790, %v970
    %v1855 = vadd.f32 %v1791, %v958
    %v1856 = vadd.f32 %v1792, %v962
    %v1857 = vadd.f32 %v1793, %v966
    %v1858 = vadd.f32 %v1794, %v970
    %v1859 = vadd.f32 %v1795, %v958
    %v1860 = vadd.f32 %v1796, %v962
    %v1861 = vadd.f32 %v1797, %v966
    %v1862 = vadd.f32 %v1798, %v970
    %v1863 = vadd.f32 %v1799, %v958
    %v1864 = vadd.f32 %v1800, %v962
    %v1865 = vadd.f32 %v1801, %v966
    %v1866 = vadd.f32 %v1802, %v970
    %v1867 = vadd.f32 %v1803, %v958
    %v1868 = vadd.f32 %v1804, %v962
    %v1869 = vadd.f32 %v1805, %v966
    %v1870 = vadd.f32 %v1806, %v970
    %v1871 = vadd.f32 %v1807, %v958
    %v1872 = vadd.f32 %v1808, %v962
    %v1873 = vadd.f32 %v1809, %v966
    %v1874 = vadd.f32 %v1810, %v970
    %v1875 = vadd.f32 %v1811, %v958
    %v1876 = vadd.f32 %v1812, %v962
    %v1877 = vadd.f32 %v1813, %v966
    %v1878 = vadd.f32 %v1814, %v970
    %v1879 = vadd.f32 %v1815, %v958
    %v1880 = vadd.f32 %v1816, %v962
    %v1881 = vadd.f32 %v1817, %v966
    %v1882 = vadd.f32 %v1818, %v970
    %v1883 = vadd.f32 %v1819, %v958
    %v1884 = vadd.f32 %v1820, %v962
    %v1885 = vadd.f32 %v1821, %v966
    %v1886 = vadd.f32 %v1822, %v970
    %v1887 = vadd.f32 %v1823, %v958
    %v1888 = vadd.f32 %v1824, %v962
    %v1889 = vadd.f32 %v1825, %v966
    %v1890 = vadd.f32 %v1826, %v970
    %v1891 = vadd.f32 %v1827, %v958
    %v1892 = vadd.f32 %v1828, %v962
    %v1893 = vadd.f32 %v1829, %v966
    %v1894 = vadd.f32 %v1830, %v970
    %v1895 = vadd.f32 %v1831, %v958
    %v1896 = vadd.f32 %v1832, %v962
    %v1897 = vadd.f32 %v1833, %v966
    %v1898 = vadd.f32 %v1834, %v970
    %v1899 = vadd.f32 %v1835, %v958
    %v1900 = vadd.f32 %v1836, %v962
    %v1901 = vadd.f32 %v1837, %v966
    %v1902 = vadd.f32 %v1838, %v970
    %v1903 = vmax.f32 %v1839, 0.0
    %v1904 = vmax.f32 %v1840, 0.0
    %v1905 = vmax.f32 %v1841, 0.0
    %v1906 = vmax.f32 %v1842, 0.0
    %v1907 = vmax.f32 %v1843, 0.0
    %v1908 = vmax.f32 %v1844, 0.0
    %v1909 = vmax.f32 %v1845, 0.0
    %v1910 = vmax.f32 %v1846, 0.0
    %v1911 = vmax.f32 %v1847, 0.0
    %v1912 = vmax.f32 %v1848, 0.0
    %v1913 = vmax.f32 %v1849, 0.0
    %v1914 = vmax.f32 %v1850, 0.0
    %v1915 = vmax.f32 %v1851, 0.0
    %v1916 = vmax.f32 %v1852, 0.0
    %v1917 = vmax.f32 %v1853, 0.0
    %v1918 = vmax.f32 %v1854, 0.0
    %v1919 = vmax.f32 %v1855, 0.0
    %v1920 = vmax.f32 %v1856, 0.0
    %v1921 = vmax.f32 %v1857, 0.0
    %v1922 = vmax.f32 %v1858, 0.0
    %v1923 = vmax.f32 %v1859, 0.0
    %v1924 = vmax.f32 %v1860, 0.0
    %v1925 = vmax.f32 %v1861, 0.0
    %v1926 = vmax.f32 %v1862, 0.0
    %v1927 = vmax.f32 %v1863, 0.0
    %v1928 = vmax.f32 %v1864, 0.0
    %v1929 = vmax.f32 %v1865, 0.0
    %v1930 = vmax.f32 %v1866, 0.0
    %v1931 = vmax.f32 %v1867, 0.0
    %v1932 = vmax.f32 %v1868, 0.0
    %v1933 = vmax.f32 %v1869, 0.0
    %v1934 = vmax.f32 %v1870, 0.0
    %v1935 = vmax.f32 %v1871, 0.0
    %v1936 = vmax.f32 %v1872, 0.0
    %v1937 = vmax.f32 %v1873, 0.0
    %v1938 = vmax.f32 %v1874, 0.0
    %v1939 = vmax.f32 %v1875, 0.0
    %v1940 = vmax.f32 %v1876, 0.0
    %v1941 = vmax.f32 %v1877, 0.0
    %v1942 = vmax.f32 %v1878, 0.0
    %v1943 = vmax.f32 %v1879, 0.0
    %v1944 = vmax.f32 %v1880, 0.0
    %v1945 = vmax.f32 %v1881, 0.0
    %v1946 = vmax.f32 %v1882, 0.0
    %v1947 = vmax.f32 %v1883, 0.0
    %v1948 = vmax.f32 %v1884, 0.0
    %v1949 = vmax.f32 %v1885, 0.0
    %v1950 = vmax.f32 %v1886, 0.0
    %v1951 = vmax.f32 %v1887, 0.0
    %v1952 = vmax.f32 %v1888, 0.0
    %v1953 = vmax.f32 %v1889, 0.0
    %v1954 = vmax.f32 %v1890, 0.0
    %v1955 = vmax.f32 %v1891, 0.0
    %v1956 = vmax.f32 %v1892, 0.0
    %v1957 = vmax.f32 %v1893, 0.0
    %v1958 = vmax.f32 %v1894, 0.0
    %v1959 = vmax.f32 %v1895, 0.0
    %v1960 = vmax.f32 %v1896, 0.0
    %v1961 = vmax.f32 %v1897, 0.0
    %v1962 = vmax.f32 %v1898, 0.0
    %v1963 = vmax.f32 %v1899, 0.0
    %v1964 = vmax.f32 %v1900, 0.0
    %v1965 = vmax.f32 %v1901, 0.0
    %v1966 = vmax.f32 %v1902, 0.0
    %v1967 = vpack.c.bf16 %v1043, %v1039
    %v1968 = vpack.c.bf16 %v1044, %v1040
    %v1969 = vpack.c.bf16 %v1045, %v1041
    %v1970 = vpack.c.bf16 %v1046, %v1042
    %v1971 = vpack.c.bf16 %v1051, %v1047
    %v1972 = vpack.c.bf16 %v1052, %v1048
    %v1973 = vpack.c.bf16 %v1053, %v1049
    %v1974 = vpack.c.bf16 %v1054, %v1050
    %v1975 = vpack.c.bf16 %v1059, %v1055
    %v1976 = vpack.c.bf16 %v1060, %v1056
    %v1977 = vpack.c.bf16 %v1061, %v1057
    %v1978 = vpack.c.bf16 %v1062, %v1058
    %v1979 = vpack.c.bf16 %v1067, %v1063
    %v1980 = vpack.c.bf16 %v1068, %v1064
    %v1981 = vpack.c.bf16 %v1069, %v1065
    %v1982 = vpack.c.bf16 %v1070, %v1066
    %v1983 = vpack.c.bf16 %v1075, %v1071
    %v1984 = vpack.c.bf16 %v1076, %v1072
    %v1985 = vpack.c.bf16 %v1077, %v1073
    %v1986 = vpack.c.bf16 %v1078, %v1074
    %v1987 = vpack.c.bf16 %v1083, %v1079
    %v1988 = vpack.c.bf16 %v1084, %v1080
    %v1989 = vpack.c.bf16 %v1085, %v1081
    %v1990 = vpack.c.bf16 %v1086, %v1082
    %v1991 = vpack.c.bf16 %v1091, %v1087
    %v1992 = vpack.c.bf16 %v1092, %v1088
    %v1993 = vpack.c.bf16 %v1093, %v1089
    %v1994 = vpack.c.bf16 %v1094, %v1090
    %v1995 = vpack.c.bf16 %v1099, %v1095
    %v1996 = vpack.c.bf16 %v1100, %v1096
    %v1997 = vpack.c.bf16 %v1101, %v1097
    %v1998 = vpack.c.bf16 %v1102, %v1098
    %v1999 = vpack.c.bf16 %v1907, %v1903
    %v2000 = vpack.c.bf16 %v1908, %v1904
    %v2001 = vpack.c.bf16 %v1909, %v1905
    %v2002 = vpack.c.bf16 %v1910, %v1906
    %v2003 = vpack.c.bf16 %v1915, %v1911
    %v2004 = vpack.c.bf16 %v1916, %v1912
    %v2005 = vpack.c.bf16 %v1917, %v1913
    %v2006 = vpack.c.bf16 %v1918, %v1914
    %v2007 = vpack.c.bf16 %v1923, %v1919
    %v2008 = vpack.c.bf16 %v1924, %v1920
    %v2009 = vpack.c.bf16 %v1925, %v1921
    %v2010 = vpack.c.bf16 %v1926, %v1922
    %v2011 = vpack.c.bf16 %v1931, %v1927
    %v2012 = vpack.c.bf16 %v1932, %v1928
    %v2013 = vpack.c.bf16 %v1933, %v1929
    %v2014 = vpack.c.bf16 %v1934, %v1930
    %v2015 = vpack.c.bf16 %v1939, %v1935
    %v2016 = vpack.c.bf16 %v1940, %v1936
    %v2017 = vpack.c.bf16 %v1941, %v1937
    %v2018 = vpack.c.bf16 %v1942, %v1938
    %v2019 = vpack.c.bf16 %v1947, %v1943
    %v2020 = vpack.c.bf16 %v1948, %v1944
    %v2021 = vpack.c.bf16 %v1949, %v1945
    %v2022 = vpack.c.bf16 %v1950, %v1946
    %v2023 = vpack.c.bf16 %v1955, %v1951
    %v2024 = vpack.c.bf16 %v1956, %v1952
    %v2025 = vpack.c.bf16 %v1957, %v1953
    %v2026 = vpack.c.bf16 %v1958, %v1954
    %v2027 = vpack.c.bf16 %v1963, %v1959
    %v2028 = vpack.c.bf16 %v1964, %v1960
    %v2029 = vpack.c.bf16 %v1965, %v1961
    %v2030 = vpack.c.bf16 %v1966, %v1962
    %v2031 = vld [vmem:[#allocation3] sm:$0xff]
    %v2032 = vld [vmem:[#allocation3 + $0x8] sm:$0xff]
    %v2033 = vld [vmem:[#allocation3 + $0x10] sm:$0xff]
    %v2034 = vld [vmem:[#allocation3 + $0x18] sm:$0xff]
    %v2035 = vld [vmem:[#allocation3 + $0x20] sm:$0xff]
    %v2036 = vld [vmem:[#allocation3 + $0x28] sm:$0xff]
    %v2037 = vld [vmem:[#allocation3 + $0x30] sm:$0xff]
    %v2038 = vld [vmem:[#allocation3 + $0x38] sm:$0xff]
    %v2039 = vld [vmem:[#allocation3 + $0x40] sm:$0xff]
    %v2040 = vld [vmem:[#allocation3 + $0x48] sm:$0xff]
    %v2041 = vld [vmem:[#allocation3 + $0x50] sm:$0xff]
    %v2042 = vld [vmem:[#allocation3 + $0x58] sm:$0xff]
    %v2043 = vld [vmem:[#allocation3 + $0x60] sm:$0xff]
    %v2044 = vld [vmem:[#allocation3 + $0x68] sm:$0xff]
    %v2045 = vld [vmem:[#allocation3 + $0x70] sm:$0xff]
    %v2046 = vld [vmem:[#allocation3 + $0x78] sm:$0xff]
    %v2047 = vld [vmem:[#allocation3 + $0x80] sm:$0xff]
    %v2048 = vld [vmem:[#allocation3 + $0x88] sm:$0xff]
    %v2049 = vld [vmem:[#allocation3 + $0x90] sm:$0xff]
    %v2050 = vld [vmem:[#allocation3 + $0x98] sm:$0xff]
    %v2051 = vld [vmem:[#allocation3 + $0xa0] sm:$0xff]
    %v2052 = vld [vmem:[#allocation3 + $0xa8] sm:$0xff]
    %v2053 = vld [vmem:[#allocation3 + $0xb0] sm:$0xff]
    %v2054 = vld [vmem:[#allocation3 + $0xb8] sm:$0xff]
    %v2055 = vld [vmem:[#allocation3 + $0xc0] sm:$0xff]
    %v2056 = vld [vmem:[#allocation3 + $0xc8] sm:$0xff]
    %v2057 = vld [vmem:[#allocation3 + $0xd0] sm:$0xff]
    %v2058 = vld [vmem:[#allocation3 + $0xd8] sm:$0xff]
    %v2059 = vld [vmem:[#allocation3 + $0xe0] sm:$0xff]
    %v2060 = vld [vmem:[#allocation3 + $0xe8] sm:$0xff]
    %v2061 = vld [vmem:[#allocation3 + $0xf0] sm:$0xff]
    %v2062 = vld [vmem:[#allocation3 + $0xf8] sm:$0xff]
    %v2063 = vld [vmem:[#allocation3 + $0x100] sm:$0xff]
    %v2064 = vld [vmem:[#allocation3 + $0x108] sm:$0xff]
    %v2065 = vld [vmem:[#allocation3 + $0x110] sm:$0xff]
    %v2066 = vld [vmem:[#allocation3 + $0x118] sm:$0xff]
    %v2067 = vld [vmem:[#allocation3 + $0x120] sm:$0xff]
    %v2068 = vld [vmem:[#allocation3 + $0x128] sm:$0xff]
    %v2069 = vld [vmem:[#allocation3 + $0x130] sm:$0xff]
    %v2070 = vld [vmem:[#allocation3 + $0x138] sm:$0xff]
    %v2071 = vld [vmem:[#allocation3 + $0x140] sm:$0xff]
    %v2072 = vld [vmem:[#allocation3 + $0x148] sm:$0xff]
    %v2073 = vld [vmem:[#allocation3 + $0x150] sm:$0xff]
    %v2074 = vld [vmem:[#allocation3 + $0x158] sm:$0xff]
    %v2075 = vld [vmem:[#allocation3 + $0x160] sm:$0xff]
    %v2076 = vld [vmem:[#allocation3 + $0x168] sm:$0xff]
    %v2077 = vld [vmem:[#allocation3 + $0x170] sm:$0xff]
    %v2078 = vld [vmem:[#allocation3 + $0x178] sm:$0xff]
    %v2079 = vld [vmem:[#allocation3 + $0x180] sm:$0xff]
    %v2080 = vld [vmem:[#allocation3 + $0x188] sm:$0xff]
    %v2081 = vld [vmem:[#allocation3 + $0x190] sm:$0xff]
    %v2082 = vld [vmem:[#allocation3 + $0x198] sm:$0xff]
    %v2083 = vld [vmem:[#allocation3 + $0x1a0] sm:$0xff]
    %v2084 = vld [vmem:[#allocation3 + $0x1a8] sm:$0xff]
    %v2085 = vld [vmem:[#allocation3 + $0x1b0] sm:$0xff]
    %v2086 = vld [vmem:[#allocation3 + $0x1b8] sm:$0xff]
    %v2087 = vld [vmem:[#allocation3 + $0x1c0] sm:$0xff]
    %v2088 = vld [vmem:[#allocation3 + $0x1c8] sm:$0xff]
    %v2089 = vld [vmem:[#allocation3 + $0x1d0] sm:$0xff]
    %v2090 = vld [vmem:[#allocation3 + $0x1d8] sm:$0xff]
    %v2091 = vld [vmem:[#allocation3 + $0x1e0] sm:$0xff]
    %v2092 = vld [vmem:[#allocation3 + $0x1e8] sm:$0xff]
    %v2093 = vld [vmem:[#allocation3 + $0x1f0] sm:$0xff]
    %v2094 = vld [vmem:[#allocation3 + $0x1f8] sm:$0xff]
    %v2095 = vld [vmem:[#allocation3 + $0x200] sm:$0xff]
    %v2096 = vld [vmem:[#allocation3 + $0x208] sm:$0xff]
    %v2097 = vld [vmem:[#allocation3 + $0x210] sm:$0xff]
    %v2098 = vld [vmem:[#allocation3 + $0x218] sm:$0xff]
    %v2099 = vld [vmem:[#allocation3 + $0x220] sm:$0xff]
    %v2100 = vld [vmem:[#allocation3 + $0x228] sm:$0xff]
    %v2101 = vld [vmem:[#allocation3 + $0x230] sm:$0xff]
    %v2102 = vld [vmem:[#allocation3 + $0x238] sm:$0xff]
    %v2103 = vld [vmem:[#allocation3 + $0x240] sm:$0xff]
    %v2104 = vld [vmem:[#allocation3 + $0x248] sm:$0xff]
    %v2105 = vld [vmem:[#allocation3 + $0x250] sm:$0xff]
    %v2106 = vld [vmem:[#allocation3 + $0x258] sm:$0xff]
    %v2107 = vld [vmem:[#allocation3 + $0x260] sm:$0xff]
    %v2108 = vld [vmem:[#allocation3 + $0x268] sm:$0xff]
    %v2109 = vld [vmem:[#allocation3 + $0x270] sm:$0xff]
    %v2110 = vld [vmem:[#allocation3 + $0x278] sm:$0xff]
    %v2111 = vld [vmem:[#allocation3 + $0x280] sm:$0xff]
    %v2112 = vld [vmem:[#allocation3 + $0x288] sm:$0xff]
    %v2113 = vld [vmem:[#allocation3 + $0x290] sm:$0xff]
    %v2114 = vld [vmem:[#allocation3 + $0x298] sm:$0xff]
    %v2115 = vld [vmem:[#allocation3 + $0x2a0] sm:$0xff]
    %v2116 = vld [vmem:[#allocation3 + $0x2a8] sm:$0xff]
    %v2117 = vld [vmem:[#allocation3 + $0x2b0] sm:$0xff]
    %v2118 = vld [vmem:[#allocation3 + $0x2b8] sm:$0xff]
    %v2119 = vld [vmem:[#allocation3 + $0x2c0] sm:$0xff]
    %v2120 = vld [vmem:[#allocation3 + $0x2c8] sm:$0xff]
    %v2121 = vld [vmem:[#allocation3 + $0x2d0] sm:$0xff]
    %v2122 = vld [vmem:[#allocation3 + $0x2d8] sm:$0xff]
    %v2123 = vld [vmem:[#allocation3 + $0x2e0] sm:$0xff]
    %v2124 = vld [vmem:[#allocation3 + $0x2e8] sm:$0xff]
    %v2125 = vld [vmem:[#allocation3 + $0x2f0] sm:$0xff]
    %v2126 = vld [vmem:[#allocation3 + $0x2f8] sm:$0xff]
    %v2127 = vld [vmem:[#allocation3 + $0x300] sm:$0xff]
    %v2128 = vld [vmem:[#allocation3 + $0x308] sm:$0xff]
    %v2129 = vld [vmem:[#allocation3 + $0x310] sm:$0xff]
    %v2130 = vld [vmem:[#allocation3 + $0x318] sm:$0xff]
    %v2131 = vld [vmem:[#allocation3 + $0x320] sm:$0xff]
    %v2132 = vld [vmem:[#allocation3 + $0x328] sm:$0xff]
    %v2133 = vld [vmem:[#allocation3 + $0x330] sm:$0xff]
    %v2134 = vld [vmem:[#allocation3 + $0x338] sm:$0xff]
    %v2135 = vld [vmem:[#allocation3 + $0x340] sm:$0xff]
    %v2136 = vld [vmem:[#allocation3 + $0x348] sm:$0xff]
    %v2137 = vld [vmem:[#allocation3 + $0x350] sm:$0xff]
    %v2138 = vld [vmem:[#allocation3 + $0x358] sm:$0xff]
    %v2139 = vld [vmem:[#allocation3 + $0x360] sm:$0xff]
    %v2140 = vld [vmem:[#allocation3 + $0x368] sm:$0xff]
    %v2141 = vld [vmem:[#allocation3 + $0x370] sm:$0xff]
    %v2142 = vld [vmem:[#allocation3 + $0x378] sm:$0xff]
    %v2143 = vld [vmem:[#allocation3 + $0x380] sm:$0xff]
    %v2144 = vld [vmem:[#allocation3 + $0x388] sm:$0xff]
    %v2145 = vld [vmem:[#allocation3 + $0x390] sm:$0xff]
    %v2146 = vld [vmem:[#allocation3 + $0x398] sm:$0xff]
    %v2147 = vld [vmem:[#allocation3 + $0x3a0] sm:$0xff]
    %v2148 = vld [vmem:[#allocation3 + $0x3a8] sm:$0xff]
    %v2149 = vld [vmem:[#allocation3 + $0x3b0] sm:$0xff]
    %v2150 = vld [vmem:[#allocation3 + $0x3b8] sm:$0xff]
    %v2151 = vld [vmem:[#allocation3 + $0x3c0] sm:$0xff]
    %v2152 = vld [vmem:[#allocation3 + $0x3c8] sm:$0xff]
    %v2153 = vld [vmem:[#allocation3 + $0x3d0] sm:$0xff]
    %v2154 = vld [vmem:[#allocation3 + $0x3d8] sm:$0xff]
    %v2155 = vld [vmem:[#allocation3 + $0x3e0] sm:$0xff]
    %v2156 = vld [vmem:[#allocation3 + $0x3e8] sm:$0xff]
    %v2157 = vld [vmem:[#allocation3 + $0x3f0] sm:$0xff]
    %v2158 = vld [vmem:[#allocation3 + $0x3f8] sm:$0xff]
    %v2159 = vld [vmem:[%s7] sm:$0xf]
    %v2161 = vlaneseq
    %v2162 = vshrl.u32 %v2161, 7
    %v2163 = vsub.s32 0, %v2162
    %v2164 = vrot.slane %v2159, %v2163
    %v2165 = vlaneseq
    %v2166 = vshrl.u32 %v2165, 7
    %v2167 = vsub.s32 1, %v2166
    %v2168 = vrot.slane %v2159, %v2167
    %v2169 = vlaneseq
    %v2170 = vshrl.u32 %v2169, 7
    %v2171 = vsub.s32 2, %v2170
    %v2172 = vrot.slane %v2159, %v2171
    %v2173 = vlaneseq
    %v2174 = vshrl.u32 %v2173, 7
    %v2175 = vsub.s32 3, %v2174
    %v2176 = vrot.slane %v2159, %v2175
    %v2309 = vunpack.c.l.b16 %v2031
    %v2310 = vunpack.c.h.b16 %v2031
    %v2311 = vunpack.c.l.b16 %v2032
    %v2312 = vunpack.c.h.b16 %v2032
    %v2313 = vunpack.c.l.b16 %v2033
    %v2314 = vunpack.c.h.b16 %v2033
    %v2315 = vunpack.c.l.b16 %v2034
    %v2316 = vunpack.c.h.b16 %v2034
    %v2317 = vunpack.c.l.b16 %v2035
    %v2318 = vunpack.c.h.b16 %v2035
    %v2319 = vunpack.c.l.b16 %v2036
    %v2320 = vunpack.c.h.b16 %v2036
    %v2321 = vunpack.c.l.b16 %v2037
    %v2322 = vunpack.c.h.b16 %v2037
    %v2323 = vunpack.c.l.b16 %v2038
    %v2324 = vunpack.c.h.b16 %v2038
    %v2325 = vunpack.c.l.b16 %v2039
    %v2326 = vunpack.c.h.b16 %v2039
    %v2327 = vunpack.c.l.b16 %v2040
    %v2328 = vunpack.c.h.b16 %v2040
    %v2329 = vunpack.c.l.b16 %v2041
    %v2330 = vunpack.c.h.b16 %v2041
    %v2331 = vunpack.c.l.b16 %v2042
    %v2332 = vunpack.c.h.b16 %v2042
    %v2333 = vunpack.c.l.b16 %v2043
    %v2334 = vunpack.c.h.b16 %v2043
    %v2335 = vunpack.c.l.b16 %v2044
    %v2336 = vunpack.c.h.b16 %v2044
    %v2337 = vunpack.c.l.b16 %v2045
    %v2338 = vunpack.c.h.b16 %v2045
    %v2339 = vunpack.c.l.b16 %v2046
    %v2340 = vunpack.c.h.b16 %v2046
    %v2341 = vunpack.c.l.b16 %v2047
    %v2342 = vunpack.c.h.b16 %v2047
    %v2343 = vunpack.c.l.b16 %v2048
    %v2344 = vunpack.c.h.b16 %v2048
    %v2345 = vunpack.c.l.b16 %v2049
    %v2346 = vunpack.c.h.b16 %v2049
    %v2347 = vunpack.c.l.b16 %v2050
    %v2348 = vunpack.c.h.b16 %v2050
    %v2349 = vunpack.c.l.b16 %v2051
    %v2350 = vunpack.c.h.b16 %v2051
    %v2351 = vunpack.c.l.b16 %v2052
    %v2352 = vunpack.c.h.b16 %v2052
    %v2353 = vunpack.c.l.b16 %v2053
    %v2354 = vunpack.c.h.b16 %v2053
    %v2355 = vunpack.c.l.b16 %v2054
    %v2356 = vunpack.c.h.b16 %v2054
    %v2357 = vunpack.c.l.b16 %v2055
    %v2358 = vunpack.c.h.b16 %v2055
    %v2359 = vunpack.c.l.b16 %v2056
    %v2360 = vunpack.c.h.b16 %v2056
    %v2361 = vunpack.c.l.b16 %v2057
    %v2362 = vunpack.c.h.b16 %v2057
    %v2363 = vunpack.c.l.b16 %v2058
    %v2364 = vunpack.c.h.b16 %v2058
    %v2365 = vunpack.c.l.b16 %v2059
    %v2366 = vunpack.c.h.b16 %v2059
    %v2367 = vunpack.c.l.b16 %v2060
    %v2368 = vunpack.c.h.b16 %v2060
    %v2369 = vunpack.c.l.b16 %v2061
    %v2370 = vunpack.c.h.b16 %v2061
    %v2371 = vunpack.c.l.b16 %v2062
    %v2372 = vunpack.c.h.b16 %v2062
    %v2373 = vunpack.c.l.b16 %v2063
    %v2374 = vunpack.c.h.b16 %v2063
    %v2375 = vunpack.c.l.b16 %v2064
    %v2376 = vunpack.c.h.b16 %v2064
    %v2377 = vunpack.c.l.b16 %v2065
    %v2378 = vunpack.c.h.b16 %v2065
    %v2379 = vunpack.c.l.b16 %v2066
    %v2380 = vunpack.c.h.b16 %v2066
    %v2381 = vunpack.c.l.b16 %v2067
    %v2382 = vunpack.c.h.b16 %v2067
    %v2383 = vunpack.c.l.b16 %v2068
    %v2384 = vunpack.c.h.b16 %v2068
    %v2385 = vunpack.c.l.b16 %v2069
    %v2386 = vunpack.c.h.b16 %v2069
    %v2387 = vunpack.c.l.b16 %v2070
    %v2388 = vunpack.c.h.b16 %v2070
    %v2389 = vunpack.c.l.b16 %v2071
    %v2390 = vunpack.c.h.b16 %v2071
    %v2391 = vunpack.c.l.b16 %v2072
    %v2392 = vunpack.c.h.b16 %v2072
    %v2393 = vunpack.c.l.b16 %v2073
    %v2394 = vunpack.c.h.b16 %v2073
    %v2395 = vunpack.c.l.b16 %v2074
    %v2396 = vunpack.c.h.b16 %v2074
    %v2397 = vunpack.c.l.b16 %v2075
    %v2398 = vunpack.c.h.b16 %v2075
    %v2399 = vunpack.c.l.b16 %v2076
    %v2400 = vunpack.c.h.b16 %v2076
    %v2401 = vunpack.c.l.b16 %v2077
    %v2402 = vunpack.c.h.b16 %v2077
    %v2403 = vunpack.c.l.b16 %v2078
    %v2404 = vunpack.c.h.b16 %v2078
    %v2405 = vunpack.c.l.b16 %v2079
    %v2406 = vunpack.c.h.b16 %v2079
    %v2407 = vunpack.c.l.b16 %v2080
    %v2408 = vunpack.c.h.b16 %v2080
    %v2409 = vunpack.c.l.b16 %v2081
    %v2410 = vunpack.c.h.b16 %v2081
    %v2411 = vunpack.c.l.b16 %v2082
    %v2412 = vunpack.c.h.b16 %v2082
    %v2413 = vunpack.c.l.b16 %v2083
    %v2414 = vunpack.c.h.b16 %v2083
    %v2415 = vunpack.c.l.b16 %v2084
    %v2416 = vunpack.c.h.b16 %v2084
    %v2417 = vunpack.c.l.b16 %v2085
    %v2418 = vunpack.c.h.b16 %v2085
    %v2419 = vunpack.c.l.b16 %v2086
    %v2420 = vunpack.c.h.b16 %v2086
    %v2421 = vunpack.c.l.b16 %v2087
    %v2422 = vunpack.c.h.b16 %v2087
    %v2423 = vunpack.c.l.b16 %v2088
    %v2424 = vunpack.c.h.b16 %v2088
    %v2425 = vunpack.c.l.b16 %v2089
    %v2426 = vunpack.c.h.b16 %v2089
    %v2427 = vunpack.c.l.b16 %v2090
    %v2428 = vunpack.c.h.b16 %v2090
    %v2429 = vunpack.c.l.b16 %v2091
    %v2430 = vunpack.c.h.b16 %v2091
    %v2431 = vunpack.c.l.b16 %v2092
    %v2432 = vunpack.c.h.b16 %v2092
    %v2433 = vunpack.c.l.b16 %v2093
    %v2434 = vunpack.c.h.b16 %v2093
    %v2435 = vunpack.c.l.b16 %v2094
    %v2436 = vunpack.c.h.b16 %v2094
    %v2437 = vunpack.c.l.b16 %v2095
    %v2438 = vunpack.c.h.b16 %v2095
    %v2439 = vunpack.c.l.b16 %v2096
    %v2440 = vunpack.c.h.b16 %v2096
    %v2441 = vunpack.c.l.b16 %v2097
    %v2442 = vunpack.c.h.b16 %v2097
    %v2443 = vunpack.c.l.b16 %v2098
    %v2444 = vunpack.c.h.b16 %v2098
    %v2445 = vunpack.c.l.b16 %v2099
    %v2446 = vunpack.c.h.b16 %v2099
    %v2447 = vunpack.c.l.b16 %v2100
    %v2448 = vunpack.c.h.b16 %v2100
    %v2449 = vunpack.c.l.b16 %v2101
    %v2450 = vunpack.c.h.b16 %v2101
    %v2451 = vunpack.c.l.b16 %v2102
    %v2452 = vunpack.c.h.b16 %v2102
    %v2453 = vunpack.c.l.b16 %v2103
    %v2454 = vunpack.c.h.b16 %v2103
    %v2455 = vunpack.c.l.b16 %v2104
    %v2456 = vunpack.c.h.b16 %v2104
    %v2457 = vunpack.c.l.b16 %v2105
    %v2458 = vunpack.c.h.b16 %v2105
    %v2459 = vunpack.c.l.b16 %v2106
    %v2460 = vunpack.c.h.b16 %v2106
    %v2461 = vunpack.c.l.b16 %v2107
    %v2462 = vunpack.c.h.b16 %v2107
    %v2463 = vunpack.c.l.b16 %v2108
    %v2464 = vunpack.c.h.b16 %v2108
    %v2465 = vunpack.c.l.b16 %v2109
    %v2466 = vunpack.c.h.b16 %v2109
    %v2467 = vunpack.c.l.b16 %v2110
    %v2468 = vunpack.c.h.b16 %v2110
    %v2469 = vunpack.c.l.b16 %v2111
    %v2470 = vunpack.c.h.b16 %v2111
    %v2471 = vunpack.c.l.b16 %v2112
    %v2472 = vunpack.c.h.b16 %v2112
    %v2473 = vunpack.c.l.b16 %v2113
    %v2474 = vunpack.c.h.b16 %v2113
    %v2475 = vunpack.c.l.b16 %v2114
    %v2476 = vunpack.c.h.b16 %v2114
    %v2477 = vunpack.c.l.b16 %v2115
    %v2478 = vunpack.c.h.b16 %v2115
    %v2479 = vunpack.c.l.b16 %v2116
    %v2480 = vunpack.c.h.b16 %v2116
    %v2481 = vunpack.c.l.b16 %v2117
    %v2482 = vunpack.c.h.b16 %v2117
    %v2483 = vunpack.c.l.b16 %v2118
    %v2484 = vunpack.c.h.b16 %v2118
    %v2485 = vunpack.c.l.b16 %v2119
    %v2486 = vunpack.c.h.b16 %v2119
    %v2487 = vunpack.c.l.b16 %v2120
    %v2488 = vunpack.c.h.b16 %v2120
    %v2489 = vunpack.c.l.b16 %v2121
    %v2490 = vunpack.c.h.b16 %v2121
    %v2491 = vunpack.c.l.b16 %v2122
    %v2492 = vunpack.c.h.b16 %v2122
    %v2493 = vunpack.c.l.b16 %v2123
    %v2494 = vunpack.c.h.b16 %v2123
    %v2495 = vunpack.c.l.b16 %v2124
    %v2496 = vunpack.c.h.b16 %v2124
    %v2497 = vunpack.c.l.b16 %v2125
    %v2498 = vunpack.c.h.b16 %v2125
    %v2499 = vunpack.c.l.b16 %v2126
    %v2500 = vunpack.c.h.b16 %v2126
    %v2501 = vunpack.c.l.b16 %v2127
    %v2502 = vunpack.c.h.b16 %v2127
    %v2503 = vunpack.c.l.b16 %v2128
    %v2504 = vunpack.c.h.b16 %v2128
    %v2505 = vunpack.c.l.b16 %v2129
    %v2506 = vunpack.c.h.b16 %v2129
    %v2507 = vunpack.c.l.b16 %v2130
    %v2508 = vunpack.c.h.b16 %v2130
    %v2509 = vunpack.c.l.b16 %v2131
    %v2510 = vunpack.c.h.b16 %v2131
    %v2511 = vunpack.c.l.b16 %v2132
    %v2512 = vunpack.c.h.b16 %v2132
    %v2513 = vunpack.c.l.b16 %v2133
    %v2514 = vunpack.c.h.b16 %v2133
    %v2515 = vunpack.c.l.b16 %v2134
    %v2516 = vunpack.c.h.b16 %v2134
    %v2517 = vunpack.c.l.b16 %v2135
    %v2518 = vunpack.c.h.b16 %v2135
    %v2519 = vunpack.c.l.b16 %v2136
    %v2520 = vunpack.c.h.b16 %v2136
    %v2521 = vunpack.c.l.b16 %v2137
    %v2522 = vunpack.c.h.b16 %v2137
    %v2523 = vunpack.c.l.b16 %v2138
    %v2524 = vunpack.c.h.b16 %v2138
    %v2525 = vunpack.c.l.b16 %v2139
    %v2526 = vunpack.c.h.b16 %v2139
    %v2527 = vunpack.c.l.b16 %v2140
    %v2528 = vunpack.c.h.b16 %v2140
    %v2529 = vunpack.c.l.b16 %v2141
    %v2530 = vunpack.c.h.b16 %v2141
    %v2531 = vunpack.c.l.b16 %v2142
    %v2532 = vunpack.c.h.b16 %v2142
    %v2533 = vunpack.c.l.b16 %v2143
    %v2534 = vunpack.c.h.b16 %v2143
    %v2535 = vunpack.c.l.b16 %v2144
    %v2536 = vunpack.c.h.b16 %v2144
    %v2537 = vunpack.c.l.b16 %v2145
    %v2538 = vunpack.c.h.b16 %v2145
    %v2539 = vunpack.c.l.b16 %v2146
    %v2540 = vunpack.c.h.b16 %v2146
    %v2541 = vunpack.c.l.b16 %v2147
    %v2542 = vunpack.c.h.b16 %v2147
    %v2543 = vunpack.c.l.b16 %v2148
    %v2544 = vunpack.c.h.b16 %v2148
    %v2545 = vunpack.c.l.b16 %v2149
    %v2546 = vunpack.c.h.b16 %v2149
    %v2547 = vunpack.c.l.b16 %v2150
    %v2548 = vunpack.c.h.b16 %v2150
    %v2549 = vunpack.c.l.b16 %v2151
    %v2550 = vunpack.c.h.b16 %v2151
    %v2551 = vunpack.c.l.b16 %v2152
    %v2552 = vunpack.c.h.b16 %v2152
    %v2553 = vunpack.c.l.b16 %v2153
    %v2554 = vunpack.c.h.b16 %v2153
    %v2555 = vunpack.c.l.b16 %v2154
    %v2556 = vunpack.c.h.b16 %v2154
    %v2557 = vunpack.c.l.b16 %v2155
    %v2558 = vunpack.c.h.b16 %v2155
    %v2559 = vunpack.c.l.b16 %v2156
    %v2560 = vunpack.c.h.b16 %v2156
    %v2561 = vunpack.c.l.b16 %v2157
    %v2562 = vunpack.c.h.b16 %v2157
    %v2563 = vunpack.c.l.b16 %v2158
    %v2564 = vunpack.c.h.b16 %v2158
    %v2565 = vpack.c.b16 %v2313, %v2309
    %v2566 = vpack.c.b16 %v2314, %v2310
    %v2567 = vpack.c.b16 %v2315, %v2311
    %v2568 = vpack.c.b16 %v2316, %v2312
    %v2569 = vpack.c.b16 %v2321, %v2317
    %v2570 = vpack.c.b16 %v2322, %v2318
    %v2571 = vpack.c.b16 %v2323, %v2319
    %v2572 = vpack.c.b16 %v2324, %v2320
    %v2573 = vpack.c.b16 %v2329, %v2325
    %v2574 = vpack.c.b16 %v2330, %v2326
    %v2575 = vpack.c.b16 %v2331, %v2327
    %v2576 = vpack.c.b16 %v2332, %v2328
    %v2577 = vpack.c.b16 %v2337, %v2333
    %v2578 = vpack.c.b16 %v2338, %v2334
    %v2579 = vpack.c.b16 %v2339, %v2335
    %v2580 = vpack.c.b16 %v2340, %v2336
    %v2581 = vpack.c.b16 %v2345, %v2341
    %v2582 = vpack.c.b16 %v2346, %v2342
    %v2583 = vpack.c.b16 %v2347, %v2343
    %v2584 = vpack.c.b16 %v2348, %v2344
    %v2585 = vpack.c.b16 %v2353, %v2349
    %v2586 = vpack.c.b16 %v2354, %v2350
    %v2587 = vpack.c.b16 %v2355, %v2351
    %v2588 = vpack.c.b16 %v2356, %v2352
    %v2589 = vpack.c.b16 %v2361, %v2357
    %v2590 = vpack.c.b16 %v2362, %v2358
    %v2591 = vpack.c.b16 %v2363, %v2359
    %v2592 = vpack.c.b16 %v2364, %v2360
    %v2593 = vpack.c.b16 %v2369, %v2365
    %v2594 = vpack.c.b16 %v2370, %v2366
    %v2595 = vpack.c.b16 %v2371, %v2367
    %v2596 = vpack.c.b16 %v2372, %v2368
    %v2597 = vpack.c.b16 %v2377, %v2373
    %v2598 = vpack.c.b16 %v2378, %v2374
    %v2599 = vpack.c.b16 %v2379, %v2375
    %v2600 = vpack.c.b16 %v2380, %v2376
    %v2601 = vpack.c.b16 %v2385, %v2381
    %v2602 = vpack.c.b16 %v2386, %v2382
    %v2603 = vpack.c.b16 %v2387, %v2383
    %v2604 = vpack.c.b16 %v2388, %v2384
    %v2605 = vpack.c.b16 %v2393, %v2389
    %v2606 = vpack.c.b16 %v2394, %v2390
    %v2607 = vpack.c.b16 %v2395, %v2391
    %v2608 = vpack.c.b16 %v2396, %v2392
    %v2609 = vpack.c.b16 %v2401, %v2397
    %v2610 = vpack.c.b16 %v2402, %v2398
    %v2611 = vpack.c.b16 %v2403, %v2399
    %v2612 = vpack.c.b16 %v2404, %v2400
    %v2613 = vpack.c.b16 %v2409, %v2405
    %v2614 = vpack.c.b16 %v2410, %v2406
    %v2615 = vpack.c.b16 %v2411, %v2407
    %v2616 = vpack.c.b16 %v2412, %v2408
    %v2617 = vpack.c.b16 %v2417, %v2413
    %v2618 = vpack.c.b16 %v2418, %v2414
    %v2619 = vpack.c.b16 %v2419, %v2415
    %v2620 = vpack.c.b16 %v2420, %v2416
    %v2621 = vpack.c.b16 %v2425, %v2421
    %v2622 = vpack.c.b16 %v2426, %v2422
    %v2623 = vpack.c.b16 %v2427, %v2423
    %v2624 = vpack.c.b16 %v2428, %v2424
    %v2625 = vpack.c.b16 %v2433, %v2429
    %v2626 = vpack.c.b16 %v2434, %v2430
    %v2627 = vpack.c.b16 %v2435, %v2431
    %v2628 = vpack.c.b16 %v2436, %v2432
    %v2629 = vpack.c.b16 %v2441, %v2437
    %v2630 = vpack.c.b16 %v2442, %v2438
    %v2631 = vpack.c.b16 %v2443, %v2439
    %v2632 = vpack.c.b16 %v2444, %v2440
    %v2633 = vpack.c.b16 %v2449, %v2445
    %v2634 = vpack.c.b16 %v2450, %v2446
    %v2635 = vpack.c.b16 %v2451, %v2447
    %v2636 = vpack.c.b16 %v2452, %v2448
    %v2637 = vpack.c.b16 %v2457, %v2453
    %v2638 = vpack.c.b16 %v2458, %v2454
    %v2639 = vpack.c.b16 %v2459, %v2455
    %v2640 = vpack.c.b16 %v2460, %v2456
    %v2641 = vpack.c.b16 %v2465, %v2461
    %v2642 = vpack.c.b16 %v2466, %v2462
    %v2643 = vpack.c.b16 %v2467, %v2463
    %v2644 = vpack.c.b16 %v2468, %v2464
    %v2645 = vpack.c.b16 %v2473, %v2469
    %v2646 = vpack.c.b16 %v2474, %v2470
    %v2647 = vpack.c.b16 %v2475, %v2471
    %v2648 = vpack.c.b16 %v2476, %v2472
    %v2649 = vpack.c.b16 %v2481, %v2477
    %v2650 = vpack.c.b16 %v2482, %v2478
    %v2651 = vpack.c.b16 %v2483, %v2479
    %v2652 = vpack.c.b16 %v2484, %v2480
    %v2653 = vpack.c.b16 %v2489, %v2485
    %v2654 = vpack.c.b16 %v2490, %v2486
    %v2655 = vpack.c.b16 %v2491, %v2487
    %v2656 = vpack.c.b16 %v2492, %v2488
    %v2657 = vpack.c.b16 %v2497, %v2493
    %v2658 = vpack.c.b16 %v2498, %v2494
    %v2659 = vpack.c.b16 %v2499, %v2495
    %v2660 = vpack.c.b16 %v2500, %v2496
    %v2661 = vpack.c.b16 %v2505, %v2501
    %v2662 = vpack.c.b16 %v2506, %v2502
    %v2663 = vpack.c.b16 %v2507, %v2503
    %v2664 = vpack.c.b16 %v2508, %v2504
    %v2665 = vpack.c.b16 %v2513, %v2509
    %v2666 = vpack.c.b16 %v2514, %v2510
    %v2667 = vpack.c.b16 %v2515, %v2511
    %v2668 = vpack.c.b16 %v2516, %v2512
    %v2669 = vpack.c.b16 %v2521, %v2517
    %v2670 = vpack.c.b16 %v2522, %v2518
    %v2671 = vpack.c.b16 %v2523, %v2519
    %v2672 = vpack.c.b16 %v2524, %v2520
    %v2673 = vpack.c.b16 %v2529, %v2525
    %v2674 = vpack.c.b16 %v2530, %v2526
    %v2675 = vpack.c.b16 %v2531, %v2527
    %v2676 = vpack.c.b16 %v2532, %v2528
    %v2677 = vpack.c.b16 %v2537, %v2533
    %v2678 = vpack.c.b16 %v2538, %v2534
    %v2679 = vpack.c.b16 %v2539, %v2535
    %v2680 = vpack.c.b16 %v2540, %v2536
    %v2681 = vpack.c.b16 %v2545, %v2541
    %v2682 = vpack.c.b16 %v2546, %v2542
    %v2683 = vpack.c.b16 %v2547, %v2543
    %v2684 = vpack.c.b16 %v2548, %v2544
    %v2685 = vpack.c.b16 %v2553, %v2549
    %v2686 = vpack.c.b16 %v2554, %v2550
    %v2687 = vpack.c.b16 %v2555, %v2551
    %v2688 = vpack.c.b16 %v2556, %v2552
    %v2689 = vpack.c.b16 %v2561, %v2557
    %v2690 = vpack.c.b16 %v2562, %v2558
    %v2691 = vpack.c.b16 %v2563, %v2559
    %v2692 = vpack.c.b16 %v2564, %v2560
    %2821 = vmatprep.subr.bf16.mxu0 %v2594
    %2822 = vmatpush1.bf16.msra.mxu0 %v2593
    %2823 = vmatprep.subr.bf16.mxu0 %v2590
    %2824 = vmatpush1.bf16.msra.mxu0 %v2589
    %2825 = vmatprep.subr.bf16.mxu0 %v2586
    %2826 = vmatpush1.bf16.msra.mxu0 %v2585
    %2827 = vmatprep.subr.bf16.mxu0 %v2582
    %2828 = vmatpush1.bf16.msra.mxu0 %v2581
    %2829 = vmatprep.subr.bf16.mxu0 %v2578
    %2830 = vmatpush1.bf16.msra.mxu0 %v2577
    %2831 = vmatprep.subr.bf16.mxu0 %v2574
    %2832 = vmatpush1.bf16.msra.mxu0 %v2573
    %2833 = vmatprep.subr.bf16.mxu0 %v2570
    %2834 = vmatpush1.bf16.msra.mxu0 %v2569
    %2835 = vmatprep.subr.bf16.mxu0 %v2566
    %2836 = vmatpush1.bf16.msra.mxu0 %v2565
    %2837 = vmatprep.subr.bf16.mxu0 %v2626
    %2838 = vmatpush2.bf16.msra.mxu0 %v2625
    %2839 = vmatprep.subr.bf16.mxu0 %v2622
    %2840 = vmatpush2.bf16.msra.mxu0 %v2621
    %2841 = vmatprep.subr.bf16.mxu0 %v2618
    %2842 = vmatpush2.bf16.msra.mxu0 %v2617
    %2843 = vmatprep.subr.bf16.mxu0 %v2614
    %2844 = vmatpush2.bf16.msra.mxu0 %v2613
    %2845 = vmatprep.subr.bf16.mxu0 %v2610
    %2846 = vmatpush2.bf16.msra.mxu0 %v2609
    %2847 = vmatprep.subr.bf16.mxu0 %v2606
    %2848 = vmatpush2.bf16.msra.mxu0 %v2605
    %2849 = vmatprep.subr.bf16.mxu0 %v2602
    %2850 = vmatpush2.bf16.msra.mxu0 %v2601
    %2851 = vmatprep.subr.bf16.mxu0 %v2598
    %2852 = vmatpush2.bf16.msra.mxu0 %v2597
    %2853 = vmatprep.mubr.bf16.mxu0 %v1968
    %2854 = vmatmul.mubr.bf16.gmra.mxu0 %v1967
    %v2855 = vpop.f32.mrf.mxu0
    %v2856 = vadd.f32 %v2164, %v2855
    %v2857 = vpop.f32.mrf.mxu0
    %v2858 = vadd.f32 %v2168, %v2857
    %v2859 = vpop.f32.mrf.mxu0
    %v2860 = vadd.f32 %v2164, %v2859
    %v2861 = vpop.f32.mrf.mxu0
    %v2862 = vadd.f32 %v2168, %v2861
    %2863 = vmatprep.mubr.bf16.mxu0 %v1972
    %2864 = vmatmul.mubr.bf16.gmra.mxu0 %v1971
    %v2865 = vpop.f32.mrf.mxu0
    %v2866 = vadd.f32 %v2164, %v2865
    %v2867 = vpop.f32.mrf.mxu0
    %v2868 = vadd.f32 %v2168, %v2867
    %v2869 = vpop.f32.mrf.mxu0
    %v2870 = vadd.f32 %v2164, %v2869
    %v2871 = vpop.f32.mrf.mxu0
    %v2872 = vadd.f32 %v2168, %v2871
    %2873 = vmatprep.mubr.bf16.mxu0 %v1976
    %2874 = vmatmul.mubr.bf16.gmra.mxu0 %v1975
    %v2875 = vpop.f32.mrf.mxu0
    %v2876 = vadd.f32 %v2164, %v2875
    %v2877 = vpop.f32.mrf.mxu0
    %v2878 = vadd.f32 %v2168, %v2877
    %v2879 = vpop.f32.mrf.mxu0
    %v2880 = vadd.f32 %v2164, %v2879
    %v2881 = vpop.f32.mrf.mxu0
    %v2882 = vadd.f32 %v2168, %v2881
    %2883 = vmatprep.mubr.bf16.mxu0 %v1980
    %2884 = vmatmul.mubr.bf16.gmra.mxu0 %v1979
    %v2885 = vpop.f32.mrf.mxu0
    %v2886 = vadd.f32 %v2164, %v2885
    %v2887 = vpop.f32.mrf.mxu0
    %v2888 = vadd.f32 %v2168, %v2887
    %v2889 = vpop.f32.mrf.mxu0
    %v2890 = vadd.f32 %v2164, %v2889
    %v2891 = vpop.f32.mrf.mxu0
    %v2892 = vadd.f32 %v2168, %v2891
    %2893 = vmatprep.mubr.bf16.mxu0 %v1984
    %2894 = vmatmul.mubr.bf16.gmra.mxu0 %v1983
    %v2895 = vpop.f32.mrf.mxu0
    %v2896 = vadd.f32 %v2164, %v2895
    %v2897 = vpop.f32.mrf.mxu0
    %v2898 = vadd.f32 %v2168, %v2897
    %v2899 = vpop.f32.mrf.mxu0
    %v2900 = vadd.f32 %v2164, %v2899
    %v2901 = vpop.f32.mrf.mxu0
    %v2902 = vadd.f32 %v2168, %v2901
    %2903 = vmatprep.mubr.bf16.mxu0 %v1988
    %2904 = vmatmul.mubr.bf16.gmra.mxu0 %v1987
    %v2905 = vpop.f32.mrf.mxu0
    %v2906 = vadd.f32 %v2164, %v2905
    %v2907 = vpop.f32.mrf.mxu0
    %v2908 = vadd.f32 %v2168, %v2907
    %v2909 = vpop.f32.mrf.mxu0
    %v2910 = vadd.f32 %v2164, %v2909
    %v2911 = vpop.f32.mrf.mxu0
    %v2912 = vadd.f32 %v2168, %v2911
    %2913 = vmatprep.mubr.bf16.mxu0 %v1992
    %2914 = vmatmul.mubr.bf16.gmra.mxu0 %v1991
    %v2915 = vpop.f32.mrf.mxu0
    %v2916 = vadd.f32 %v2164, %v2915
    %v2917 = vpop.f32.mrf.mxu0
    %v2918 = vadd.f32 %v2168, %v2917
    %v2919 = vpop.f32.mrf.mxu0
    %v2920 = vadd.f32 %v2164, %v2919
    %v2921 = vpop.f32.mrf.mxu0
    %v2922 = vadd.f32 %v2168, %v2921
    %2923 = vmatprep.mubr.bf16.mxu0 %v1996
    %2924 = vmatmul.mubr.bf16.gmra.mxu0 %v1995
    %v2925 = vpop.f32.mrf.mxu0
    %v2926 = vadd.f32 %v2164, %v2925
    %v2927 = vpop.f32.mrf.mxu0
    %v2928 = vadd.f32 %v2168, %v2927
    %v2929 = vpop.f32.mrf.mxu0
    %v2930 = vadd.f32 %v2164, %v2929
    %v2931 = vpop.f32.mrf.mxu0
    %v2932 = vadd.f32 %v2168, %v2931
    %2933 = vmatprep.mubr.bf16.mxu0 %v2000
    %2934 = vmatmul.mubr.bf16.gmra.mxu0 %v1999
    %v2935 = vpop.f32.mrf.mxu0
    %v2936 = vadd.f32 %v2164, %v2935
    %v2937 = vpop.f32.mrf.mxu0
    %v2938 = vadd.f32 %v2168, %v2937
    %v2939 = vpop.f32.mrf.mxu0
    %v2940 = vadd.f32 %v2164, %v2939
    %v2941 = vpop.f32.mrf.mxu0
    %v2942 = vadd.f32 %v2168, %v2941
    %2943 = vmatprep.mubr.bf16.mxu0 %v2004
    %2944 = vmatmul.mubr.bf16.gmra.mxu0 %v2003
    %v2945 = vpop.f32.mrf.mxu0
    %v2946 = vadd.f32 %v2164, %v2945
    %v2947 = vpop.f32.mrf.mxu0
    %v2948 = vadd.f32 %v2168, %v2947
    %v2949 = vpop.f32.mrf.mxu0
    %v2950 = vadd.f32 %v2164, %v2949
    %v2951 = vpop.f32.mrf.mxu0
    %v2952 = vadd.f32 %v2168, %v2951
    %2953 = vmatprep.mubr.bf16.mxu0 %v2008
    %2954 = vmatmul.mubr.bf16.gmra.mxu0 %v2007
    %v2955 = vpop.f32.mrf.mxu0
    %v2956 = vadd.f32 %v2164, %v2955
    %v2957 = vpop.f32.mrf.mxu0
    %v2958 = vadd.f32 %v2168, %v2957
    %v2959 = vpop.f32.mrf.mxu0
    %v2960 = vadd.f32 %v2164, %v2959
    %v2961 = vpop.f32.mrf.mxu0
    %v2962 = vadd.f32 %v2168, %v2961
    %2963 = vmatprep.mubr.bf16.mxu0 %v2012
    %2964 = vmatmul.mubr.bf16.gmra.mxu0 %v2011
    %v2965 = vpop.f32.mrf.mxu0
    %v2966 = vadd.f32 %v2164, %v2965
    %v2967 = vpop.f32.mrf.mxu0
    %v2968 = vadd.f32 %v2168, %v2967
    %v2969 = vpop.f32.mrf.mxu0
    %v2970 = vadd.f32 %v2164, %v2969
    %v2971 = vpop.f32.mrf.mxu0
    %v2972 = vadd.f32 %v2168, %v2971
    %2973 = vmatprep.mubr.bf16.mxu0 %v2016
    %2974 = vmatmul.mubr.bf16.gmra.mxu0 %v2015
    %v2975 = vpop.f32.mrf.mxu0
    %v2976 = vadd.f32 %v2164, %v2975
    %v2977 = vpop.f32.mrf.mxu0
    %v2978 = vadd.f32 %v2168, %v2977
    %v2979 = vpop.f32.mrf.mxu0
    %v2980 = vadd.f32 %v2164, %v2979
    %v2981 = vpop.f32.mrf.mxu0
    %v2982 = vadd.f32 %v2168, %v2981
    %2983 = vmatprep.mubr.bf16.mxu0 %v2020
    %2984 = vmatmul.mubr.bf16.gmra.mxu0 %v2019
    %v2985 = vpop.f32.mrf.mxu0
    %v2986 = vadd.f32 %v2164, %v2985
    %v2987 = vpop.f32.mrf.mxu0
    %v2988 = vadd.f32 %v2168, %v2987
    %v2989 = vpop.f32.mrf.mxu0
    %v2990 = vadd.f32 %v2164, %v2989
    %v2991 = vpop.f32.mrf.mxu0
    %v2992 = vadd.f32 %v2168, %v2991
    %2993 = vmatprep.mubr.bf16.mxu0 %v2024
    %2994 = vmatmul.mubr.bf16.gmra.mxu0 %v2023
    %v2995 = vpop.f32.mrf.mxu0
    %v2996 = vadd.f32 %v2164, %v2995
    %v2997 = vpop.f32.mrf.mxu0
    %v2998 = vadd.f32 %v2168, %v2997
    %v2999 = vpop.f32.mrf.mxu0
    %v3000 = vadd.f32 %v2164, %v2999
    %v3001 = vpop.f32.mrf.mxu0
    %v3002 = vadd.f32 %v2168, %v3001
    %3003 = vmatprep.mubr.bf16.mxu0 %v2028
    %3004 = vmatmul.mubr.bf16.gmra.mxu0 %v2027
    %v3005 = vpop.f32.mrf.mxu0
    %v3006 = vadd.f32 %v2164, %v3005
    %v3007 = vpop.f32.mrf.mxu0
    %v3008 = vadd.f32 %v2168, %v3007
    %v3009 = vpop.f32.mrf.mxu0
    %v3010 = vadd.f32 %v2164, %v3009
    %v3011 = vpop.f32.mrf.mxu0
    %v3012 = vadd.f32 %v2168, %v3011
    %3013 = vdwg.mxu0
    %3014 = vmatprep.subr.bf16.mxu0 %v2658
    %3015 = vmatpush1.bf16.msra.mxu0 %v2657
    %3016 = vmatprep.subr.bf16.mxu0 %v2654
    %3017 = vmatpush1.bf16.msra.mxu0 %v2653
    %3018 = vmatprep.subr.bf16.mxu0 %v2650
    %3019 = vmatpush1.bf16.msra.mxu0 %v2649
    %3020 = vmatprep.subr.bf16.mxu0 %v2646
    %3021 = vmatpush1.bf16.msra.mxu0 %v2645
    %3022 = vmatprep.subr.bf16.mxu0 %v2642
    %3023 = vmatpush1.bf16.msra.mxu0 %v2641
    %3024 = vmatprep.subr.bf16.mxu0 %v2638
    %3025 = vmatpush1.bf16.msra.mxu0 %v2637
    %3026 = vmatprep.subr.bf16.mxu0 %v2634
    %3027 = vmatpush1.bf16.msra.mxu0 %v2633
    %3028 = vmatprep.subr.bf16.mxu0 %v2630
    %3029 = vmatpush1.bf16.msra.mxu0 %v2629
    %3030 = vmatprep.subr.bf16.mxu0 %v2690
    %3031 = vmatpush2.bf16.msra.mxu0 %v2689
    %3032 = vmatprep.subr.bf16.mxu0 %v2686
    %3033 = vmatpush2.bf16.msra.mxu0 %v2685
    %3034 = vmatprep.subr.bf16.mxu0 %v2682
    %3035 = vmatpush2.bf16.msra.mxu0 %v2681
    %3036 = vmatprep.subr.bf16.mxu0 %v2678
    %3037 = vmatpush2.bf16.msra.mxu0 %v2677
    %3038 = vmatprep.subr.bf16.mxu0 %v2674
    %3039 = vmatpush2.bf16.msra.mxu0 %v2673
    %3040 = vmatprep.subr.bf16.mxu0 %v2670
    %3041 = vmatpush2.bf16.msra.mxu0 %v2669
    %3042 = vmatprep.subr.bf16.mxu0 %v2666
    %3043 = vmatpush2.bf16.msra.mxu0 %v2665
    %3044 = vmatprep.subr.bf16.mxu0 %v2662
    %3045 = vmatpush2.bf16.msra.mxu0 %v2661
    %3046 = vmatprep.mubr.bf16.mxu0 %v1970
    %3047 = vmatmul.mubr.bf16.gmra.mxu0 %v1969
    %v3048 = vpop.f32.mrf.mxu0
    %v3049 = vadd.f32 %v2856, %v3048
    %v3050 = vpop.f32.mrf.mxu0
    %v3051 = vadd.f32 %v2858, %v3050
    %v3052 = vpop.f32.mrf.mxu0
    %v3053 = vadd.f32 %v2860, %v3052
    %v3054 = vpop.f32.mrf.mxu0
    %v3055 = vadd.f32 %v2862, %v3054
    %3056 = vmatprep.mubr.bf16.mxu0 %v1974
    %3057 = vmatmul.mubr.bf16.gmra.mxu0 %v1973
    %v3058 = vpop.f32.mrf.mxu0
    %v3059 = vadd.f32 %v2866, %v3058
    %v3060 = vpop.f32.mrf.mxu0
    %v3061 = vadd.f32 %v2868, %v3060
    %v3062 = vpop.f32.mrf.mxu0
    %v3063 = vadd.f32 %v2870, %v3062
    %v3064 = vpop.f32.mrf.mxu0
    %v3065 = vadd.f32 %v2872, %v3064
    %3066 = vmatprep.mubr.bf16.mxu0 %v1978
    %3067 = vmatmul.mubr.bf16.gmra.mxu0 %v1977
    %v3068 = vpop.f32.mrf.mxu0
    %v3069 = vadd.f32 %v2876, %v3068
    %v3070 = vpop.f32.mrf.mxu0
    %v3071 = vadd.f32 %v2878, %v3070
    %v3072 = vpop.f32.mrf.mxu0
    %v3073 = vadd.f32 %v2880, %v3072
    %v3074 = vpop.f32.mrf.mxu0
    %v3075 = vadd.f32 %v2882, %v3074
    %3076 = vmatprep.mubr.bf16.mxu0 %v1982
    %3077 = vmatmul.mubr.bf16.gmra.mxu0 %v1981
    %v3078 = vpop.f32.mrf.mxu0
    %v3079 = vadd.f32 %v2886, %v3078
    %v3080 = vpop.f32.mrf.mxu0
    %v3081 = vadd.f32 %v2888, %v3080
    %v3082 = vpop.f32.mrf.mxu0
    %v3083 = vadd.f32 %v2890, %v3082
    %v3084 = vpop.f32.mrf.mxu0
    %v3085 = vadd.f32 %v2892, %v3084
    %3086 = vmatprep.mubr.bf16.mxu0 %v1986
    %3087 = vmatmul.mubr.bf16.gmra.mxu0 %v1985
    %v3088 = vpop.f32.mrf.mxu0
    %v3089 = vadd.f32 %v2896, %v3088
    %v3090 = vpop.f32.mrf.mxu0
    %v3091 = vadd.f32 %v2898, %v3090
    %v3092 = vpop.f32.mrf.mxu0
    %v3093 = vadd.f32 %v2900, %v3092
    %v3094 = vpop.f32.mrf.mxu0
    %v3095 = vadd.f32 %v2902, %v3094
    %3096 = vmatprep.mubr.bf16.mxu0 %v1990
    %3097 = vmatmul.mubr.bf16.gmra.mxu0 %v1989
    %v3098 = vpop.f32.mrf.mxu0
    %v3099 = vadd.f32 %v2906, %v3098
    %v3100 = vpop.f32.mrf.mxu0
    %v3101 = vadd.f32 %v2908, %v3100
    %v3102 = vpop.f32.mrf.mxu0
    %v3103 = vadd.f32 %v2910, %v3102
    %v3104 = vpop.f32.mrf.mxu0
    %v3105 = vadd.f32 %v2912, %v3104
    %3106 = vmatprep.mubr.bf16.mxu0 %v1994
    %3107 = vmatmul.mubr.bf16.gmra.mxu0 %v1993
    %v3108 = vpop.f32.mrf.mxu0
    %v3109 = vadd.f32 %v2916, %v3108
    %v3110 = vpop.f32.mrf.mxu0
    %v3111 = vadd.f32 %v2918, %v3110
    %v3112 = vpop.f32.mrf.mxu0
    %v3113 = vadd.f32 %v2920, %v3112
    %v3114 = vpop.f32.mrf.mxu0
    %v3115 = vadd.f32 %v2922, %v3114
    %3116 = vmatprep.mubr.bf16.mxu0 %v1998
    %3117 = vmatmul.mubr.bf16.gmra.mxu0 %v1997
    %v3118 = vpop.f32.mrf.mxu0
    %v3119 = vadd.f32 %v2926, %v3118
    %v3120 = vpop.f32.mrf.mxu0
    %v3121 = vadd.f32 %v2928, %v3120
    %v3122 = vpop.f32.mrf.mxu0
    %v3123 = vadd.f32 %v2930, %v3122
    %v3124 = vpop.f32.mrf.mxu0
    %v3125 = vadd.f32 %v2932, %v3124
    %3126 = vmatprep.mubr.bf16.mxu0 %v2002
    %3127 = vmatmul.mubr.bf16.gmra.mxu0 %v2001
    %v3128 = vpop.f32.mrf.mxu0
    %v3129 = vadd.f32 %v2936, %v3128
    %v3130 = vpop.f32.mrf.mxu0
    %v3131 = vadd.f32 %v2938, %v3130
    %v3132 = vpop.f32.mrf.mxu0
    %v3133 = vadd.f32 %v2940, %v3132
    %v3134 = vpop.f32.mrf.mxu0
    %v3135 = vadd.f32 %v2942, %v3134
    %3136 = vmatprep.mubr.bf16.mxu0 %v2006
    %3137 = vmatmul.mubr.bf16.gmra.mxu0 %v2005
    %v3138 = vpop.f32.mrf.mxu0
    %v3139 = vadd.f32 %v2946, %v3138
    %v3140 = vpop.f32.mrf.mxu0
    %v3141 = vadd.f32 %v2948, %v3140
    %v3142 = vpop.f32.mrf.mxu0
    %v3143 = vadd.f32 %v2950, %v3142
    %v3144 = vpop.f32.mrf.mxu0
    %v3145 = vadd.f32 %v2952, %v3144
    %3146 = vmatprep.mubr.bf16.mxu0 %v2010
    %3147 = vmatmul.mubr.bf16.gmra.mxu0 %v2009
    %v3148 = vpop.f32.mrf.mxu0
    %v3149 = vadd.f32 %v2956, %v3148
    %v3150 = vpop.f32.mrf.mxu0
    %v3151 = vadd.f32 %v2958, %v3150
    %v3152 = vpop.f32.mrf.mxu0
    %v3153 = vadd.f32 %v2960, %v3152
    %v3154 = vpop.f32.mrf.mxu0
    %v3155 = vadd.f32 %v2962, %v3154
    %3156 = vmatprep.mubr.bf16.mxu0 %v2014
    %3157 = vmatmul.mubr.bf16.gmra.mxu0 %v2013
    %v3158 = vpop.f32.mrf.mxu0
    %v3159 = vadd.f32 %v2966, %v3158
    %v3160 = vpop.f32.mrf.mxu0
    %v3161 = vadd.f32 %v2968, %v3160
    %v3162 = vpop.f32.mrf.mxu0
    %v3163 = vadd.f32 %v2970, %v3162
    %v3164 = vpop.f32.mrf.mxu0
    %v3165 = vadd.f32 %v2972, %v3164
    %3166 = vmatprep.mubr.bf16.mxu0 %v2018
    %3167 = vmatmul.mubr.bf16.gmra.mxu0 %v2017
    %v3168 = vpop.f32.mrf.mxu0
    %v3169 = vadd.f32 %v2976, %v3168
    %v3170 = vpop.f32.mrf.mxu0
    %v3171 = vadd.f32 %v2978, %v3170
    %v3172 = vpop.f32.mrf.mxu0
    %v3173 = vadd.f32 %v2980, %v3172
    %v3174 = vpop.f32.mrf.mxu0
    %v3175 = vadd.f32 %v2982, %v3174
    %3176 = vmatprep.mubr.bf16.mxu0 %v2022
    %3177 = vmatmul.mubr.bf16.gmra.mxu0 %v2021
    %v3178 = vpop.f32.mrf.mxu0
    %v3179 = vadd.f32 %v2986, %v3178
    %v3180 = vpop.f32.mrf.mxu0
    %v3181 = vadd.f32 %v2988, %v3180
    %v3182 = vpop.f32.mrf.mxu0
    %v3183 = vadd.f32 %v2990, %v3182
    %v3184 = vpop.f32.mrf.mxu0
    %v3185 = vadd.f32 %v2992, %v3184
    %3186 = vmatprep.mubr.bf16.mxu0 %v2026
    %3187 = vmatmul.mubr.bf16.gmra.mxu0 %v2025
    %v3188 = vpop.f32.mrf.mxu0
    %v3189 = vadd.f32 %v2996, %v3188
    %v3190 = vpop.f32.mrf.mxu0
    %v3191 = vadd.f32 %v2998, %v3190
    %v3192 = vpop.f32.mrf.mxu0
    %v3193 = vadd.f32 %v3000, %v3192
    %v3194 = vpop.f32.mrf.mxu0
    %v3195 = vadd.f32 %v3002, %v3194
    %3196 = vmatprep.mubr.bf16.mxu0 %v2030
    %3197 = vmatmul.mubr.bf16.gmra.mxu0 %v2029
    %v3198 = vpop.f32.mrf.mxu0
    %v3199 = vadd.f32 %v3006, %v3198
    %v3200 = vpop.f32.mrf.mxu0
    %v3201 = vadd.f32 %v3008, %v3200
    %v3202 = vpop.f32.mrf.mxu0
    %v3203 = vadd.f32 %v3010, %v3202
    %v3204 = vpop.f32.mrf.mxu0
    %v3205 = vadd.f32 %v3012, %v3204
    %3206 = vdwg.mxu0
    %3207 = vmatprep.subr.bf16.mxu0 %v2596
    %3208 = vmatpush1.bf16.msra.mxu0 %v2595
    %3209 = vmatprep.subr.bf16.mxu0 %v2592
    %3210 = vmatpush1.bf16.msra.mxu0 %v2591
    %3211 = vmatprep.subr.bf16.mxu0 %v2588
    %3212 = vmatpush1.bf16.msra.mxu0 %v2587
    %3213 = vmatprep.subr.bf16.mxu0 %v2584
    %3214 = vmatpush1.bf16.msra.mxu0 %v2583
    %3215 = vmatprep.subr.bf16.mxu0 %v2580
    %3216 = vmatpush1.bf16.msra.mxu0 %v2579
    %3217 = vmatprep.subr.bf16.mxu0 %v2576
    %3218 = vmatpush1.bf16.msra.mxu0 %v2575
    %3219 = vmatprep.subr.bf16.mxu0 %v2572
    %3220 = vmatpush1.bf16.msra.mxu0 %v2571
    %3221 = vmatprep.subr.bf16.mxu0 %v2568
    %3222 = vmatpush1.bf16.msra.mxu0 %v2567
    %3223 = vmatprep.subr.bf16.mxu0 %v2628
    %3224 = vmatpush2.bf16.msra.mxu0 %v2627
    %3225 = vmatprep.subr.bf16.mxu0 %v2624
    %3226 = vmatpush2.bf16.msra.mxu0 %v2623
    %3227 = vmatprep.subr.bf16.mxu0 %v2620
    %3228 = vmatpush2.bf16.msra.mxu0 %v2619
    %3229 = vmatprep.subr.bf16.mxu0 %v2616
    %3230 = vmatpush2.bf16.msra.mxu0 %v2615
    %3231 = vmatprep.subr.bf16.mxu0 %v2612
    %3232 = vmatpush2.bf16.msra.mxu0 %v2611
    %3233 = vmatprep.subr.bf16.mxu0 %v2608
    %3234 = vmatpush2.bf16.msra.mxu0 %v2607
    %3235 = vmatprep.subr.bf16.mxu0 %v2604
    %3236 = vmatpush2.bf16.msra.mxu0 %v2603
    %3237 = vmatprep.subr.bf16.mxu0 %v2600
    %3238 = vmatpush2.bf16.msra.mxu0 %v2599
    %3239 = vmatprep.mubr.bf16.mxu0 %v1968
    %3240 = vmatmul.mubr.bf16.gmra.mxu0 %v1967
    %v3241 = vpop.f32.mrf.mxu0
    %v3242 = vadd.f32 %v2172, %v3241
    %v3243 = vpop.f32.mrf.mxu0
    %v3244 = vadd.f32 %v2176, %v3243
    %v3245 = vpop.f32.mrf.mxu0
    %v3246 = vadd.f32 %v2172, %v3245
    %v3247 = vpop.f32.mrf.mxu0
    %v3248 = vadd.f32 %v2176, %v3247
    %3249 = vmatprep.mubr.bf16.mxu0 %v1972
    %3250 = vmatmul.mubr.bf16.gmra.mxu0 %v1971
    %v3251 = vpop.f32.mrf.mxu0
    %v3252 = vadd.f32 %v2172, %v3251
    %v3253 = vpop.f32.mrf.mxu0
    %v3254 = vadd.f32 %v2176, %v3253
    %v3255 = vpop.f32.mrf.mxu0
    %v3256 = vadd.f32 %v2172, %v3255
    %v3257 = vpop.f32.mrf.mxu0
    %v3258 = vadd.f32 %v2176, %v3257
    %3259 = vmatprep.mubr.bf16.mxu0 %v1976
    %3260 = vmatmul.mubr.bf16.gmra.mxu0 %v1975
    %v3261 = vpop.f32.mrf.mxu0
    %v3262 = vadd.f32 %v2172, %v3261
    %v3263 = vpop.f32.mrf.mxu0
    %v3264 = vadd.f32 %v2176, %v3263
    %v3265 = vpop.f32.mrf.mxu0
    %v3266 = vadd.f32 %v2172, %v3265
    %v3267 = vpop.f32.mrf.mxu0
    %v3268 = vadd.f32 %v2176, %v3267
    %3269 = vmatprep.mubr.bf16.mxu0 %v1980
    %3270 = vmatmul.mubr.bf16.gmra.mxu0 %v1979
    %v3271 = vpop.f32.mrf.mxu0
    %v3272 = vadd.f32 %v2172, %v3271
    %v3273 = vpop.f32.mrf.mxu0
    %v3274 = vadd.f32 %v2176, %v3273
    %v3275 = vpop.f32.mrf.mxu0
    %v3276 = vadd.f32 %v2172, %v3275
    %v3277 = vpop.f32.mrf.mxu0
    %v3278 = vadd.f32 %v2176, %v3277
    %3279 = vmatprep.mubr.bf16.mxu0 %v1984
    %3280 = vmatmul.mubr.bf16.gmra.mxu0 %v1983
    %v3281 = vpop.f32.mrf.mxu0
    %v3282 = vadd.f32 %v2172, %v3281
    %v3283 = vpop.f32.mrf.mxu0
    %v3284 = vadd.f32 %v2176, %v3283
    %v3285 = vpop.f32.mrf.mxu0
    %v3286 = vadd.f32 %v2172, %v3285
    %v3287 = vpop.f32.mrf.mxu0
    %v3288 = vadd.f32 %v2176, %v3287
    %3289 = vmatprep.mubr.bf16.mxu0 %v1988
    %3290 = vmatmul.mubr.bf16.gmra.mxu0 %v1987
    %v3291 = vpop.f32.mrf.mxu0
    %v3292 = vadd.f32 %v2172, %v3291
    %v3293 = vpop.f32.mrf.mxu0
    %v3294 = vadd.f32 %v2176, %v3293
    %v3295 = vpop.f32.mrf.mxu0
    %v3296 = vadd.f32 %v2172, %v3295
    %v3297 = vpop.f32.mrf.mxu0
    %v3298 = vadd.f32 %v2176, %v3297
    %3299 = vmatprep.mubr.bf16.mxu0 %v1992
    %3300 = vmatmul.mubr.bf16.gmra.mxu0 %v1991
    %v3301 = vpop.f32.mrf.mxu0
    %v3302 = vadd.f32 %v2172, %v3301
    %v3303 = vpop.f32.mrf.mxu0
    %v3304 = vadd.f32 %v2176, %v3303
    %v3305 = vpop.f32.mrf.mxu0
    %v3306 = vadd.f32 %v2172, %v3305
    %v3307 = vpop.f32.mrf.mxu0
    %v3308 = vadd.f32 %v2176, %v3307
    %3309 = vmatprep.mubr.bf16.mxu0 %v1996
    %3310 = vmatmul.mubr.bf16.gmra.mxu0 %v1995
    %v3311 = vpop.f32.mrf.mxu0
    %v3312 = vadd.f32 %v2172, %v3311
    %v3313 = vpop.f32.mrf.mxu0
    %v3314 = vadd.f32 %v2176, %v3313
    %v3315 = vpop.f32.mrf.mxu0
    %v3316 = vadd.f32 %v2172, %v3315
    %v3317 = vpop.f32.mrf.mxu0
    %v3318 = vadd.f32 %v2176, %v3317
    %3319 = vmatprep.mubr.bf16.mxu0 %v2000
    %3320 = vmatmul.mubr.bf16.gmra.mxu0 %v1999
    %v3321 = vpop.f32.mrf.mxu0
    %v3322 = vadd.f32 %v2172, %v3321
    %v3323 = vpop.f32.mrf.mxu0
    %v3324 = vadd.f32 %v2176, %v3323
    %v3325 = vpop.f32.mrf.mxu0
    %v3326 = vadd.f32 %v2172, %v3325
    %v3327 = vpop.f32.mrf.mxu0
    %v3328 = vadd.f32 %v2176, %v3327
    %3329 = vmatprep.mubr.bf16.mxu0 %v2004
    %3330 = vmatmul.mubr.bf16.gmra.mxu0 %v2003
    %v3331 = vpop.f32.mrf.mxu0
    %v3332 = vadd.f32 %v2172, %v3331
    %v3333 = vpop.f32.mrf.mxu0
    %v3334 = vadd.f32 %v2176, %v3333
    %v3335 = vpop.f32.mrf.mxu0
    %v3336 = vadd.f32 %v2172, %v3335
    %v3337 = vpop.f32.mrf.mxu0
    %v3338 = vadd.f32 %v2176, %v3337
    %3339 = vmatprep.mubr.bf16.mxu0 %v2008
    %3340 = vmatmul.mubr.bf16.gmra.mxu0 %v2007
    %v3341 = vpop.f32.mrf.mxu0
    %v3342 = vadd.f32 %v2172, %v3341
    %v3343 = vpop.f32.mrf.mxu0
    %v3344 = vadd.f32 %v2176, %v3343
    %v3345 = vpop.f32.mrf.mxu0
    %v3346 = vadd.f32 %v2172, %v3345
    %v3347 = vpop.f32.mrf.mxu0
    %v3348 = vadd.f32 %v2176, %v3347
    %3349 = vmatprep.mubr.bf16.mxu0 %v2012
    %3350 = vmatmul.mubr.bf16.gmra.mxu0 %v2011
    %v3351 = vpop.f32.mrf.mxu0
    %v3352 = vadd.f32 %v2172, %v3351
    %v3353 = vpop.f32.mrf.mxu0
    %v3354 = vadd.f32 %v2176, %v3353
    %v3355 = vpop.f32.mrf.mxu0
    %v3356 = vadd.f32 %v2172, %v3355
    %v3357 = vpop.f32.mrf.mxu0
    %v3358 = vadd.f32 %v2176, %v3357
    %3359 = vmatprep.mubr.bf16.mxu0 %v2016
    %3360 = vmatmul.mubr.bf16.gmra.mxu0 %v2015
    %v3361 = vpop.f32.mrf.mxu0
    %v3362 = vadd.f32 %v2172, %v3361
    %v3363 = vpop.f32.mrf.mxu0
    %v3364 = vadd.f32 %v2176, %v3363
    %v3365 = vpop.f32.mrf.mxu0
    %v3366 = vadd.f32 %v2172, %v3365
    %v3367 = vpop.f32.mrf.mxu0
    %v3368 = vadd.f32 %v2176, %v3367
    %3369 = vmatprep.mubr.bf16.mxu0 %v2020
    %3370 = vmatmul.mubr.bf16.gmra.mxu0 %v2019
    %v3371 = vpop.f32.mrf.mxu0
    %v3372 = vadd.f32 %v2172, %v3371
    %v3373 = vpop.f32.mrf.mxu0
    %v3374 = vadd.f32 %v2176, %v3373
    %v3375 = vpop.f32.mrf.mxu0
    %v3376 = vadd.f32 %v2172, %v3375
    %v3377 = vpop.f32.mrf.mxu0
    %v3378 = vadd.f32 %v2176, %v3377
    %3379 = vmatprep.mubr.bf16.mxu0 %v2024
    %3380 = vmatmul.mubr.bf16.gmra.mxu0 %v2023
    %v3381 = vpop.f32.mrf.mxu0
    %v3382 = vadd.f32 %v2172, %v3381
    %v3383 = vpop.f32.mrf.mxu0
    %v3384 = vadd.f32 %v2176, %v3383
    %v3385 = vpop.f32.mrf.mxu0
    %v3386 = vadd.f32 %v2172, %v3385
    %v3387 = vpop.f32.mrf.mxu0
    %v3388 = vadd.f32 %v2176, %v3387
    %3389 = vmatprep.mubr.bf16.mxu0 %v2028
    %3390 = vmatmul.mubr.bf16.gmra.mxu0 %v2027
    %v3391 = vpop.f32.mrf.mxu0
    %v3392 = vadd.f32 %v2172, %v3391
    %v3393 = vpop.f32.mrf.mxu0
    %v3394 = vadd.f32 %v2176, %v3393
    %v3395 = vpop.f32.mrf.mxu0
    %v3396 = vadd.f32 %v2172, %v3395
    %v3397 = vpop.f32.mrf.mxu0
    %v3398 = vadd.f32 %v2176, %v3397
    %3399 = vdwg.mxu0
    %3400 = vmatprep.subr.bf16.mxu0 %v2660
    %3401 = vmatpush1.bf16.msra.mxu0 %v2659
    %3402 = vmatprep.subr.bf16.mxu0 %v2656
    %3403 = vmatpush1.bf16.msra.mxu0 %v2655
    %3404 = vmatprep.subr.bf16.mxu0 %v2652
    %3405 = vmatpush1.bf16.msra.mxu0 %v2651
    %3406 = vmatprep.subr.bf16.mxu0 %v2648
    %3407 = vmatpush1.bf16.msra.mxu0 %v2647
    %3408 = vmatprep.subr.bf16.mxu0 %v2644
    %3409 = vmatpush1.bf16.msra.mxu0 %v2643
    %3410 = vmatprep.subr.bf16.mxu0 %v2640
    %3411 = vmatpush1.bf16.msra.mxu0 %v2639
    %3412 = vmatprep.subr.bf16.mxu0 %v2636
    %3413 = vmatpush1.bf16.msra.mxu0 %v2635
    %3414 = vmatprep.subr.bf16.mxu0 %v2632
    %3415 = vmatpush1.bf16.msra.mxu0 %v2631
    %3416 = vmatprep.subr.bf16.mxu0 %v2692
    %3417 = vmatpush2.bf16.msra.mxu0 %v2691
    %3418 = vmatprep.subr.bf16.mxu0 %v2688
    %3419 = vmatpush2.bf16.msra.mxu0 %v2687
    %3420 = vmatprep.subr.bf16.mxu0 %v2684
    %3421 = vmatpush2.bf16.msra.mxu0 %v2683
    %3422 = vmatprep.subr.bf16.mxu0 %v2680
    %3423 = vmatpush2.bf16.msra.mxu0 %v2679
    %3424 = vmatprep.subr.bf16.mxu0 %v2676
    %3425 = vmatpush2.bf16.msra.mxu0 %v2675
    %3426 = vmatprep.subr.bf16.mxu0 %v2672
    %3427 = vmatpush2.bf16.msra.mxu0 %v2671
    %3428 = vmatprep.subr.bf16.mxu0 %v2668
    %3429 = vmatpush2.bf16.msra.mxu0 %v2667
    %3430 = vmatprep.subr.bf16.mxu0 %v2664
    %3431 = vmatpush2.bf16.msra.mxu0 %v2663
    %3432 = vmatprep.mubr.bf16.mxu0 %v1970
    %3433 = vmatmul.mubr.bf16.gmra.mxu0 %v1969
    %v3434 = vpop.f32.mrf.mxu0
    %v3435 = vadd.f32 %v3242, %v3434
    %v3436 = vpop.f32.mrf.mxu0
    %v3437 = vadd.f32 %v3244, %v3436
    %v3438 = vpop.f32.mrf.mxu0
    %v3439 = vadd.f32 %v3246, %v3438
    %v3440 = vpop.f32.mrf.mxu0
    %v3441 = vadd.f32 %v3248, %v3440
    %3442 = vmatprep.mubr.bf16.mxu0 %v1974
    %3443 = vmatmul.mubr.bf16.gmra.mxu0 %v1973
    %v3444 = vpop.f32.mrf.mxu0
    %v3445 = vadd.f32 %v3252, %v3444
    %v3446 = vpop.f32.mrf.mxu0
    %v3447 = vadd.f32 %v3254, %v3446
    %v3448 = vpop.f32.mrf.mxu0
    %v3449 = vadd.f32 %v3256, %v3448
    %v3450 = vpop.f32.mrf.mxu0
    %v3451 = vadd.f32 %v3258, %v3450
    %3452 = vmatprep.mubr.bf16.mxu0 %v1978
    %3453 = vmatmul.mubr.bf16.gmra.mxu0 %v1977
    %v3454 = vpop.f32.mrf.mxu0
    %v3455 = vadd.f32 %v3262, %v3454
    %v3456 = vpop.f32.mrf.mxu0
    %v3457 = vadd.f32 %v3264, %v3456
    %v3458 = vpop.f32.mrf.mxu0
    %v3459 = vadd.f32 %v3266, %v3458
    %v3460 = vpop.f32.mrf.mxu0
    %v3461 = vadd.f32 %v3268, %v3460
    %3462 = vmatprep.mubr.bf16.mxu0 %v1982
    %3463 = vmatmul.mubr.bf16.gmra.mxu0 %v1981
    %v3464 = vpop.f32.mrf.mxu0
    %v3465 = vadd.f32 %v3272, %v3464
    %v3466 = vpop.f32.mrf.mxu0
    %v3467 = vadd.f32 %v3274, %v3466
    %v3468 = vpop.f32.mrf.mxu0
    %v3469 = vadd.f32 %v3276, %v3468
    %v3470 = vpop.f32.mrf.mxu0
    %v3471 = vadd.f32 %v3278, %v3470
    %3472 = vmatprep.mubr.bf16.mxu0 %v1986
    %3473 = vmatmul.mubr.bf16.gmra.mxu0 %v1985
    %v3474 = vpop.f32.mrf.mxu0
    %v3475 = vadd.f32 %v3282, %v3474
    %v3476 = vpop.f32.mrf.mxu0
    %v3477 = vadd.f32 %v3284, %v3476
    %v3478 = vpop.f32.mrf.mxu0
    %v3479 = vadd.f32 %v3286, %v3478
    %v3480 = vpop.f32.mrf.mxu0
    %v3481 = vadd.f32 %v3288, %v3480
    %3482 = vmatprep.mubr.bf16.mxu0 %v1990
    %3483 = vmatmul.mubr.bf16.gmra.mxu0 %v1989
    %v3484 = vpop.f32.mrf.mxu0
    %v3485 = vadd.f32 %v3292, %v3484
    %v3486 = vpop.f32.mrf.mxu0
    %v3487 = vadd.f32 %v3294, %v3486
    %v3488 = vpop.f32.mrf.mxu0
    %v3489 = vadd.f32 %v3296, %v3488
    %v3490 = vpop.f32.mrf.mxu0
    %v3491 = vadd.f32 %v3298, %v3490
    %3492 = vmatprep.mubr.bf16.mxu0 %v1994
    %3493 = vmatmul.mubr.bf16.gmra.mxu0 %v1993
    %v3494 = vpop.f32.mrf.mxu0
    %v3495 = vadd.f32 %v3302, %v3494
    %v3496 = vpop.f32.mrf.mxu0
    %v3497 = vadd.f32 %v3304, %v3496
    %v3498 = vpop.f32.mrf.mxu0
    %v3499 = vadd.f32 %v3306, %v3498
    %v3500 = vpop.f32.mrf.mxu0
    %v3501 = vadd.f32 %v3308, %v3500
    %3502 = vmatprep.mubr.bf16.mxu0 %v1998
    %3503 = vmatmul.mubr.bf16.gmra.mxu0 %v1997
    %v3504 = vpop.f32.mrf.mxu0
    %v3505 = vadd.f32 %v3312, %v3504
    %v3506 = vpop.f32.mrf.mxu0
    %v3507 = vadd.f32 %v3314, %v3506
    %v3508 = vpop.f32.mrf.mxu0
    %v3509 = vadd.f32 %v3316, %v3508
    %v3510 = vpop.f32.mrf.mxu0
    %v3511 = vadd.f32 %v3318, %v3510
    %3512 = vmatprep.mubr.bf16.mxu0 %v2002
    %3513 = vmatmul.mubr.bf16.gmra.mxu0 %v2001
    %v3514 = vpop.f32.mrf.mxu0
    %v3515 = vadd.f32 %v3322, %v3514
    %v3516 = vpop.f32.mrf.mxu0
    %v3517 = vadd.f32 %v3324, %v3516
    %v3518 = vpop.f32.mrf.mxu0
    %v3519 = vadd.f32 %v3326, %v3518
    %v3520 = vpop.f32.mrf.mxu0
    %v3521 = vadd.f32 %v3328, %v3520
    %3522 = vmatprep.mubr.bf16.mxu0 %v2006
    %3523 = vmatmul.mubr.bf16.gmra.mxu0 %v2005
    %v3524 = vpop.f32.mrf.mxu0
    %v3525 = vadd.f32 %v3332, %v3524
    %v3526 = vpop.f32.mrf.mxu0
    %v3527 = vadd.f32 %v3334, %v3526
    %v3528 = vpop.f32.mrf.mxu0
    %v3529 = vadd.f32 %v3336, %v3528
    %v3530 = vpop.f32.mrf.mxu0
    %v3531 = vadd.f32 %v3338, %v3530
    %3532 = vmatprep.mubr.bf16.mxu0 %v2010
    %3533 = vmatmul.mubr.bf16.gmra.mxu0 %v2009
    %v3534 = vpop.f32.mrf.mxu0
    %v3535 = vadd.f32 %v3342, %v3534
    %v3536 = vpop.f32.mrf.mxu0
    %v3537 = vadd.f32 %v3344, %v3536
    %v3538 = vpop.f32.mrf.mxu0
    %v3539 = vadd.f32 %v3346, %v3538
    %v3540 = vpop.f32.mrf.mxu0
    %v3541 = vadd.f32 %v3348, %v3540
    %3542 = vmatprep.mubr.bf16.mxu0 %v2014
    %3543 = vmatmul.mubr.bf16.gmra.mxu0 %v2013
    %v3544 = vpop.f32.mrf.mxu0
    %v3545 = vadd.f32 %v3352, %v3544
    %v3546 = vpop.f32.mrf.mxu0
    %v3547 = vadd.f32 %v3354, %v3546
    %v3548 = vpop.f32.mrf.mxu0
    %v3549 = vadd.f32 %v3356, %v3548
    %v3550 = vpop.f32.mrf.mxu0
    %v3551 = vadd.f32 %v3358, %v3550
    %3552 = vmatprep.mubr.bf16.mxu0 %v2018
    %3553 = vmatmul.mubr.bf16.gmra.mxu0 %v2017
    %v3554 = vpop.f32.mrf.mxu0
    %v3555 = vadd.f32 %v3362, %v3554
    %v3556 = vpop.f32.mrf.mxu0
    %v3557 = vadd.f32 %v3364, %v3556
    %v3558 = vpop.f32.mrf.mxu0
    %v3559 = vadd.f32 %v3366, %v3558
    %v3560 = vpop.f32.mrf.mxu0
    %v3561 = vadd.f32 %v3368, %v3560
    %3562 = vmatprep.mubr.bf16.mxu0 %v2022
    %3563 = vmatmul.mubr.bf16.gmra.mxu0 %v2021
    %v3564 = vpop.f32.mrf.mxu0
    %v3565 = vadd.f32 %v3372, %v3564
    %v3566 = vpop.f32.mrf.mxu0
    %v3567 = vadd.f32 %v3374, %v3566
    %v3568 = vpop.f32.mrf.mxu0
    %v3569 = vadd.f32 %v3376, %v3568
    %v3570 = vpop.f32.mrf.mxu0
    %v3571 = vadd.f32 %v3378, %v3570
    %3572 = vmatprep.mubr.bf16.mxu0 %v2026
    %3573 = vmatmul.mubr.bf16.gmra.mxu0 %v2025
    %v3574 = vpop.f32.mrf.mxu0
    %v3575 = vadd.f32 %v3382, %v3574
    %v3576 = vpop.f32.mrf.mxu0
    %v3577 = vadd.f32 %v3384, %v3576
    %v3578 = vpop.f32.mrf.mxu0
    %v3579 = vadd.f32 %v3386, %v3578
    %v3580 = vpop.f32.mrf.mxu0
    %v3581 = vadd.f32 %v3388, %v3580
    %3582 = vmatprep.mubr.bf16.mxu0 %v2030
    %3583 = vmatmul.mubr.bf16.gmra.mxu0 %v2029
    %v3584 = vpop.f32.mrf.mxu0
    %v3585 = vadd.f32 %v3392, %v3584
    %v3586 = vpop.f32.mrf.mxu0
    %v3587 = vadd.f32 %v3394, %v3586
    %v3588 = vpop.f32.mrf.mxu0
    %v3589 = vadd.f32 %v3396, %v3588
    %v3590 = vpop.f32.mrf.mxu0
    %v3591 = vadd.f32 %v3398, %v3590
    %3592 = vdwg.mxu0
    %v3593 = vmax.f32 %v3049, 0.0
    %v3594 = vmax.f32 %v3051, 0.0
    %v3595 = vmax.f32 %v3435, 0.0
    %v3596 = vmax.f32 %v3437, 0.0
    %v3597 = vmax.f32 %v3053, 0.0
    %v3598 = vmax.f32 %v3055, 0.0
    %v3599 = vmax.f32 %v3439, 0.0
    %v3600 = vmax.f32 %v3441, 0.0
    %v3601 = vmax.f32 %v3059, 0.0
    %v3602 = vmax.f32 %v3061, 0.0
    %v3603 = vmax.f32 %v3445, 0.0
    %v3604 = vmax.f32 %v3447, 0.0
    %v3605 = vmax.f32 %v3063, 0.0
    %v3606 = vmax.f32 %v3065, 0.0
    %v3607 = vmax.f32 %v3449, 0.0
    %v3608 = vmax.f32 %v3451, 0.0
    %v3609 = vmax.f32 %v3069, 0.0
    %v3610 = vmax.f32 %v3071, 0.0
    %v3611 = vmax.f32 %v3455, 0.0
    %v3612 = vmax.f32 %v3457, 0.0
    %v3613 = vmax.f32 %v3073, 0.0
    %v3614 = vmax.f32 %v3075, 0.0
    %v3615 = vmax.f32 %v3459, 0.0
    %v3616 = vmax.f32 %v3461, 0.0
    %v3617 = vmax.f32 %v3079, 0.0
    %v3618 = vmax.f32 %v3081, 0.0
    %v3619 = vmax.f32 %v3465, 0.0
    %v3620 = vmax.f32 %v3467, 0.0
    %v3621 = vmax.f32 %v3083, 0.0
    %v3622 = vmax.f32 %v3085, 0.0
    %v3623 = vmax.f32 %v3469, 0.0
    %v3624 = vmax.f32 %v3471, 0.0
    %v3625 = vmax.f32 %v3089, 0.0
    %v3626 = vmax.f32 %v3091, 0.0
    %v3627 = vmax.f32 %v3475, 0.0
    %v3628 = vmax.f32 %v3477, 0.0
    %v3629 = vmax.f32 %v3093, 0.0
    %v3630 = vmax.f32 %v3095, 0.0
    %v3631 = vmax.f32 %v3479, 0.0
    %v3632 = vmax.f32 %v3481, 0.0
    %v3633 = vmax.f32 %v3099, 0.0
    %v3634 = vmax.f32 %v3101, 0.0
    %v3635 = vmax.f32 %v3485, 0.0
    %v3636 = vmax.f32 %v3487, 0.0
    %v3637 = vmax.f32 %v3103, 0.0
    %v3638 = vmax.f32 %v3105, 0.0
    %v3639 = vmax.f32 %v3489, 0.0
    %v3640 = vmax.f32 %v3491, 0.0
    %v3641 = vmax.f32 %v3109, 0.0
    %v3642 = vmax.f32 %v3111, 0.0
    %v3643 = vmax.f32 %v3495, 0.0
    %v3644 = vmax.f32 %v3497, 0.0
    %v3645 = vmax.f32 %v3113, 0.0
    %v3646 = vmax.f32 %v3115, 0.0
    %v3647 = vmax.f32 %v3499, 0.0
    %v3648 = vmax.f32 %v3501, 0.0
    %v3649 = vmax.f32 %v3119, 0.0
    %v3650 = vmax.f32 %v3121, 0.0
    %v3651 = vmax.f32 %v3505, 0.0
    %v3652 = vmax.f32 %v3507, 0.0
    %v3653 = vmax.f32 %v3123, 0.0
    %v3654 = vmax.f32 %v3125, 0.0
    %v3655 = vmax.f32 %v3509, 0.0
    %v3656 = vmax.f32 %v3511, 0.0
    %v3657 = vmax.f32 %v3129, 0.0
    %v3658 = vmax.f32 %v3131, 0.0
    %v3659 = vmax.f32 %v3515, 0.0
    %v3660 = vmax.f32 %v3517, 0.0
    %v3661 = vmax.f32 %v3133, 0.0
    %v3662 = vmax.f32 %v3135, 0.0
    %v3663 = vmax.f32 %v3519, 0.0
    %v3664 = vmax.f32 %v3521, 0.0
    %v3665 = vmax.f32 %v3139, 0.0
    %v3666 = vmax.f32 %v3141, 0.0
    %v3667 = vmax.f32 %v3525, 0.0
    %v3668 = vmax.f32 %v3527, 0.0
    %v3669 = vmax.f32 %v3143, 0.0
    %v3670 = vmax.f32 %v3145, 0.0
    %v3671 = vmax.f32 %v3529, 0.0
    %v3672 = vmax.f32 %v3531, 0.0
    %v3673 = vmax.f32 %v3149, 0.0
    %v3674 = vmax.f32 %v3151, 0.0
    %v3675 = vmax.f32 %v3535, 0.0
    %v3676 = vmax.f32 %v3537, 0.0
    %v3677 = vmax.f32 %v3153, 0.0
    %v3678 = vmax.f32 %v3155, 0.0
    %v3679 = vmax.f32 %v3539, 0.0
    %v3680 = vmax.f32 %v3541, 0.0
    %v3681 = vmax.f32 %v3159, 0.0
    %v3682 = vmax.f32 %v3161, 0.0
    %v3683 = vmax.f32 %v3545, 0.0
    %v3684 = vmax.f32 %v3547, 0.0
    %v3685 = vmax.f32 %v3163, 0.0
    %v3686 = vmax.f32 %v3165, 0.0
    %v3687 = vmax.f32 %v3549, 0.0
    %v3688 = vmax.f32 %v3551, 0.0
    %v3689 = vmax.f32 %v3169, 0.0
    %v3690 = vmax.f32 %v3171, 0.0
    %v3691 = vmax.f32 %v3555, 0.0
    %v3692 = vmax.f32 %v3557, 0.0
    %v3693 = vmax.f32 %v3173, 0.0
    %v3694 = vmax.f32 %v3175, 0.0
    %v3695 = vmax.f32 %v3559, 0.0
    %v3696 = vmax.f32 %v3561, 0.0
    %v3697 = vmax.f32 %v3179, 0.0
    %v3698 = vmax.f32 %v3181, 0.0
    %v3699 = vmax.f32 %v3565, 0.0
    %v3700 = vmax.f32 %v3567, 0.0
    %v3701 = vmax.f32 %v3183, 0.0
    %v3702 = vmax.f32 %v3185, 0.0
    %v3703 = vmax.f32 %v3569, 0.0
    %v3704 = vmax.f32 %v3571, 0.0
    %v3705 = vmax.f32 %v3189, 0.0
    %v3706 = vmax.f32 %v3191, 0.0
    %v3707 = vmax.f32 %v3575, 0.0
    %v3708 = vmax.f32 %v3577, 0.0
    %v3709 = vmax.f32 %v3193, 0.0
    %v3710 = vmax.f32 %v3195, 0.0
    %v3711 = vmax.f32 %v3579, 0.0
    %v3712 = vmax.f32 %v3581, 0.0
    %v3713 = vmax.f32 %v3199, 0.0
    %v3714 = vmax.f32 %v3201, 0.0
    %v3715 = vmax.f32 %v3585, 0.0
    %v3716 = vmax.f32 %v3587, 0.0
    %v3717 = vmax.f32 %v3203, 0.0
    %v3718 = vmax.f32 %v3205, 0.0
    %v3719 = vmax.f32 %v3589, 0.0
    %v3720 = vmax.f32 %v3591, 0.0
    %v3721 = vadd.f32 %v3593, %v3597
    %v3722 = vadd.f32 %v3721, %v3601
    %v3723 = vadd.f32 %v3722, %v3605
    %v3724 = vrot.slane %v3723, 4
    %v3725 = vadd.f32 %v3723, %v3724
    %v3726 = vrot.slane %v3725, 2
    %v3727 = vadd.f32 %v3725, %v3726
    %v3728 = vrot.slane %v3727, 1
    %v3729 = vadd.f32 %v3727, %v3728
    %v3730 = vadd.f32 %v3594, %v3598
    %v3731 = vadd.f32 %v3730, %v3602
    %v3732 = vadd.f32 %v3731, %v3606
    %v3733 = vrot.slane %v3732, 4
    %v3734 = vadd.f32 %v3732, %v3733
    %v3735 = vrot.slane %v3734, 2
    %v3736 = vadd.f32 %v3734, %v3735
    %v3737 = vrot.slane %v3736, 1
    %v3738 = vadd.f32 %v3736, %v3737
    %v3739 = vadd.f32 %v3595, %v3599
    %v3740 = vadd.f32 %v3739, %v3603
    %v3741 = vadd.f32 %v3740, %v3607
    %v3742 = vrot.slane %v3741, 4
    %v3743 = vadd.f32 %v3741, %v3742
    %v3744 = vrot.slane %v3743, 2
    %v3745 = vadd.f32 %v3743, %v3744
    %v3746 = vrot.slane %v3745, 1
    %v3747 = vadd.f32 %v3745, %v3746
    %v3748 = vadd.f32 %v3596, %v3600
    %v3749 = vadd.f32 %v3748, %v3604
    %v3750 = vadd.f32 %v3749, %v3608
    %v3751 = vrot.slane %v3750, 4
    %v3752 = vadd.f32 %v3750, %v3751
    %v3753 = vrot.slane %v3752, 2
    %v3754 = vadd.f32 %v3752, %v3753
    %v3755 = vrot.slane %v3754, 1
    %v3756 = vadd.f32 %v3754, %v3755
    %v3757 = vadd.f32 %v3609, %v3613
    %v3758 = vadd.f32 %v3757, %v3617
    %v3759 = vadd.f32 %v3758, %v3621
    %v3760 = vrot.slane %v3759, 4
    %v3761 = vadd.f32 %v3759, %v3760
    %v3762 = vrot.slane %v3761, 2
    %v3763 = vadd.f32 %v3761, %v3762
    %v3764 = vrot.slane %v3763, 1
    %v3765 = vadd.f32 %v3763, %v3764
    %v3766 = vadd.f32 %v3610, %v3614
    %v3767 = vadd.f32 %v3766, %v3618
    %v3768 = vadd.f32 %v3767, %v3622
    %v3769 = vrot.slane %v3768, 4
    %v3770 = vadd.f32 %v3768, %v3769
    %v3771 = vrot.slane %v3770, 2
    %v3772 = vadd.f32 %v3770, %v3771
    %v3773 = vrot.slane %v3772, 1
    %v3774 = vadd.f32 %v3772, %v3773
    %v3775 = vadd.f32 %v3611, %v3615
    %v3776 = vadd.f32 %v3775, %v3619
    %v3777 = vadd.f32 %v3776, %v3623
    %v3778 = vrot.slane %v3777, 4
    %v3779 = vadd.f32 %v3777, %v3778
    %v3780 = vrot.slane %v3779, 2
    %v3781 = vadd.f32 %v3779, %v3780
    %v3782 = vrot.slane %v3781, 1
    %v3783 = vadd.f32 %v3781, %v3782
    %v3784 = vadd.f32 %v3612, %v3616
    %v3785 = vadd.f32 %v3784, %v3620
    %v3786 = vadd.f32 %v3785, %v3624
    %v3787 = vrot.slane %v3786, 4
    %v3788 = vadd.f32 %v3786, %v3787
    %v3789 = vrot.slane %v3788, 2
    %v3790 = vadd.f32 %v3788, %v3789
    %v3791 = vrot.slane %v3790, 1
    %v3792 = vadd.f32 %v3790, %v3791
    %v3793 = vadd.f32 %v3625, %v3629
    %v3794 = vadd.f32 %v3793, %v3633
    %v3795 = vadd.f32 %v3794, %v3637
    %v3796 = vrot.slane %v3795, 4
    %v3797 = vadd.f32 %v3795, %v3796
    %v3798 = vrot.slane %v3797, 2
    %v3799 = vadd.f32 %v3797, %v3798
    %v3800 = vrot.slane %v3799, 1
    %v3801 = vadd.f32 %v3799, %v3800
    %v3802 = vadd.f32 %v3626, %v3630
    %v3803 = vadd.f32 %v3802, %v3634
    %v3804 = vadd.f32 %v3803, %v3638
    %v3805 = vrot.slane %v3804, 4
    %v3806 = vadd.f32 %v3804, %v3805
    %v3807 = vrot.slane %v3806, 2
    %v3808 = vadd.f32 %v3806, %v3807
    %v3809 = vrot.slane %v3808, 1
    %v3810 = vadd.f32 %v3808, %v3809
    %v3811 = vadd.f32 %v3627, %v3631
    %v3812 = vadd.f32 %v3811, %v3635
    %v3813 = vadd.f32 %v3812, %v3639
    %v3814 = vrot.slane %v3813, 4
    %v3815 = vadd.f32 %v3813, %v3814
    %v3816 = vrot.slane %v3815, 2
    %v3817 = vadd.f32 %v3815, %v3816
    %v3818 = vrot.slane %v3817, 1
    %v3819 = vadd.f32 %v3817, %v3818
    %v3820 = vadd.f32 %v3628, %v3632
    %v3821 = vadd.f32 %v3820, %v3636
    %v3822 = vadd.f32 %v3821, %v3640
    %v3823 = vrot.slane %v3822, 4
    %v3824 = vadd.f32 %v3822, %v3823
    %v3825 = vrot.slane %v3824, 2
    %v3826 = vadd.f32 %v3824, %v3825
    %v3827 = vrot.slane %v3826, 1
    %v3828 = vadd.f32 %v3826, %v3827
    %v3829 = vadd.f32 %v3641, %v3645
    %v3830 = vadd.f32 %v3829, %v3649
    %v3831 = vadd.f32 %v3830, %v3653
    %v3832 = vrot.slane %v3831, 4
    %v3833 = vadd.f32 %v3831, %v3832
    %v3834 = vrot.slane %v3833, 2
    %v3835 = vadd.f32 %v3833, %v3834
    %v3836 = vrot.slane %v3835, 1
    %v3837 = vadd.f32 %v3835, %v3836
    %v3838 = vadd.f32 %v3642, %v3646
    %v3839 = vadd.f32 %v3838, %v3650
    %v3840 = vadd.f32 %v3839, %v3654
    %v3841 = vrot.slane %v3840, 4
    %v3842 = vadd.f32 %v3840, %v3841
    %v3843 = vrot.slane %v3842, 2
    %v3844 = vadd.f32 %v3842, %v3843
    %v3845 = vrot.slane %v3844, 1
    %v3846 = vadd.f32 %v3844, %v3845
    %v3847 = vadd.f32 %v3643, %v3647
    %v3848 = vadd.f32 %v3847, %v3651
    %v3849 = vadd.f32 %v3848, %v3655
    %v3850 = vrot.slane %v3849, 4
    %v3851 = vadd.f32 %v3849, %v3850
    %v3852 = vrot.slane %v3851, 2
    %v3853 = vadd.f32 %v3851, %v3852
    %v3854 = vrot.slane %v3853, 1
    %v3855 = vadd.f32 %v3853, %v3854
    %v3856 = vadd.f32 %v3644, %v3648
    %v3857 = vadd.f32 %v3856, %v3652
    %v3858 = vadd.f32 %v3857, %v3656
    %v3859 = vrot.slane %v3858, 4
    %v3860 = vadd.f32 %v3858, %v3859
    %v3861 = vrot.slane %v3860, 2
    %v3862 = vadd.f32 %v3860, %v3861
    %v3863 = vrot.slane %v3862, 1
    %v3864 = vadd.f32 %v3862, %v3863
    %v3865 = vadd.f32 %v3657, %v3661
    %v3866 = vadd.f32 %v3865, %v3665
    %v3867 = vadd.f32 %v3866, %v3669
    %v3868 = vrot.slane %v3867, 4
    %v3869 = vadd.f32 %v3867, %v3868
    %v3870 = vrot.slane %v3869, 2
    %v3871 = vadd.f32 %v3869, %v3870
    %v3872 = vrot.slane %v3871, 1
    %v3873 = vadd.f32 %v3871, %v3872
    %v3874 = vadd.f32 %v3658, %v3662
    %v3875 = vadd.f32 %v3874, %v3666
    %v3876 = vadd.f32 %v3875, %v3670
    %v3877 = vrot.slane %v3876, 4
    %v3878 = vadd.f32 %v3876, %v3877
    %v3879 = vrot.slane %v3878, 2
    %v3880 = vadd.f32 %v3878, %v3879
    %v3881 = vrot.slane %v3880, 1
    %v3882 = vadd.f32 %v3880, %v3881
    %v3883 = vadd.f32 %v3659, %v3663
    %v3884 = vadd.f32 %v3883, %v3667
    %v3885 = vadd.f32 %v3884, %v3671
    %v3886 = vrot.slane %v3885, 4
    %v3887 = vadd.f32 %v3885, %v3886
    %v3888 = vrot.slane %v3887, 2
    %v3889 = vadd.f32 %v3887, %v3888
    %v3890 = vrot.slane %v3889, 1
    %v3891 = vadd.f32 %v3889, %v3890
    %v3892 = vadd.f32 %v3660, %v3664
    %v3893 = vadd.f32 %v3892, %v3668
    %v3894 = vadd.f32 %v3893, %v3672
    %v3895 = vrot.slane %v3894, 4
    %v3896 = vadd.f32 %v3894, %v3895
    %v3897 = vrot.slane %v3896, 2
    %v3898 = vadd.f32 %v3896, %v3897
    %v3899 = vrot.slane %v3898, 1
    %v3900 = vadd.f32 %v3898, %v3899
    %v3901 = vadd.f32 %v3673, %v3677
    %v3902 = vadd.f32 %v3901, %v3681
    %v3903 = vadd.f32 %v3902, %v3685
    %v3904 = vrot.slane %v3903, 4
    %v3905 = vadd.f32 %v3903, %v3904
    %v3906 = vrot.slane %v3905, 2
    %v3907 = vadd.f32 %v3905, %v3906
    %v3908 = vrot.slane %v3907, 1
    %v3909 = vadd.f32 %v3907, %v3908
    %v3910 = vadd.f32 %v3674, %v3678
    %v3911 = vadd.f32 %v3910, %v3682
    %v3912 = vadd.f32 %v3911, %v3686
    %v3913 = vrot.slane %v3912, 4
    %v3914 = vadd.f32 %v3912, %v3913
    %v3915 = vrot.slane %v3914, 2
    %v3916 = vadd.f32 %v3914, %v3915
    %v3917 = vrot.slane %v3916, 1
    %v3918 = vadd.f32 %v3916, %v3917
    %v3919 = vadd.f32 %v3675, %v3679
    %v3920 = vadd.f32 %v3919, %v3683
    %v3921 = vadd.f32 %v3920, %v3687
    %v3922 = vrot.slane %v3921, 4
    %v3923 = vadd.f32 %v3921, %v3922
    %v3924 = vrot.slane %v3923, 2
    %v3925 = vadd.f32 %v3923, %v3924
    %v3926 = vrot.slane %v3925, 1
    %v3927 = vadd.f32 %v3925, %v3926
    %v3928 = vadd.f32 %v3676, %v3680
    %v3929 = vadd.f32 %v3928, %v3684
    %v3930 = vadd.f32 %v3929, %v3688
    %v3931 = vrot.slane %v3930, 4
    %v3932 = vadd.f32 %v3930, %v3931
    %v3933 = vrot.slane %v3932, 2
    %v3934 = vadd.f32 %v3932, %v3933
    %v3935 = vrot.slane %v3934, 1
    %v3936 = vadd.f32 %v3934, %v3935
    %v3937 = vadd.f32 %v3689, %v3693
    %v3938 = vadd.f32 %v3937, %v3697
    %v3939 = vadd.f32 %v3938, %v3701
    %v3940 = vrot.slane %v3939, 4
    %v3941 = vadd.f32 %v3939, %v3940
    %v3942 = vrot.slane %v3941, 2
    %v3943 = vadd.f32 %v3941, %v3942
    %v3944 = vrot.slane %v3943, 1
    %v3945 = vadd.f32 %v3943, %v3944
    %v3946 = vadd.f32 %v3690, %v3694
    %v3947 = vadd.f32 %v3946, %v3698
    %v3948 = vadd.f32 %v3947, %v3702
    %v3949 = vrot.slane %v3948, 4
    %v3950 = vadd.f32 %v3948, %v3949
    %v3951 = vrot.slane %v3950, 2
    %v3952 = vadd.f32 %v3950, %v3951
    %v3953 = vrot.slane %v3952, 1
    %v3954 = vadd.f32 %v3952, %v3953
    %v3955 = vadd.f32 %v3691, %v3695
    %v3956 = vadd.f32 %v3955, %v3699
    %v3957 = vadd.f32 %v3956, %v3703
    %v3958 = vrot.slane %v3957, 4
    %v3959 = vadd.f32 %v3957, %v3958
    %v3960 = vrot.slane %v3959, 2
    %v3961 = vadd.f32 %v3959, %v3960
    %v3962 = vrot.slane %v3961, 1
    %v3963 = vadd.f32 %v3961, %v3962
    %v3964 = vadd.f32 %v3692, %v3696
    %v3965 = vadd.f32 %v3964, %v3700
    %v3966 = vadd.f32 %v3965, %v3704
    %v3967 = vrot.slane %v3966, 4
    %v3968 = vadd.f32 %v3966, %v3967
    %v3969 = vrot.slane %v3968, 2
    %v3970 = vadd.f32 %v3968, %v3969
    %v3971 = vrot.slane %v3970, 1
    %v3972 = vadd.f32 %v3970, %v3971
    %v3973 = vadd.f32 %v3705, %v3709
    %v3974 = vadd.f32 %v3973, %v3713
    %v3975 = vadd.f32 %v3974, %v3717
    %v3976 = vrot.slane %v3975, 4
    %v3977 = vadd.f32 %v3975, %v3976
    %v3978 = vrot.slane %v3977, 2
    %v3979 = vadd.f32 %v3977, %v3978
    %v3980 = vrot.slane %v3979, 1
    %v3981 = vadd.f32 %v3979, %v3980
    %v3982 = vadd.f32 %v3706, %v3710
    %v3983 = vadd.f32 %v3982, %v3714
    %v3984 = vadd.f32 %v3983, %v3718
    %v3985 = vrot.slane %v3984, 4
    %v3986 = vadd.f32 %v3984, %v3985
    %v3987 = vrot.slane %v3986, 2
    %v3988 = vadd.f32 %v3986, %v3987
    %v3989 = vrot.slane %v3988, 1
    %v3990 = vadd.f32 %v3988, %v3989
    %v3991 = vadd.f32 %v3707, %v3711
    %v3992 = vadd.f32 %v3991, %v3715
    %v3993 = vadd.f32 %v3992, %v3719
    %v3994 = vrot.slane %v3993, 4
    %v3995 = vadd.f32 %v3993, %v3994
    %v3996 = vrot.slane %v3995, 2
    %v3997 = vadd.f32 %v3995, %v3996
    %v3998 = vrot.slane %v3997, 1
    %v3999 = vadd.f32 %v3997, %v3998
    %v4000 = vadd.f32 %v3708, %v3712
    %v4001 = vadd.f32 %v4000, %v3716
    %v4002 = vadd.f32 %v4001, %v3720
    %v4003 = vrot.slane %v4002, 4
    %v4004 = vadd.f32 %v4002, %v4003
    %v4005 = vrot.slane %v4004, 2
    %v4006 = vadd.f32 %v4004, %v4005
    %v4007 = vrot.slane %v4006, 1
    %v4008 = vadd.f32 %v4006, %v4007
    %v4009 = vrcp.pop 32.0
    %v4010 = vmul.f32 %v3729, %v4009
    %v4011 = vmul.f32 %v3738, %v4009
    %v4012 = vmul.f32 %v3747, %v4009
    %v4013 = vmul.f32 %v3756, %v4009
    %v4014 = vmul.f32 %v3765, %v4009
    %v4015 = vmul.f32 %v3774, %v4009
    %v4016 = vmul.f32 %v3783, %v4009
    %v4017 = vmul.f32 %v3792, %v4009
    %v4018 = vmul.f32 %v3801, %v4009
    %v4019 = vmul.f32 %v3810, %v4009
    %v4020 = vmul.f32 %v3819, %v4009
    %v4021 = vmul.f32 %v3828, %v4009
    %v4022 = vmul.f32 %v3837, %v4009
    %v4023 = vmul.f32 %v3846, %v4009
    %v4024 = vmul.f32 %v3855, %v4009
    %v4025 = vmul.f32 %v3864, %v4009
    %v4026 = vmul.f32 %v3873, %v4009
    %v4027 = vmul.f32 %v3882, %v4009
    %v4028 = vmul.f32 %v3891, %v4009
    %v4029 = vmul.f32 %v3900, %v4009
    %v4030 = vmul.f32 %v3909, %v4009
    %v4031 = vmul.f32 %v3918, %v4009
    %v4032 = vmul.f32 %v3927, %v4009
    %v4033 = vmul.f32 %v3936, %v4009
    %v4034 = vmul.f32 %v3945, %v4009
    %v4035 = vmul.f32 %v3954, %v4009
    %v4036 = vmul.f32 %v3963, %v4009
    %v4037 = vmul.f32 %v3972, %v4009
    %v4038 = vmul.f32 %v3981, %v4009
    %v4039 = vmul.f32 %v3990, %v4009
    %v4040 = vmul.f32 %v3999, %v4009
    %v4041 = vmul.f32 %v4008, %v4009
    %v4042 = vpack.c.bf16 %v4010, %v4010
    %v4043 = vpack.c.bf16 %v4011, %v4011
    %v4044 = vpack.c.bf16 %v4012, %v4012
    %v4045 = vpack.c.bf16 %v4013, %v4013
    %v4046 = vpack.c.bf16 %v4014, %v4014
    %v4047 = vpack.c.bf16 %v4015, %v4015
    %v4048 = vpack.c.bf16 %v4016, %v4016
    %v4049 = vpack.c.bf16 %v4017, %v4017
    %v4050 = vpack.c.bf16 %v4018, %v4018
    %v4051 = vpack.c.bf16 %v4019, %v4019
    %v4052 = vpack.c.bf16 %v4020, %v4020
    %v4053 = vpack.c.bf16 %v4021, %v4021
    %v4054 = vpack.c.bf16 %v4022, %v4022
    %v4055 = vpack.c.bf16 %v4023, %v4023
    %v4056 = vpack.c.bf16 %v4024, %v4024
    %v4057 = vpack.c.bf16 %v4025, %v4025
    %v4058 = vpack.c.bf16 %v4026, %v4026
    %v4059 = vpack.c.bf16 %v4027, %v4027
    %v4060 = vpack.c.bf16 %v4028, %v4028
    %v4061 = vpack.c.bf16 %v4029, %v4029
    %v4062 = vpack.c.bf16 %v4030, %v4030
    %v4063 = vpack.c.bf16 %v4031, %v4031
    %v4064 = vpack.c.bf16 %v4032, %v4032
    %v4065 = vpack.c.bf16 %v4033, %v4033
    %v4066 = vpack.c.bf16 %v4034, %v4034
    %v4067 = vpack.c.bf16 %v4035, %v4035
    %v4068 = vpack.c.bf16 %v4036, %v4036
    %v4069 = vpack.c.bf16 %v4037, %v4037
    %v4070 = vpack.c.bf16 %v4038, %v4038
    %v4071 = vpack.c.bf16 %v4039, %v4039
    %v4072 = vpack.c.bf16 %v4040, %v4040
    %v4073 = vpack.c.bf16 %v4041, %v4041
    %v4074 = vld [vmem:[#allocation7] sm:$0xff]
    %v4075 = vld [vmem:[#allocation7 + $0x8] sm:$0xff]
    %v4076 = vld [vmem:[#allocation7 + $0x10] sm:$0xff]
    %v4077 = vld [vmem:[#allocation7 + $0x18] sm:$0xff]
    %v4078 = vld [vmem:[#allocation7 + $0x20] sm:$0xff]
    %v4079 = vld [vmem:[#allocation7 + $0x28] sm:$0xff]
    %v4080 = vld [vmem:[#allocation7 + $0x30] sm:$0xff]
    %v4081 = vld [vmem:[#allocation7 + $0x38] sm:$0xff]
    %v4082 = vld [vmem:[#allocation7 + $0x40] sm:$0xff]
    %v4083 = vld [vmem:[#allocation7 + $0x48] sm:$0xff]
    %v4084 = vld [vmem:[#allocation7 + $0x50] sm:$0xff]
    %v4085 = vld [vmem:[#allocation7 + $0x58] sm:$0xff]
    %v4086 = vld [vmem:[#allocation7 + $0x60] sm:$0xff]
    %v4087 = vld [vmem:[#allocation7 + $0x68] sm:$0xff]
    %v4088 = vld [vmem:[#allocation7 + $0x70] sm:$0xff]
    %v4089 = vld [vmem:[#allocation7 + $0x78] sm:$0xff]
    %v4090 = vld [vmem:[#allocation7 + $0x80] sm:$0xff]
    %v4091 = vld [vmem:[#allocation7 + $0x88] sm:$0xff]
    %v4092 = vld [vmem:[#allocation7 + $0x90] sm:$0xff]
    %v4093 = vld [vmem:[#allocation7 + $0x98] sm:$0xff]
    %v4094 = vld [vmem:[#allocation7 + $0xa0] sm:$0xff]
    %v4095 = vld [vmem:[#allocation7 + $0xa8] sm:$0xff]
    %v4096 = vld [vmem:[#allocation7 + $0xb0] sm:$0xff]
    %v4097 = vld [vmem:[#allocation7 + $0xb8] sm:$0xff]
    %v4098 = vld [vmem:[#allocation7 + $0xc0] sm:$0xff]
    %v4099 = vld [vmem:[#allocation7 + $0xc8] sm:$0xff]
    %v4100 = vld [vmem:[#allocation7 + $0xd0] sm:$0xff]
    %v4101 = vld [vmem:[#allocation7 + $0xd8] sm:$0xff]
    %v4102 = vld [vmem:[#allocation7 + $0xe0] sm:$0xff]
    %v4103 = vld [vmem:[#allocation7 + $0xe8] sm:$0xff]
    %v4104 = vld [vmem:[#allocation7 + $0xf0] sm:$0xff]
    %v4105 = vld [vmem:[#allocation7 + $0xf8] sm:$0xff]
    %v4106 = vld [vmem:[#allocation7 + $0x100] sm:$0xff]
    %v4107 = vld [vmem:[#allocation7 + $0x108] sm:$0xff]
    %v4108 = vld [vmem:[#allocation7 + $0x110] sm:$0xff]
    %v4109 = vld [vmem:[#allocation7 + $0x118] sm:$0xff]
    %v4110 = vld [vmem:[#allocation7 + $0x120] sm:$0xff]
    %v4111 = vld [vmem:[#allocation7 + $0x128] sm:$0xff]
    %v4112 = vld [vmem:[#allocation7 + $0x130] sm:$0xff]
    %v4113 = vld [vmem:[#allocation7 + $0x138] sm:$0xff]
    %v4114 = vld [vmem:[#allocation7 + $0x140] sm:$0xff]
    %v4115 = vld [vmem:[#allocation7 + $0x148] sm:$0xff]
    %v4116 = vld [vmem:[#allocation7 + $0x150] sm:$0xff]
    %v4117 = vld [vmem:[#allocation7 + $0x158] sm:$0xff]
    %v4118 = vld [vmem:[#allocation7 + $0x160] sm:$0xff]
    %v4119 = vld [vmem:[#allocation7 + $0x168] sm:$0xff]
    %v4120 = vld [vmem:[#allocation7 + $0x170] sm:$0xff]
    %v4121 = vld [vmem:[#allocation7 + $0x178] sm:$0xff]
    %v4122 = vld [vmem:[#allocation7 + $0x180] sm:$0xff]
    %v4123 = vld [vmem:[#allocation7 + $0x188] sm:$0xff]
    %v4124 = vld [vmem:[#allocation7 + $0x190] sm:$0xff]
    %v4125 = vld [vmem:[#allocation7 + $0x198] sm:$0xff]
    %v4126 = vld [vmem:[#allocation7 + $0x1a0] sm:$0xff]
    %v4127 = vld [vmem:[#allocation7 + $0x1a8] sm:$0xff]
    %v4128 = vld [vmem:[#allocation7 + $0x1b0] sm:$0xff]
    %v4129 = vld [vmem:[#allocation7 + $0x1b8] sm:$0xff]
    %v4130 = vld [vmem:[#allocation7 + $0x1c0] sm:$0xff]
    %v4131 = vld [vmem:[#allocation7 + $0x1c8] sm:$0xff]
    %v4132 = vld [vmem:[#allocation7 + $0x1d0] sm:$0xff]
    %v4133 = vld [vmem:[#allocation7 + $0x1d8] sm:$0xff]
    %v4134 = vld [vmem:[#allocation7 + $0x1e0] sm:$0xff]
    %v4135 = vld [vmem:[#allocation7 + $0x1e8] sm:$0xff]
    %v4136 = vld [vmem:[#allocation7 + $0x1f0] sm:$0xff]
    %v4137 = vld [vmem:[#allocation7 + $0x1f8] sm:$0xff]
    %v4138 = vld [vmem:[%s9] sm:$0x3]
    %v4140 = vlaneseq
    %v4141 = vshrl.u32 %v4140, 7
    %v4142 = vsub.s32 0, %v4141
    %v4143 = vrot.slane %v4138, %v4142
    %v4144 = vlaneseq
    %v4145 = vshrl.u32 %v4144, 7
    %v4146 = vsub.s32 1, %v4145
    %v4147 = vrot.slane %v4138, %v4146
    %v4182 = vunpack.c.l.b16 %v4042
    %v4183 = vunpack.c.l.b16 %v4043
    %v4184 = vunpack.c.l.b16 %v4044
    %v4185 = vunpack.c.l.b16 %v4045
    %v4186 = vunpack.c.l.b16 %v4046
    %v4187 = vunpack.c.l.b16 %v4047
    %v4188 = vunpack.c.l.b16 %v4048
    %v4189 = vunpack.c.l.b16 %v4049
    %v4190 = vunpack.c.l.b16 %v4050
    %v4191 = vunpack.c.l.b16 %v4051
    %v4192 = vunpack.c.l.b16 %v4052
    %v4193 = vunpack.c.l.b16 %v4053
    %v4194 = vunpack.c.l.b16 %v4054
    %v4195 = vunpack.c.l.b16 %v4055
    %v4196 = vunpack.c.l.b16 %v4056
    %v4197 = vunpack.c.l.b16 %v4057
    %v4198 = vunpack.c.l.b16 %v4058
    %v4199 = vunpack.c.l.b16 %v4059
    %v4200 = vunpack.c.l.b16 %v4060
    %v4201 = vunpack.c.l.b16 %v4061
    %v4202 = vunpack.c.l.b16 %v4062
    %v4203 = vunpack.c.l.b16 %v4063
    %v4204 = vunpack.c.l.b16 %v4064
    %v4205 = vunpack.c.l.b16 %v4065
    %v4206 = vunpack.c.l.b16 %v4066
    %v4207 = vunpack.c.l.b16 %v4067
    %v4208 = vunpack.c.l.b16 %v4068
    %v4209 = vunpack.c.l.b16 %v4069
    %v4210 = vunpack.c.l.b16 %v4070
    %v4211 = vunpack.c.l.b16 %v4071
    %v4212 = vunpack.c.l.b16 %v4072
    %v4213 = vunpack.c.l.b16 %v4073
    %vm4214 = vcmask 1041409
    %v4215 = vsel %vm4214, %v4186, %v4182
    %vm4216 = vcmask 1042434
    %v4217 = vsel %vm4216, %v4190, %v4215
    %vm4218 = vcmask 1043459
    %v4219 = vsel %vm4218, %v4194, %v4217
    %vm4220 = vcmask 1044484
    %v4221 = vsel %vm4220, %v4198, %v4219
    %vm4222 = vcmask 1045509
    %v4223 = vsel %vm4222, %v4202, %v4221
    %vm4224 = vcmask 1046534
    %v4225 = vsel %vm4224, %v4206, %v4223
    %vm4226 = vcmask 1047559
    %v4227 = vsel %vm4226, %v4210, %v4225
    %v4228 = vsel %vm4214, %v4187, %v4183
    %v4229 = vsel %vm4216, %v4191, %v4228
    %v4230 = vsel %vm4218, %v4195, %v4229
    %v4231 = vsel %vm4220, %v4199, %v4230
    %v4232 = vsel %vm4222, %v4203, %v4231
    %v4233 = vsel %vm4224, %v4207, %v4232
    %v4234 = vsel %vm4226, %v4211, %v4233
    %v4235 = vsel %vm4214, %v4188, %v4184
    %v4236 = vsel %vm4216, %v4192, %v4235
    %v4237 = vsel %vm4218, %v4196, %v4236
    %v4238 = vsel %vm4220, %v4200, %v4237
    %v4239 = vsel %vm4222, %v4204, %v4238
    %v4240 = vsel %vm4224, %v4208, %v4239
    %v4241 = vsel %vm4226, %v4212, %v4240
    %v4242 = vsel %vm4214, %v4189, %v4185
    %v4243 = vsel %vm4216, %v4193, %v4242
    %v4244 = vsel %vm4218, %v4197, %v4243
    %v4245 = vsel %vm4220, %v4201, %v4244
    %v4246 = vsel %vm4222, %v4205, %v4245
    %v4247 = vsel %vm4224, %v4209, %v4246
    %v4248 = vsel %vm4226, %v4213, %v4247
    %v4249 = vpack.c.b16 %v4227, %v4227
    %v4250 = vpack.c.b16 %v4234, %v4234
    %v4251 = vpack.c.b16 %v4241, %v4241
    %v4252 = vpack.c.b16 %v4248, %v4248
    %v4321 = vunpack.c.l.b16 %v4074
    %v4322 = vunpack.c.h.b16 %v4074
    %v4323 = vunpack.c.l.b16 %v4075
    %v4324 = vunpack.c.h.b16 %v4075
    %v4325 = vunpack.c.l.b16 %v4076
    %v4326 = vunpack.c.h.b16 %v4076
    %v4327 = vunpack.c.l.b16 %v4077
    %v4328 = vunpack.c.h.b16 %v4077
    %v4329 = vunpack.c.l.b16 %v4078
    %v4330 = vunpack.c.h.b16 %v4078
    %v4331 = vunpack.c.l.b16 %v4079
    %v4332 = vunpack.c.h.b16 %v4079
    %v4333 = vunpack.c.l.b16 %v4080
    %v4334 = vunpack.c.h.b16 %v4080
    %v4335 = vunpack.c.l.b16 %v4081
    %v4336 = vunpack.c.h.b16 %v4081
    %v4337 = vunpack.c.l.b16 %v4082
    %v4338 = vunpack.c.h.b16 %v4082
    %v4339 = vunpack.c.l.b16 %v4083
    %v4340 = vunpack.c.h.b16 %v4083
    %v4341 = vunpack.c.l.b16 %v4084
    %v4342 = vunpack.c.h.b16 %v4084
    %v4343 = vunpack.c.l.b16 %v4085
    %v4344 = vunpack.c.h.b16 %v4085
    %v4345 = vunpack.c.l.b16 %v4086
    %v4346 = vunpack.c.h.b16 %v4086
    %v4347 = vunpack.c.l.b16 %v4087
    %v4348 = vunpack.c.h.b16 %v4087
    %v4349 = vunpack.c.l.b16 %v4088
    %v4350 = vunpack.c.h.b16 %v4088
    %v4351 = vunpack.c.l.b16 %v4089
    %v4352 = vunpack.c.h.b16 %v4089
    %v4353 = vunpack.c.l.b16 %v4090
    %v4354 = vunpack.c.h.b16 %v4090
    %v4355 = vunpack.c.l.b16 %v4091
    %v4356 = vunpack.c.h.b16 %v4091
    %v4357 = vunpack.c.l.b16 %v4092
    %v4358 = vunpack.c.h.b16 %v4092
    %v4359 = vunpack.c.l.b16 %v4093
    %v4360 = vunpack.c.h.b16 %v4093
    %v4361 = vunpack.c.l.b16 %v4094
    %v4362 = vunpack.c.h.b16 %v4094
    %v4363 = vunpack.c.l.b16 %v4095
    %v4364 = vunpack.c.h.b16 %v4095
    %v4365 = vunpack.c.l.b16 %v4096
    %v4366 = vunpack.c.h.b16 %v4096
    %v4367 = vunpack.c.l.b16 %v4097
    %v4368 = vunpack.c.h.b16 %v4097
    %v4369 = vunpack.c.l.b16 %v4098
    %v4370 = vunpack.c.h.b16 %v4098
    %v4371 = vunpack.c.l.b16 %v4099
    %v4372 = vunpack.c.h.b16 %v4099
    %v4373 = vunpack.c.l.b16 %v4100
    %v4374 = vunpack.c.h.b16 %v4100
    %v4375 = vunpack.c.l.b16 %v4101
    %v4376 = vunpack.c.h.b16 %v4101
    %v4377 = vunpack.c.l.b16 %v4102
    %v4378 = vunpack.c.h.b16 %v4102
    %v4379 = vunpack.c.l.b16 %v4103
    %v4380 = vunpack.c.h.b16 %v4103
    %v4381 = vunpack.c.l.b16 %v4104
    %v4382 = vunpack.c.h.b16 %v4104
    %v4383 = vunpack.c.l.b16 %v4105
    %v4384 = vunpack.c.h.b16 %v4105
    %v4385 = vunpack.c.l.b16 %v4106
    %v4386 = vunpack.c.h.b16 %v4106
    %v4387 = vunpack.c.l.b16 %v4107
    %v4388 = vunpack.c.h.b16 %v4107
    %v4389 = vunpack.c.l.b16 %v4108
    %v4390 = vunpack.c.h.b16 %v4108
    %v4391 = vunpack.c.l.b16 %v4109
    %v4392 = vunpack.c.h.b16 %v4109
    %v4393 = vunpack.c.l.b16 %v4110
    %v4394 = vunpack.c.h.b16 %v4110
    %v4395 = vunpack.c.l.b16 %v4111
    %v4396 = vunpack.c.h.b16 %v4111
    %v4397 = vunpack.c.l.b16 %v4112
    %v4398 = vunpack.c.h.b16 %v4112
    %v4399 = vunpack.c.l.b16 %v4113
    %v4400 = vunpack.c.h.b16 %v4113
    %v4401 = vunpack.c.l.b16 %v4114
    %v4402 = vunpack.c.h.b16 %v4114
    %v4403 = vunpack.c.l.b16 %v4115
    %v4404 = vunpack.c.h.b16 %v4115
    %v4405 = vunpack.c.l.b16 %v4116
    %v4406 = vunpack.c.h.b16 %v4116
    %v4407 = vunpack.c.l.b16 %v4117
    %v4408 = vunpack.c.h.b16 %v4117
    %v4409 = vunpack.c.l.b16 %v4118
    %v4410 = vunpack.c.h.b16 %v4118
    %v4411 = vunpack.c.l.b16 %v4119
    %v4412 = vunpack.c.h.b16 %v4119
    %v4413 = vunpack.c.l.b16 %v4120
    %v4414 = vunpack.c.h.b16 %v4120
    %v4415 = vunpack.c.l.b16 %v4121
    %v4416 = vunpack.c.h.b16 %v4121
    %v4417 = vunpack.c.l.b16 %v4122
    %v4418 = vunpack.c.h.b16 %v4122
    %v4419 = vunpack.c.l.b16 %v4123
    %v4420 = vunpack.c.h.b16 %v4123
    %v4421 = vunpack.c.l.b16 %v4124
    %v4422 = vunpack.c.h.b16 %v4124
    %v4423 = vunpack.c.l.b16 %v4125
    %v4424 = vunpack.c.h.b16 %v4125
    %v4425 = vunpack.c.l.b16 %v4126
    %v4426 = vunpack.c.h.b16 %v4126
    %v4427 = vunpack.c.l.b16 %v4127
    %v4428 = vunpack.c.h.b16 %v4127
    %v4429 = vunpack.c.l.b16 %v4128
    %v4430 = vunpack.c.h.b16 %v4128
    %v4431 = vunpack.c.l.b16 %v4129
    %v4432 = vunpack.c.h.b16 %v4129
    %v4433 = vunpack.c.l.b16 %v4130
    %v4434 = vunpack.c.h.b16 %v4130
    %v4435 = vunpack.c.l.b16 %v4131
    %v4436 = vunpack.c.h.b16 %v4131
    %v4437 = vunpack.c.l.b16 %v4132
    %v4438 = vunpack.c.h.b16 %v4132
    %v4439 = vunpack.c.l.b16 %v4133
    %v4440 = vunpack.c.h.b16 %v4133
    %v4441 = vunpack.c.l.b16 %v4134
    %v4442 = vunpack.c.h.b16 %v4134
    %v4443 = vunpack.c.l.b16 %v4135
    %v4444 = vunpack.c.h.b16 %v4135
    %v4445 = vunpack.c.l.b16 %v4136
    %v4446 = vunpack.c.h.b16 %v4136
    %v4447 = vunpack.c.l.b16 %v4137
    %v4448 = vunpack.c.h.b16 %v4137
    %v4449 = vpack.c.b16 %v4323, %v4321
    %v4450 = vpack.c.b16 %v4324, %v4322
    %v4451 = vpack.c.b16 %v4327, %v4325
    %v4452 = vpack.c.b16 %v4328, %v4326
    %v4453 = vpack.c.b16 %v4331, %v4329
    %v4454 = vpack.c.b16 %v4332, %v4330
    %v4455 = vpack.c.b16 %v4335, %v4333
    %v4456 = vpack.c.b16 %v4336, %v4334
    %v4457 = vpack.c.b16 %v4339, %v4337
    %v4458 = vpack.c.b16 %v4340, %v4338
    %v4459 = vpack.c.b16 %v4343, %v4341
    %v4460 = vpack.c.b16 %v4344, %v4342
    %v4461 = vpack.c.b16 %v4347, %v4345
    %v4462 = vpack.c.b16 %v4348, %v4346
    %v4463 = vpack.c.b16 %v4351, %v4349
    %v4464 = vpack.c.b16 %v4352, %v4350
    %v4465 = vpack.c.b16 %v4355, %v4353
    %v4466 = vpack.c.b16 %v4356, %v4354
    %v4467 = vpack.c.b16 %v4359, %v4357
    %v4468 = vpack.c.b16 %v4360, %v4358
    %v4469 = vpack.c.b16 %v4363, %v4361
    %v4470 = vpack.c.b16 %v4364, %v4362
    %v4471 = vpack.c.b16 %v4367, %v4365
    %v4472 = vpack.c.b16 %v4368, %v4366
    %v4473 = vpack.c.b16 %v4371, %v4369
    %v4474 = vpack.c.b16 %v4372, %v4370
    %v4475 = vpack.c.b16 %v4375, %v4373
    %v4476 = vpack.c.b16 %v4376, %v4374
    %v4477 = vpack.c.b16 %v4379, %v4377
    %v4478 = vpack.c.b16 %v4380, %v4378
    %v4479 = vpack.c.b16 %v4383, %v4381
    %v4480 = vpack.c.b16 %v4384, %v4382
    %v4481 = vpack.c.b16 %v4387, %v4385
    %v4482 = vpack.c.b16 %v4388, %v4386
    %v4483 = vpack.c.b16 %v4391, %v4389
    %v4484 = vpack.c.b16 %v4392, %v4390
    %v4485 = vpack.c.b16 %v4395, %v4393
    %v4486 = vpack.c.b16 %v4396, %v4394
    %v4487 = vpack.c.b16 %v4399, %v4397
    %v4488 = vpack.c.b16 %v4400, %v4398
    %v4489 = vpack.c.b16 %v4403, %v4401
    %v4490 = vpack.c.b16 %v4404, %v4402
    %v4491 = vpack.c.b16 %v4407, %v4405
    %v4492 = vpack.c.b16 %v4408, %v4406
    %v4493 = vpack.c.b16 %v4411, %v4409
    %v4494 = vpack.c.b16 %v4412, %v4410
    %v4495 = vpack.c.b16 %v4415, %v4413
    %v4496 = vpack.c.b16 %v4416, %v4414
    %v4497 = vpack.c.b16 %v4419, %v4417
    %v4498 = vpack.c.b16 %v4420, %v4418
    %v4499 = vpack.c.b16 %v4423, %v4421
    %v4500 = vpack.c.b16 %v4424, %v4422
    %v4501 = vpack.c.b16 %v4427, %v4425
    %v4502 = vpack.c.b16 %v4428, %v4426
    %v4503 = vpack.c.b16 %v4431, %v4429
    %v4504 = vpack.c.b16 %v4432, %v4430
    %v4505 = vpack.c.b16 %v4435, %v4433
    %v4506 = vpack.c.b16 %v4436, %v4434
    %v4507 = vpack.c.b16 %v4439, %v4437
    %v4508 = vpack.c.b16 %v4440, %v4438
    %v4509 = vpack.c.b16 %v4443, %v4441
    %v4510 = vpack.c.b16 %v4444, %v4442
    %v4511 = vpack.c.b16 %v4447, %v4445
    %v4512 = vpack.c.b16 %v4448, %v4446
    %4577 = vmatprep.subr.bf16.mxu0 %v4464
    %4578 = vmatpush1.bf16.msra.mxu0 %v4463
    %4579 = vmatprep.subr.bf16.mxu0 %v4462
    %4580 = vmatpush1.bf16.msra.mxu0 %v4461
    %4581 = vmatprep.subr.bf16.mxu0 %v4460
    %4582 = vmatpush1.bf16.msra.mxu0 %v4459
    %4583 = vmatprep.subr.bf16.mxu0 %v4458
    %4584 = vmatpush1.bf16.msra.mxu0 %v4457
    %4585 = vmatprep.subr.bf16.mxu0 %v4456
    %4586 = vmatpush1.bf16.msra.mxu0 %v4455
    %4587 = vmatprep.subr.bf16.mxu0 %v4454
    %4588 = vmatpush1.bf16.msra.mxu0 %v4453
    %4589 = vmatprep.subr.bf16.mxu0 %v4452
    %4590 = vmatpush1.bf16.msra.mxu0 %v4451
    %4591 = vmatprep.subr.bf16.mxu0 %v4450
    %4592 = vmatpush1.bf16.msra.mxu0 %v4449
    %4593 = vmatprep.subr.bf16.mxu0 %v4480
    %4594 = vmatpush2.bf16.msra.mxu0 %v4479
    %4595 = vmatprep.subr.bf16.mxu0 %v4478
    %4596 = vmatpush2.bf16.msra.mxu0 %v4477
    %4597 = vmatprep.subr.bf16.mxu0 %v4476
    %4598 = vmatpush2.bf16.msra.mxu0 %v4475
    %4599 = vmatprep.subr.bf16.mxu0 %v4474
    %4600 = vmatpush2.bf16.msra.mxu0 %v4473
    %4601 = vmatprep.subr.bf16.mxu0 %v4472
    %4602 = vmatpush2.bf16.msra.mxu0 %v4471
    %4603 = vmatprep.subr.bf16.mxu0 %v4470
    %4604 = vmatpush2.bf16.msra.mxu0 %v4469
    %4605 = vmatprep.subr.bf16.mxu0 %v4468
    %4606 = vmatpush2.bf16.msra.mxu0 %v4467
    %4607 = vmatprep.subr.bf16.mxu0 %v4466
    %4608 = vmatpush2.bf16.msra.mxu0 %v4465
    %4609 = vmatprep.mubr.bf16.mxu0 %v4250
    %4610 = vmatmul.mubr.bf16.gmra.mxu0 %v4249
    %v4611 = vpop.f32.mrf.mxu0
    %v4612 = vadd.f32 %v4143, %v4611
    %v4613 = vpop.f32.mrf.mxu0
    %v4614 = vadd.f32 %v4147, %v4613
    %v4615 = vpop.f32.mrf.mxu0
    %v4616 = vpop.f32.mrf.mxu0
    %4617 = vdwg.mxu0
    %4618 = vmatprep.subr.bf16.mxu0 %v4496
    %4619 = vmatpush1.bf16.msra.mxu0 %v4495
    %4620 = vmatprep.subr.bf16.mxu0 %v4494
    %4621 = vmatpush1.bf16.msra.mxu0 %v4493
    %4622 = vmatprep.subr.bf16.mxu0 %v4492
    %4623 = vmatpush1.bf16.msra.mxu0 %v4491
    %4624 = vmatprep.subr.bf16.mxu0 %v4490
    %4625 = vmatpush1.bf16.msra.mxu0 %v4489
    %4626 = vmatprep.subr.bf16.mxu0 %v4488
    %4627 = vmatpush1.bf16.msra.mxu0 %v4487
    %4628 = vmatprep.subr.bf16.mxu0 %v4486
    %4629 = vmatpush1.bf16.msra.mxu0 %v4485
    %4630 = vmatprep.subr.bf16.mxu0 %v4484
    %4631 = vmatpush1.bf16.msra.mxu0 %v4483
    %4632 = vmatprep.subr.bf16.mxu0 %v4482
    %4633 = vmatpush1.bf16.msra.mxu0 %v4481
    %4634 = vmatprep.subr.bf16.mxu0 %v4512
    %4635 = vmatpush2.bf16.msra.mxu0 %v4511
    %4636 = vmatprep.subr.bf16.mxu0 %v4510
    %4637 = vmatpush2.bf16.msra.mxu0 %v4509
    %4638 = vmatprep.subr.bf16.mxu0 %v4508
    %4639 = vmatpush2.bf16.msra.mxu0 %v4507
    %4640 = vmatprep.subr.bf16.mxu0 %v4506
    %4641 = vmatpush2.bf16.msra.mxu0 %v4505
    %4642 = vmatprep.subr.bf16.mxu0 %v4504
    %4643 = vmatpush2.bf16.msra.mxu0 %v4503
    %4644 = vmatprep.subr.bf16.mxu0 %v4502
    %4645 = vmatpush2.bf16.msra.mxu0 %v4501
    %4646 = vmatprep.subr.bf16.mxu0 %v4500
    %4647 = vmatpush2.bf16.msra.mxu0 %v4499
    %4648 = vmatprep.subr.bf16.mxu0 %v4498
    %4649 = vmatpush2.bf16.msra.mxu0 %v4497
    %4650 = vmatprep.mubr.bf16.mxu0 %v4252
    %4651 = vmatmul.mubr.bf16.gmra.mxu0 %v4251
    %v4652 = vpop.f32.mrf.mxu0
    %v4653 = vadd.f32 %v4612, %v4652
    %v4654 = vpop.f32.mrf.mxu0
    %v4655 = vadd.f32 %v4614, %v4654
    %v4656 = vpop.f32.mrf.mxu0
    %v4657 = vpop.f32.mrf.mxu0
    %4658 = vdwg.mxu0
    %vm4659 = vcmask 1043456
    %v4660 = vsel %vm4659, %v4653, -inf
    %4661 = vmax.xlane.f32.xlu0 %v4660
    %v4662 = vpop.xlane.xlu0 %4661
    %v4663 = vsub.f32 %v4653, %v4662
    %v4664 = vmul.f32 %v4663, 1.442695
    %v4665 = vpow.pop %v4664
    %v4666 = vsel %vm4659, %v4665, 0.0
    %4667 = vadd.xlane.f32.xlu0 %v4666
    %v4668 = vpop.xlane.xlu0 %4667
    %v4669 = vrcp.pop %v4668
    %v4670 = vmul.f32 %v4665, %v4669
    %v4671 = vsel %vm4659, %v4655, -inf
    %4672 = vmax.xlane.f32.xlu0 %v4671
    %v4673 = vpop.xlane.xlu0 %4672
    %v4674 = vsub.f32 %v4655, %v4673
    %v4675 = vmul.f32 %v4674, 1.442695
    %v4676 = vpow.pop %v4675
    %v4677 = vsel %vm4659, %v4676, 0.0
    %4678 = vadd.xlane.f32.xlu0 %v4677
    %v4679 = vpop.xlane.xlu0 %4678
    %v4680 = vrcp.pop %v4679
    %v4681 = vmul.f32 %v4676, %v4680
    %p4682 = scmp.eq.s32.totalorder %s68, 1
    %s4683 = scalar_select %p4682, 1, 0
    %s4684 = scvt.s32.f32 %s4683
    %v4685 = vsub.f32 %v4681, %v4670
    %v4686 = vstv %s4684
    %v4687 = vmul.f32 %v4686, %v4685
    %v4688 = vadd.f32 %v4670, %v4687
    %4689 = vst [vmem:[#allocation9] sm:$0xf] %v4688
    %v4690 = vsub.f32 %v4028, %v4026
    %v4691 = vsub.f32 %v4029, %v4027
    %v4692 = vsub.f32 %v4032, %v4030
    %v4693 = vsub.f32 %v4033, %v4031
    %v4694 = vsub.f32 %v4036, %v4034
    %v4695 = vsub.f32 %v4037, %v4035
    %v4696 = vsub.f32 %v4040, %v4038
    %v4697 = vsub.f32 %v4041, %v4039
    %v4698 = vmul.f32 %v4686, %v4690
    %v4699 = vmul.f32 %v4686, %v4691
    %v4700 = vmul.f32 %v4686, %v4692
    %v4701 = vmul.f32 %v4686, %v4693
    %v4702 = vmul.f32 %v4686, %v4694
    %v4703 = vmul.f32 %v4686, %v4695
    %v4704 = vmul.f32 %v4686, %v4696
    %v4705 = vmul.f32 %v4686, %v4697
    %v4706 = vadd.f32 %v4026, %v4698
    %v4707 = vadd.f32 %v4027, %v4699
    %v4708 = vadd.f32 %v4030, %v4700
    %v4709 = vadd.f32 %v4031, %v4701
    %v4710 = vadd.f32 %v4034, %v4702
    %v4711 = vadd.f32 %v4035, %v4703
    %v4712 = vadd.f32 %v4038, %v4704
    %v4713 = vadd.f32 %v4039, %v4705
    %v4714 = vsub.f32 %v4012, %v4010
    %v4715 = vsub.f32 %v4013, %v4011
    %v4716 = vsub.f32 %v4016, %v4014
    %v4717 = vsub.f32 %v4017, %v4015
    %v4718 = vsub.f32 %v4020, %v4018
    %v4719 = vsub.f32 %v4021, %v4019
    %v4720 = vsub.f32 %v4024, %v4022
    %v4721 = vsub.f32 %v4025, %v4023
    %v4722 = vmul.f32 %v4686, %v4714
    %v4723 = vmul.f32 %v4686, %v4715
    %v4724 = vmul.f32 %v4686, %v4716
    %v4725 = vmul.f32 %v4686, %v4717
    %v4726 = vmul.f32 %v4686, %v4718
    %v4727 = vmul.f32 %v4686, %v4719
    %v4728 = vmul.f32 %v4686, %v4720
    %v4729 = vmul.f32 %v4686, %v4721
    %v4730 = vadd.f32 %v4010, %v4722
    %v4731 = vadd.f32 %v4011, %v4723
    %v4732 = vadd.f32 %v4014, %v4724
    %v4733 = vadd.f32 %v4015, %v4725
    %v4734 = vadd.f32 %v4018, %v4726
    %v4735 = vadd.f32 %v4019, %v4727
    %v4736 = vadd.f32 %v4022, %v4728
    %v4737 = vadd.f32 %v4023, %v4729
    %v4738 = vsub.f32 %v4655, %v4653
    %v4739 = vmul.f32 %v4686, %v4738
    %v4740 = vadd.f32 %v4653, %v4739
    %v4749 = vsel %vm4214, %v4708, %v4706
    %v4750 = vsel %vm4216, %v4710, %v4749
    %v4751 = vsel %vm4218, %v4712, %v4750
    %v4752 = vsel %vm4214, %v4709, %v4707
    %v4753 = vsel %vm4216, %v4711, %v4752
    %v4754 = vsel %vm4218, %v4713, %v4753
    %v4765 = vsel %vm4222, %v4732, %v4730
    %v4766 = vsel %vm4224, %v4734, %v4765
    %v4767 = vsel %vm4226, %v4736, %v4766
    %v4768 = vsel %vm4222, %v4733, %v4731
    %v4769 = vsel %vm4224, %v4735, %v4768
    %v4770 = vsel %vm4226, %v4737, %v4769
    %v4773 = vsel %vm4659, %v4751, %v4767
    %v4774 = vsel %vm4659, %v4754, %v4770
    %v4775 = vmul.f32 %v4773, %v4773
    %v4776 = vmul.f32 %v4774, %v4774
    %v4777 = vadd.f32 %v4775, %v4776
    %4778 = vadd.xlane.f32.xlu0 %v4777
    %v4779 = vpop.xlane.xlu0 %4778
    %4780 = vmatprep.subr.mxu0 0.0
    %4781 = vmatpush1.xpose.msra.mxu0 0.0
    %4782 = vmatprep.subr.mxu0 0.0
    %4783 = vmatpush1.xpose.msra.mxu0 0.0
    %4784 = vmatprep.subr.mxu0 0.0
    %4785 = vmatpush1.xpose.msra.mxu0 0.0
    %4786 = vmatprep.subr.mxu0 0.0
    %4787 = vmatpush1.xpose.msra.mxu0 0.0
    %4788 = vmatprep.subr.mxu0 0.0
    %4789 = vmatpush1.xpose.msra.mxu0 0.0
    %4790 = vmatprep.subr.mxu0 0.0
    %4791 = vmatpush1.xpose.msra.mxu0 0.0
    %4792 = vmatprep.subr.mxu0 0.0
    %4793 = vmatpush1.xpose.msra.mxu0 0.0
    %4794 = vmatprep.subr.mxu0 0.0
    %4795 = vmatpush1.xpose.msra.mxu0 0.0
    %4796 = vmatprep.subr.mxu0 0.0
    %4797 = vmatpush1.xpose.msra.mxu0 0.0
    %4798 = vmatprep.subr.mxu0 0.0
    %4799 = vmatpush1.xpose.msra.mxu0 0.0
    %4800 = vmatprep.subr.mxu0 0.0
    %4801 = vmatpush1.xpose.msra.mxu0 0.0
    %4802 = vmatprep.subr.mxu0 0.0
    %4803 = vmatpush1.xpose.msra.mxu0 0.0
    %4804 = vmatprep.subr.mxu0 0.0
    %4805 = vmatpush1.xpose.msra.mxu0 0.0
    %4806 = vmatprep.subr.mxu0 0.0
    %4807 = vmatpush1.xpose.msra.mxu0 0.0
    %4808 = vmatprep.subr.mxu0 0.0
    %4809 = vmatpush1.xpose.msra.mxu0 0.0
    %4810 = vmatprep.subr.mxu0 %v4774
    %4811 = vmatpush1.xpose.msra.mxu0 %v4773
    %4812 = vmatprep.subr.mxu0 0.0
    %4813 = vmatpush2.xpose.msra.mxu0 0.0
    %4814 = vmatprep.subr.mxu0 0.0
    %4815 = vmatpush2.xpose.msra.mxu0 0.0
    %4816 = vmatprep.subr.mxu0 0.0
    %4817 = vmatpush2.xpose.msra.mxu0 0.0
    %4818 = vmatprep.subr.mxu0 0.0
    %4819 = vmatpush2.xpose.msra.mxu0 0.0
    %4820 = vmatprep.subr.mxu0 0.0
    %4821 = vmatpush2.xpose.msra.mxu0 0.0
    %4822 = vmatprep.subr.mxu0 0.0
    %4823 = vmatpush2.xpose.msra.mxu0 0.0
    %4824 = vmatprep.subr.mxu0 0.0
    %4825 = vmatpush2.xpose.msra.mxu0 0.0
    %4826 = vmatprep.subr.mxu0 0.0
    %4827 = vmatpush2.xpose.msra.mxu0 0.0
    %4828 = vmatprep.subr.mxu0 0.0
    %4829 = vmatpush2.xpose.msra.mxu0 0.0
    %4830 = vmatprep.subr.mxu0 0.0
    %4831 = vmatpush2.xpose.msra.mxu0 0.0
    %4832 = vmatprep.subr.mxu0 0.0
    %4833 = vmatpush2.xpose.msra.mxu0 0.0
    %4834 = vmatprep.subr.mxu0 0.0
    %4835 = vmatpush2.xpose.msra.mxu0 0.0
    %4836 = vmatprep.subr.mxu0 0.0
    %4837 = vmatpush2.xpose.msra.mxu0 0.0
    %4838 = vmatprep.subr.mxu0 0.0
    %4839 = vmatpush2.xpose.msra.mxu0 0.0
    %4840 = vmatprep.subr.mxu0 0.0
    %4841 = vmatpush2.xpose.msra.mxu0 0.0
    %4842 = vmatprep.subr.mxu0 0.0
    %4843 = vmatpush2.xpose.msra.mxu0 0.0
    %4844 = vmatprep.mubr.f32.mxu0 %v4774
    %4845 = vmatmul.mubr.f32.gmra.mxu0 %v4773
    %v4846 = vpop.f32.mrf.mxu0
    %v4847 = vadd.f32 0.0, %v4846
    %v4848 = vpop.f32.mrf.mxu0
    %4849 = vdwg.mxu0
    %4850 = vxpose.xlu0.b32.start [1/16] %v4779, 128
    %4851 = vxpose.xlu0.b32.cont [2/16] 0.0, 128
    %4852 = vxpose.xlu0.b32.cont [3/16] 0.0, 128
    %4853 = vxpose.xlu0.b32.cont [4/16] 0.0, 128
    %4854 = vxpose.xlu0.b32.cont [5/16] 0.0, 128
    %4855 = vxpose.xlu0.b32.cont [6/16] 0.0, 128
    %4856 = vxpose.xlu0.b32.cont [7/16] 0.0, 128
    %4857 = vxpose.xlu0.b32.cont [8/16] 0.0, 128
    %4858 = vxpose.xlu0.b32.cont [9/16] 0.0, 128
    %4859 = vxpose.xlu0.b32.cont [10/16] 0.0, 128
    %4860 = vxpose.xlu0.b32.cont [11/16] 0.0, 128
    %4861 = vxpose.xlu0.b32.cont [12/16] 0.0, 128
    %4862 = vxpose.xlu0.b32.cont [13/16] 0.0, 128
    %4863 = vxpose.xlu0.b32.cont [14/16] 0.0, 128
    %4864 = vxpose.xlu0.b32.cont [15/16] 0.0, 128
    %4865 = vxpose.xlu0.b32.end [16/16] 0.0, 128
    %v4866 = vpop.trf.xlu0
    %v4867 = vpop.trf.xlu0
    %v4868 = vpop.trf.xlu0
    %v4869 = vpop.trf.xlu0
    %v4870 = vpop.trf.xlu0
    %v4871 = vpop.trf.xlu0
    %v4872 = vpop.trf.xlu0
    %v4873 = vpop.trf.xlu0
    %v4874 = vpop.trf.xlu0
    %v4875 = vpop.trf.xlu0
    %v4876 = vpop.trf.xlu0
    %v4877 = vpop.trf.xlu0
    %v4878 = vpop.trf.xlu0
    %v4879 = vpop.trf.xlu0
    %v4880 = vpop.trf.xlu0
    %v4881 = vpop.trf.xlu0
    %v4882 = vlaneseq
    %v4883 = vshrl.u32 %v4882, 7
    %v4884 = vsub.s32 0, %v4883
    %v4885 = vrot.slane %v4866, %v4884
    %v4886 = vadd.f32 %v4779, %v4885
    %v4887 = vmul.f32 %v4847, 2.0
    %v4888 = vsub.f32 %v4886, %v4887
    %v4889 = vmax.f32 %v4888, 0.0
    %vm4890 = vcmask 64512
    %v4891 = vsel %vm4890, %v4889, 0.0
    %4892 = vadd.xlane.f32.xlu0 %v4891
    %v4893 = vpop.xlane.xlu0 %4892
    %v4894 = vrot.slane %v4893, 4
    %v4895 = vadd.f32 %v4893, %v4894
    %v4896 = vrot.slane %v4895, 2
    %v4897 = vadd.f32 %v4895, %v4896
    %v4898 = vrot.slane %v4897, 1
    %v4899 = vadd.f32 %v4897, %v4898
    %s4900 = vtos %v4899
    %v4901 = vrcp.pop 56.0
    %s4902 = vtos %v4901
    %s4903 = smul.f32 %s4900, %s4902
    %v4904 = vrcp.pop 4.0
    %s4905 = vtos %v4904
    %s4906 = smul.f32 %s4903, %s4905
    %s4907 = smax.f32 %s4906, 1e-12
    %v4908 = vsub.f32 0.0, %v4889
    %v4909 = vstv %s4907
    %v4910 = vrcp.pop %v4909
    %v4911 = vmul.f32 %v4908, %v4910
    %v4912 = vmul.f32 %v4911, 1.442695
    %v4913 = vpow.pop %v4912
    %v4914 = vadd.f32 %v4913, 0.0
    %s4915 = smul.f32 %s4907, 2.0
    %v4916 = vstv %s4915
    %v4917 = vrcp.pop %v4916
    %v4918 = vmul.f32 %v4908, %v4917
    %v4919 = vmul.f32 %v4918, 1.442695
    %v4920 = vpow.pop %v4919
    %v4921 = vadd.f32 %v4914, %v4920
    %s4922 = smul.f32 %s4907, 4.0
    %v4923 = vstv %s4922
    %v4924 = vrcp.pop %v4923
    %v4925 = vmul.f32 %v4908, %v4924
    %v4926 = vmul.f32 %v4925, 1.442695
    %v4927 = vpow.pop %v4926
    %v4928 = vadd.f32 %v4921, %v4927
    %s4929 = smul.f32 %s4907, 8.0
    %v4930 = vstv %s4929
    %v4931 = vrcp.pop %v4930
    %v4932 = vmul.f32 %v4908, %v4931
    %v4933 = vmul.f32 %v4932, 1.442695
    %v4934 = vpow.pop %v4933
    %v4935 = vadd.f32 %v4928, %v4934
    %s4936 = smul.f32 %s4907, 16.0
    %v4937 = vstv %s4936
    %v4938 = vrcp.pop %v4937
    %v4939 = vmul.f32 %v4908, %v4938
    %v4940 = vmul.f32 %v4939, 1.442695
    %v4941 = vpow.pop %v4940
    %v4942 = vadd.f32 %v4935, %v4941
    %v4944 = vrot.slane %v4942, 4
    %4945 = vrot.lane.b32.xlu0 %v4944, 124
    %v4946 = vpop.permute.xlu0 %4945
    %v4948 = vadd.f32 %v4942, %v4946
    %4949 = vrot.lane.b32.xlu0 %v4942, 124
    %v4950 = vpop.permute.xlu0 %4949
    %v4952 = vsub.f32 %v4948, %v4950
    %v4954 = vsub.f32 %v4952, %v4944
    %vm4955 = vcmask 27648
    %v4956 = vsel %vm4955, %v4954, 0.0
    %4957 = vadd.xlane.f32.xlu0 %v4956
    %v4958 = vpop.xlane.xlu0 %4957
    %v4959 = vrot.slane %v4958, 4
    %v4960 = vadd.f32 %v4958, %v4959
    %v4961 = vrot.slane %v4960, 2
    %v4962 = vadd.f32 %v4960, %v4961
    %v4963 = vrot.slane %v4962, 1
    %v4964 = vadd.f32 %v4962, %v4963
    %s4965 = vtos %v4964
    %v4966 = vrcp.pop 16.0
    %s4967 = vtos %v4966
    %s4968 = smul.f32 %s4965, %s4967
    %s4969 = scalar_lea.smem [#allocation10], 0
    %4970 = sst [smem:[%s4969]] %s4968
    %v4971 = vld [vmem:[%s1] sm:$0xf]
    %v4972 = vlaneseq
    %v4973 = vand.u32 %v4972, 127
    %4974 = vset.pattern.permute.xlu0 0
    %4975 = vperm.xlu0 %4974, %v4971
    %v4976 = vpop.permute.xlu0 %4975
    %vm4977 = vcmp.eq.s32.totalorder %v4973, %v4976
    %v4978 = vsel %vm4977, 1, 0
    %v4979 = vcvt.s32.f32 %v4978
    %vm4980 = vcmask 1047556
    %v4981 = vsel %vm4980, %v4740, -inf
    %4982 = vmax.xlane.f32.xlu0 %v4981
    %v4983 = vpop.xlane.xlu0 %4982
    %v4984 = vsub.f32 %v4740, %v4983
    %v4985 = vmul.f32 %v4984, 1.442695
    %v4986 = vpow.pop %v4985
    %v4987 = vsel %vm4980, %v4986, 0.0
    %4988 = vadd.xlane.f32.xlu0 %v4987
    %v4989 = vpop.xlane.xlu0 %4988
    %v4990 = vlog2.pop %v4989
    %v4991 = vmul.f32 %v4990, 0.6931472
    %v4992 = vadd.f32 %v4991, %v4983
    %v4994 = vrot.slane %v4979, 4
    %v4996 = vmul.f32 %v4740, %v4994
    %v4997 = vsel %vm4980, %v4996, 0.0
    %4998 = vadd.xlane.f32.xlu0 %v4997
    %v4999 = vpop.xlane.xlu0 %4998
    %v5000 = vsub.f32 %v4992, %v4999
    %v5002 = vrot.slane %v5000, 4
    %vm5004 = vcmask 3072
    %v5005 = vsel %vm5004, %v5002, 0.0
    %5006 = vadd.xlane.f32.xlu0 %v5005
    %v5007 = vpop.xlane.xlu0 %5006
    %v5008 = vrot.slane %v5007, 4
    %v5009 = vadd.f32 %v5007, %v5008
    %v5010 = vrot.slane %v5009, 2
    %v5011 = vadd.f32 %v5009, %v5010
    %v5012 = vrot.slane %v5011, 1
    %v5013 = vadd.f32 %v5011, %v5012
    %s5014 = vtos %v5013
    %v5015 = vrcp.pop 4.0
    %s5016 = vtos %v5015
    %s5017 = smul.f32 %s5014, %s5016
    %s5018 = scalar_lea.smem [#allocation10], 1
    %5019 = sst [smem:[%s5018]] %s5017
    %v5020 = vsub.f32 %v4670, %v4681
    %v5021 = vand.u32 2147483647, %v5020
    %v5022 = vsel %vm4659, %v5021, 0.0
    %5023 = vadd.xlane.f32.xlu0 %v5022
    %v5024 = vpop.xlane.xlu0 %5023
    %v5025 = vrot.slane %v5024, 4
    %v5026 = vadd.f32 %v5024, %v5025
    %v5027 = vrot.slane %v5026, 2
    %v5028 = vadd.f32 %v5026, %v5027
    %v5029 = vrot.slane %v5028, 1
    %v5030 = vadd.f32 %v5028, %v5029
    %s5031 = vtos %v5030
    %s5032 = sadd.f32 %s5031, 0.0
    %v5033 = vrcp.pop 2.0
    %s5034 = vtos %v5033
    %s5035 = smul.f32 %s5032, %s5034
    %s5036 = scalar_lea.smem [#allocation10], 2
    %5037 = sst [smem:[%s5036]] %s5035
    // Predicated region
    $region50: #{tpu_custom_call.1} parent=1 // pred_check
      _
    $region51: #{tpu_custom_call.1} parent=1 // pred_check_branch
      %5039 = sbr.rel (0) target = $region53
    $region52: #{tpu_custom_call.1} parent=1 // pred_region
      %s5041 = ssub.s32 64, 64
      %5042 = vsyncadd [#allocation5], %s5041
      %s5044 = sshll.u32 [#allocation9], 4
      %s5045 = int_to_ptr.vmem [resolvable:$true] %s5044
      %5047 = dma.vmem_to_hbm [thread:$0]  %s5045, 64, %s10, [#allocation5]
    $region53: #{tpu_custom_call.1} parent=1 // pred_fallthru
      _
    // Predicated region
    $region54: #{tpu_custom_call.1} parent=1 // pred_check
      _
    $region55: #{tpu_custom_call.1} parent=1 // pred_check_branch
      %5049 = sbr.rel (0) target = $region57
    $region56: #{tpu_custom_call.1} parent=1 // pred_region
      %s5051 = ssub.s32 16, 16
      %5052 = vsyncadd [#allocation6], %s5051
      %5055 = dma.smem_to_hbm [#allocation10], 16, %s11, [#allocation6]
    $region57: #{tpu_custom_call.1} parent=1 // pred_fallthru
      _
    // Predicated region
    $region58: #{tpu_custom_call.1} parent=1 // pred_check
      _
    $region59: #{tpu_custom_call.1} parent=1 // pred_check_branch
      %5057 = sbr.rel (0) target = $region61
    $region60: #{tpu_custom_call.1} parent=1 // pred_region
      %5058 = dma.done [#allocation5], 64
    $region61: #{tpu_custom_call.1} parent=1 // pred_fallthru
      _
    // Predicated region
    $region62: #{tpu_custom_call.1} parent=1 // pred_check
      _
    $region63: #{tpu_custom_call.1} parent=1 // pred_check_branch
      %5060 = sbr.rel (0) target = $region65
    $region64: #{tpu_custom_call.1} parent=1 // pred_region
      %5061 = dma.done [#allocation6], 16
    $region65: #{tpu_custom_call.1} parent=1 // pred_fallthru
      _
    %5062 = sfence
    %5063 = vsyncpa [#allocation4], 1
    %5064 = vsyncpa [#allocation8], 1
    %5065 = vsyncpa [#allocation5], 1
    %5066 = vsyncpa [#allocation6], 1

</llo_original>
